<compile_context>
chip_gen: v7x
topology: tpu7x:2x2x1
jax: 0.10.0
libtpu: 0.0.40
codegen_flags: <defaults>
</compile_context>

<pallas_src>
import numpy as np
import jax
import jax.numpy as jnp
from jax import lax
from jax.experimental import pallas as pl
from jax.experimental.pallas import tpu as pltpu

# MXU operand dtype (accumulation and all elementwise/gate math stay float32).
MATMUL_DTYPE = jnp.bfloat16

_VMEM = pl.BlockSpec(memory_space=pltpu.MemorySpace.VMEM)


# ----------------------------------------------------------------------------
# Pallas kernel 1: fused bidirectional LSTM layer with packed-seq masking.
#   - one hoisted input projection feeding both directions
#   - backward direction = same masked recurrence iterated with decreasing t
# ----------------------------------------------------------------------------
def _bilstm_layer_kernel(x_ref, len_ref, wih_ref, whhf_ref, whhb_ref,
                         bf_ref, bb_ref,
                         yf_ref, yb_ref, hf_ref, cf_ref, hb_ref, cb_ref,
                         xproj_ref):
    # x_ref   : (T, B, Din)  bf16        y{f,b}_ref : (T, B, H) f32
    # wih_ref : (Din, 8H)    bf16  (fwd 4H | bwd 4H)
    # whh*_ref: (H, 4H)      bf16        b*_ref     : (1, 4H)   f32 (b_ih+b_hh)
    # len_ref : (B, 1) int32 valid lengths (pack_padded_sequence semantics)
    T, B, Din = x_ref.shape
    H = hf_ref.shape[-1]
    G = 4 * H

    # --- hoisted input projection: one big matmul instead of T tiny ones ----
    x2 = x_ref[...].reshape(T * B, Din)
    xproj_ref[...] = jnp.dot(
        x2, wih_ref[...], preferred_element_type=jnp.float32).reshape(T, B, 2 * G)

    # Hoist all per-step-invariant loads out of the serial loop.
    whh_f = whhf_ref[...]
    whh_b = whhb_ref[...]
    b_f = bf_ref[...]
    b_b = bb_ref[...]
    lens = len_ref[...]                                          # (B, 1) int32

    def gates_update(pre, h, c, whh):
        # NOTE: gate slices at lane offsets k*H are intra-vreg value slices;
        # acceptable VPU/XLU cost at small H (value slicing, not ref slicing).
        g = pre + jnp.dot(h.astype(whh.dtype), whh,
                          preferred_element_type=jnp.float32)    # (B, 4H)
        i = jax.nn.sigmoid(g[:, 0:H])
        f = jax.nn.sigmoid(g[:, H:2 * H])
        gg = jnp.tanh(g[:, 2 * H:3 * H])
        o = jax.nn.sigmoid(g[:, 3 * H:4 * H])
        c_new = f * c + i * gg
        h_new = o * jnp.tanh(c_new)
        return h_new, c_new

    def step(s, carry):
        hf, cf, hb, cb = carry
        tf = s
        tb = T - 1 - s
        # forward direction (time increasing)
        xp_f = xproj_ref[tf]                                     # (B, 8H)
        hf_new, cf_new = gates_update(xp_f[:, 0:G] + b_f, hf, cf, whh_f)
        valid_f = tf < lens                                      # (B, 1)
        yf_ref[tf] = jnp.where(valid_f, hf_new, 0.0)             # pad_packed -> 0
        hf = jnp.where(valid_f, hf_new, hf)
        cf = jnp.where(valid_f, cf_new, cf)
        # backward direction (time decreasing): padded tail positions are
        # invalid so the state stays at its zero init until t == len-1, which
        # is exactly the packed-sequence reversal -- no gathers needed.
        xp_b = xproj_ref[tb]
        hb_new, cb_new = gates_update(xp_b[:, G:2 * G] + b_b, hb, cb, whh_b)
        valid_b = tb < lens
        yb_ref[tb] = jnp.where(valid_b, hb_new, 0.0)
        hb = jnp.where(valid_b, hb_new, hb)
        cb = jnp.where(valid_b, cb_new, cb)
        return hf, cf, hb, cb

    z = jnp.zeros((B, H), jnp.float32)
    hf, cf, hb, cb = lax.fori_loop(0, T, step, (z, z, z, z))
    hf_ref[...] = hf
    cf_ref[...] = cf
    hb_ref[...] = hb
    cb_ref[...] = cb


def bidir_lstm_layer(x_tbd, lengths, p_fwd, p_bwd):
    # p_* = (w_ih (4H,Din), w_hh (4H,H), b_ih (4H,), b_hh (4H,))
    T, B, Din = x_tbd.shape
    H = p_fwd[1].shape[1]
    wih = jnp.concatenate([p_fwd[0].T, p_bwd[0].T], axis=1).astype(MATMUL_DTYPE)
    whh_f = p_fwd[1].T.astype(MATMUL_DTYPE)
    whh_b = p_bwd[1].T.astype(MATMUL_DTYPE)
    b_f = (p_fwd[2] + p_fwd[3]).reshape(1, 4 * H).astype(jnp.float32)
    b_b = (p_bwd[2] + p_bwd[3]).reshape(1, 4 * H).astype(jnp.float32)
    len2d = lengths.reshape(B, 1).astype(jnp.int32)
    y_f, y_b, hf, cf, hb, cb = pl.pallas_call(
        _bilstm_layer_kernel,
        out_shape=(jax.ShapeDtypeStruct((T, B, H), jnp.float32),
                   jax.ShapeDtypeStruct((T, B, H), jnp.float32),
                   jax.ShapeDtypeStruct((B, H), jnp.float32),
                   jax.ShapeDtypeStruct((B, H), jnp.float32),
                   jax.ShapeDtypeStruct((B, H), jnp.float32),
                   jax.ShapeDtypeStruct((B, H), jnp.float32)),
        in_specs=[_VMEM] * 7,
        out_specs=(_VMEM,) * 6,
        scratch_shapes=[pltpu.VMEM((T, B, 8 * H), jnp.float32)],
        # TODO(synk): for production T the whole-sequence VMEM residency should
        # be time-chunked (grid over T, h/c carried in scratch) to fit v7x 64MiB.
    )(x_tbd.astype(MATMUL_DTYPE), len2d, wih, whh_f, whh_b, b_f, b_b)
    y = jnp.concatenate([y_f, y_b], axis=-1)                     # (T, B, 2H)
    return y, (hf, cf), (hb, cb)


# ----------------------------------------------------------------------------
# Pallas kernel 2: unidirectional LSTM layer (decoder) with packed-seq masking
# and hoisted input projection.
# ----------------------------------------------------------------------------
def _lstm_layer_kernel(x_ref, len_ref, h0_ref, c0_ref, wih_ref, whh_ref, b_ref,
                       y_ref, xproj_ref):
    # x_ref: (T, B, Din) bf16, wih_ref: (Din, 4H) bf16, whh_ref: (H, 4H) bf16
    # b_ref: (1, 4H) f32 = b_ih + b_hh, y_ref: (T, B, H) f32
    T, B, Din = x_ref.shape
    H = h0_ref.shape[-1]

    x2 = x_ref[...].reshape(T * B, Din)
    xproj_ref[...] = (jnp.dot(x2, wih_ref[...], preferred_element_type=jnp.float32)
                      + b_ref[...]).reshape(T, B, 4 * H)

    whh = whh_ref[...]
    lens = len_ref[...]                                          # (B, 1) int32

    def step(t, carry):
        h, c = carry
        g = xproj_ref[t] + jnp.dot(h.astype(whh.dtype), whh,
                                   preferred_element_type=jnp.float32)
        i = jax.nn.sigmoid(g[:, 0:H])
        f = jax.nn.sigmoid(g[:, H:2 * H])
        gg = jnp.tanh(g[:, 2 * H:3 * H])
        o = jax.nn.sigmoid(g[:, 3 * H:4 * H])
        c_new = f * c + i * gg
        h_new = o * jnp.tanh(c_new)
        valid = t < lens
        y_ref[t] = jnp.where(valid, h_new, 0.0)
        h = jnp.where(valid, h_new, h)
        c = jnp.where(valid, c_new, c)
        return h, c

    lax.fori_loop(0, T, step, (h0_ref[...], c0_ref[...]))


def lstm_layer(x_tbd, lengths, h0, c0, w_ih, w_hh, b_ih, b_hh):
    T, B, _ = x_tbd.shape
    H = h0.shape[-1]
    wihT = w_ih.T.astype(MATMUL_DTYPE)
    whhT = w_hh.T.astype(MATMUL_DTYPE)
    b = (b_ih + b_hh).reshape(1, 4 * H).astype(jnp.float32)
    len2d = lengths.reshape(B, 1).astype(jnp.int32)
    y = pl.pallas_call(
        _lstm_layer_kernel,
        out_shape=jax.ShapeDtypeStruct((T, B, H), jnp.float32),
        in_specs=[_VMEM] * 7,
        out_specs=_VMEM,
        scratch_shapes=[pltpu.VMEM((T, B, 4 * H), jnp.float32)],
    )(x_tbd.astype(MATMUL_DTYPE), len2d, h0.astype(jnp.float32),
      c0.astype(jnp.float32), wihT, whhT, b)
    return y


# ----------------------------------------------------------------------------
# Pallas kernel 3: pointer-score projections, computed ONCE
#   Hh = cond_out_h(h_enc),  Hg = cond_out_g(g_s)
# ----------------------------------------------------------------------------
def _score_proj_kernel(henc_ref, gs_ref, whT_ref, bh_ref, wgT_ref, bg_ref,
                       hh_ref, hg_ref):
    B, Tx, H = henc_ref.shape
    Tg = gs_ref.shape[0]
    hh = jnp.dot(henc_ref[...].reshape(B * Tx, H), whT_ref[...],
                 preferred_element_type=jnp.float32) + bh_ref[...]
    hh_ref[...] = hh.reshape(B, Tx, H)
    hg = jnp.dot(gs_ref[...].reshape(Tg * B, H), wgT_ref[...],
                 preferred_element_type=jnp.float32) + bg_ref[...]
    hg_ref[...] = hg.reshape(Tg, B, H)


# ----------------------------------------------------------------------------
# Pallas kernel 4: per-decoder-step pointer score
#   score = w_o . tanh(Hh + Hg[t])  + length mask (-100) + legacy softmax dim=0
# Gridded over Tg ("parallel"); Hh block is grid-invariant so it stays resident.
# ----------------------------------------------------------------------------
def _score_kernel(xlen_ref, hh_ref, hg_ref, wo_ref, bo_ref, score_ref, prob_ref):
    B, Tx, H = hh_ref.shape
    e = jnp.tanh(hh_ref[...] + hg_ref[0][:, None, :])            # (B, Tx, H)
    # 1-column output projection as VPU multiply + lane reduction (MXU-free).
    s = jnp.sum(e * wo_ref[...], axis=-1) + bo_ref[...]          # (B, Tx)
    tx_idx = lax.broadcasted_iota(jnp.int32, (B, Tx), 1)
    s = jnp.where(tx_idx < xlen_ref[...], s, -100.0)             # cond_score[b,:,num:]=-100
    score_ref[0] = s
    # NOTE: nn.Softmax() without dim on a 3-D tensor -> legacy dim=0 (batch);
    # that reduction is independent per (t_g, t_x), so it fits in this block.
    m = jnp.max(s, axis=0, keepdims=True)
    ex = jnp.exp(s - m)
    prob_ref[0] = ex / jnp.sum(ex, axis=0, keepdims=True)


def cond_score_fn(x_len, h_enc, g_s_tbh, Wh, bh, Wg, bg, Wo, bo):
    B, Tx, H = h_enc.shape
    Tg = g_s_tbh.shape[0]

    hh, hg = pl.pallas_call(
        _score_proj_kernel,
        out_shape=(jax.ShapeDtypeStruct((B, Tx, H), jnp.float32),
                   jax.ShapeDtypeStruct((Tg, B, H), jnp.float32)),
        in_specs=[_VMEM] * 6,
        out_specs=(_VMEM, _VMEM),
    )(h_enc.astype(MATMUL_DTYPE), g_s_tbh.astype(MATMUL_DTYPE),
      Wh.T.astype(MATMUL_DTYPE), bh.reshape(1, H).astype(jnp.float32),
      Wg.T.astype(MATMUL_DTYPE), bg.reshape(1, H).astype(jnp.float32))

    xlen2 = x_len.reshape(B, 1).astype(jnp.int32)
    score_tbx, prob_tbx = pl.pallas_call(
        _score_kernel,
        grid=(Tg,),
        in_specs=[
            pl.BlockSpec((B, 1), lambda t: (0, 0)),
            pl.BlockSpec((B, Tx, H), lambda t: (0, 0, 0)),       # grid-invariant
            pl.BlockSpec((1, B, H), lambda t: (t, 0, 0)),
            pl.BlockSpec((1, H), lambda t: (0, 0)),
            pl.BlockSpec((1, 1), lambda t: (0, 0)),
        ],
        out_specs=(pl.BlockSpec((1, B, Tx), lambda t: (t, 0, 0)),
                   pl.BlockSpec((1, B, Tx), lambda t: (t, 0, 0))),
        out_shape=(jax.ShapeDtypeStruct((Tg, B, Tx), jnp.float32),
                   jax.ShapeDtypeStruct((Tg, B, Tx), jnp.float32)),
        compiler_params=pltpu.CompilerParams(dimension_semantics=("parallel",)),
    )(xlen2, hh, hg, Wo.reshape(1, H).astype(jnp.float32),
      bo.reshape(1, 1).astype(jnp.float32))
    return score_tbx, prob_tbx                                   # time-major


# ----------------------------------------------------------------------------
# Parameter init (deterministic, shapes from Seq2SQL.__init__)
# ----------------------------------------------------------------------------
def init_params(key, N_word, N_h, N_depth, max_tok_num):
    Hh = N_h // 2
    keys = iter(jax.random.split(key, 64))

    def w(shape):
        return jax.random.normal(next(keys), shape, jnp.float32) * 0.1

    params = {}
    enc = []
    for layer in range(N_depth):
        din = N_word if layer == 0 else N_h
        layer_p = {}
        for d in ('fwd', 'bwd'):
            layer_p[d] = dict(w_ih=w((4 * Hh, din)), w_hh=w((4 * Hh, Hh)),
                              b_ih=w((4 * Hh,)), b_hh=w((4 * Hh,)))
        enc.append(layer_p)
    params['enc'] = enc
    dec = []
    for layer in range(N_depth):
        din = max_tok_num if layer == 0 else N_h
        dec.append(dict(w_ih=w((4 * N_h, din)), w_hh=w((4 * N_h, N_h)),
                        b_ih=w((4 * N_h,)), b_hh=w((4 * N_h,))))
    params['dec'] = dec
    params['cond_out_h'] = dict(W=w((N_h, N_h)), b=w((N_h,)))
    params['cond_out_g'] = dict(W=w((N_h, N_h)), b=w((N_h,)))
    params['cond_out'] = dict(W=w((1, N_h)), b=w((1,)))
    return params


def gen_gt_batch(tok_seqs, max_tok_num):
    # Seq2SQL.gen_gt_batch(gen_inp=True): one-hot of seq[:-1]. Host-side glue.
    B = len(tok_seqs)
    ret_len = np.array([len(s) - 1 for s in tok_seqs], dtype=np.int32)
    max_len = int(ret_len.max())
    arr = np.zeros((B, max_len, max_tok_num), dtype=np.float32)
    for b, s in enumerate(tok_seqs):
        for t, tok in enumerate(s[:-1]):
            arr[b, t, tok] = 1.0
    return jnp.asarray(arr), jnp.asarray(ret_len)


# ----------------------------------------------------------------------------
# Forward (gt_where is not None branch of Seq2SQL.forward)
# ----------------------------------------------------------------------------
def seq2sql_forward(params, x_emb, x_len, gt_onehot, gt_len):
    x_tbd = jnp.transpose(x_emb, (1, 0, 2))                      # (Tx, B, N_word)

    # --- cond_lstm: fused bidirectional, N_depth layers (eval, no dropout) ---
    layer_in = x_tbd
    finals = []
    for lp in params['enc']:
        layer_in, fc_f, fc_b = bidir_lstm_layer(
            layer_in, x_len,
            (lp['fwd']['w_ih'], lp['fwd']['w_hh'], lp['fwd']['b_ih'], lp['fwd']['b_hh']),
            (lp['bwd']['w_ih'], lp['bwd']['w_hh'], lp['bwd']['b_ih'], lp['bwd']['b_hh']))
        finals.append((fc_f, fc_b))
    h_enc = jnp.transpose(layer_in, (1, 0, 2))                   # (B, Tx, N_h)

    # decoder_hidden = tuple(cat((hid[:2], hid[:2]), dim=2) for hid in hidden)
    (h0f, c0f), (h0b, c0b) = finals[0]
    dec_h0 = [jnp.concatenate([h0f, h0f], axis=-1), jnp.concatenate([h0b, h0b], axis=-1)]
    dec_c0 = [jnp.concatenate([c0f, c0f], axis=-1), jnp.concatenate([c0b, c0b], axis=-1)]

    # --- cond_decoder: unidirectional, N_depth layers, teacher forcing ---
    # TODO(synk): decoder layer-0 one-hot @ W_ih could become an embedding-row
    # gather for large max_tok_num; kept as a single hoisted matmul here.
    g_in = jnp.transpose(gt_onehot, (1, 0, 2))                   # (Tg, B, max_tok_num)
    for layer, dp in enumerate(params['dec']):
        g_in = lstm_layer(g_in, gt_len, dec_h0[layer], dec_c0[layer],
                          dp['w_ih'], dp['w_hh'], dp['b_ih'], dp['b_hh'])
    g_s_tbh = g_in                                               # (Tg, B, N_h)

    # --- pointer scores + mask + softmax ---
    score_tbx, prob_tbx = cond_score_fn(
        x_len, h_enc, g_s_tbh,
        params['cond_out_h']['W'], params['cond_out_h']['b'],
        params['cond_out_g']['W'], params['cond_out_g']['b'],
        params['cond_out']['W'], params['cond_out']['b'])

    # torch.topk(cond_score, 1, 2)[1].squeeze(2) — computed from time-major score
    choices = jnp.argmax(score_tbx, axis=2).astype(jnp.int32).T  # (B, Tg)
    prob = jnp.transpose(prob_tbx, (1, 0, 2))                    # (B, Tg, Tx)
    return prob, choices


# TODO(synk): the free-decoding branch (gt_where is None) uses a host-side while
# loop over a Python `done_set` plus multinomial sampling; that data-dependent
# host control flow is not translated here.

if __name__ == "__main__":
    N_word, N_h, N_depth, max_tok_num = 16, 32, 2, 24
    B, Tx = 2, 8

    key = jax.random.PRNGKey(0)
    kp, kx = jax.random.split(key)
    params = init_params(kp, N_word, N_h, N_depth, max_tok_num)

    x_emb = jax.random.normal(kx, (B, Tx, N_word), jnp.float32)
    x_len = jnp.array([8, 6], dtype=jnp.int32)                   # max(x_len) == Tx
    gt_where = [[7, 2, 10, 4, 20, 1], [7, 2, 14, 4, 1]]          # generate_gt_seq-style ids
    gt_onehot, gt_len = gen_gt_batch(gt_where, max_tok_num)

    prob, choices = jax.jit(seq2sql_forward)(params, x_emb, x_len, gt_onehot, gt_len)
    jax.block_until_ready((prob, choices))
    assert prob.shape == (B, int(gt_len.max()), Tx)
    assert choices.shape == (B, int(gt_len.max()))
    print("KERNEL_OK")
</pallas_src>

<mosaic_0001>
module attributes {stable_mosaic.version = 11 : i64} {
  func.func @_bilstm_layer_kernel(%arg0: memref<8x2x16xbf16, #tpu.memory_space<vmem>>, %arg1: memref<2x1xi32, #tpu.memory_space<vmem>>, %arg2: memref<16x128xbf16, #tpu.memory_space<vmem>>, %arg3: memref<16x64xbf16, #tpu.memory_space<vmem>>, %arg4: memref<16x64xbf16, #tpu.memory_space<vmem>>, %arg5: memref<1x64xf32, #tpu.memory_space<vmem>>, %arg6: memref<1x64xf32, #tpu.memory_space<vmem>>, %arg7: memref<8x2x16xf32, #tpu.memory_space<vmem>>, %arg8: memref<8x2x16xf32, #tpu.memory_space<vmem>>, %arg9: memref<2x16xf32, #tpu.memory_space<vmem>>, %arg10: memref<2x16xf32, #tpu.memory_space<vmem>>, %arg11: memref<2x16xf32, #tpu.memory_space<vmem>>, %arg12: memref<2x16xf32, #tpu.memory_space<vmem>>, %arg13: memref<8x2x128xf32, #tpu.memory_space<vmem>>) attributes {dimension_semantics = [], scalar_prefetch = 0 : i64, scratch_operands = 1 : i64, tpu.core_type = #tpu.core_type<tc>} {
    %c0 = arith.constant 0 : index
    %c0_0 = arith.constant 0 : index
    %c0_1 = arith.constant 0 : index
    %0 = vector.load %arg0[%c0, %c0_0, %c0_1] : memref<8x2x16xbf16, #tpu.memory_space<vmem>>, vector<8x2x16xbf16>
    %1 = vector.shape_cast %0 : vector<8x2x16xbf16> to vector<16x16xbf16>
    %c0_2 = arith.constant 0 : index
    %c0_3 = arith.constant 0 : index
    %2 = vector.load %arg2[%c0_2, %c0_3] : memref<16x128xbf16, #tpu.memory_space<vmem>>, vector<16x128xbf16>
    %cst = arith.constant dense<0.000000e+00> : vector<16x128xf32>
    %3 = tpu.matmul %1, %2, %cst {dimension_numbers = #tpu.dot_dimension_numbers<[1], [0], [0], [1], [0, 0, 1, 1], [], []>} : vector<16x16xbf16>, vector<16x128xbf16>, vector<16x128xf32> -> vector<16x128xf32>
    %4 = vector.shape_cast %3 : vector<16x128xf32> to vector<8x2x128xf32>
    %c0_4 = arith.constant 0 : index
    %c0_5 = arith.constant 0 : index
    %c0_6 = arith.constant 0 : index
    %5 = vector.load %arg13[%c0_4, %c0_5, %c0_6] : memref<8x2x128xf32, #tpu.memory_space<vmem>>, vector<8x2x128xf32>
    tpu.vector_store %arg13[%c0_4, %c0_5, %c0_6], %4 {strides = array<i32>} : memref<8x2x128xf32, #tpu.memory_space<vmem>>, vector<8x2x128xf32>,
    %c0_7 = arith.constant 0 : index
    %c0_8 = arith.constant 0 : index
    %6 = vector.load %arg3[%c0_7, %c0_8] : memref<16x64xbf16, #tpu.memory_space<vmem>>, vector<16x64xbf16>
    %c0_9 = arith.constant 0 : index
    %c0_10 = arith.constant 0 : index
    %7 = vector.load %arg4[%c0_9, %c0_10] : memref<16x64xbf16, #tpu.memory_space<vmem>>, vector<16x64xbf16>
    %c0_11 = arith.constant 0 : index
    %c0_12 = arith.constant 0 : index
    %8 = vector.load %arg5[%c0_11, %c0_12] : memref<1x64xf32, #tpu.memory_space<vmem>>, vector<1x64xf32>
    %c0_13 = arith.constant 0 : index
    %c0_14 = arith.constant 0 : index
    %9 = vector.load %arg6[%c0_13, %c0_14] : memref<1x64xf32, #tpu.memory_space<vmem>>, vector<1x64xf32>
    %c0_15 = arith.constant 0 : index
    %c0_16 = arith.constant 0 : index
    %10 = vector.load %arg1[%c0_15, %c0_16] : memref<2x1xi32, #tpu.memory_space<vmem>>, vector<2x1xi32>
    %cst_17 = arith.constant 0.000000e+00 : f32
    %11 = vector.broadcast %cst_17 : f32 to vector<2x16xf32>
    %c0_i32 = arith.constant 0 : i32
    %c8_i32 = arith.constant 8 : i32
    %12 = arith.addi %c0_i32, %c8_i32 : i32
    %c1_i32 = arith.constant 1 : i32
    %13:4 = scf.for %arg14 = %c0_i32 to %12 step %c1_i32 iter_args(%arg15 = %11, %arg16 = %11, %arg17 = %11, %arg18 = %11) -> (vector<2x16xf32>, vector<2x16xf32>, vector<2x16xf32>, vector<2x16xf32>)  : i32 {
      %c7_i32 = arith.constant 7 : i32
      %18 = arith.subi %c7_i32, %arg14 : i32
      %19 = arith.index_cast %arg14 : i32 to index
      %c0_27 = arith.constant 0 : index
      %c0_28 = arith.constant 0 : index
      %20 = vector.load %arg13[%19, %c0_27, %c0_28] : memref<8x2x128xf32, #tpu.memory_space<vmem>>, vector<1x2x128xf32>
      %21 = vector.shape_cast %20 : vector<1x2x128xf32> to vector<2x128xf32>
      %22 = vector.extract_strided_slice %21 {offsets = [0, 0], sizes = [2, 64], strides = [1, 1]} : vector<2x128xf32> to vector<2x64xf32>
      %23 = vector.broadcast %8 : vector<1x64xf32> to vector<2x64xf32>
      %24 = arith.addf %22, %23 : vector<2x64xf32>
      %25 = arith.truncf %arg15 : vector<2x16xf32> to vector<2x16xbf16>
      %cst_29 = arith.constant dense<0.000000e+00> : vector<2x64xf32>
      %26 = tpu.matmul %25, %6, %cst_29 {dimension_numbers = #tpu.dot_dimension_numbers<[1], [0], [0], [1], [0, 0, 1, 1], [], []>} : vector<2x16xbf16>, vector<16x64xbf16>, vector<2x64xf32> -> vector<2x64xf32>
      %27 = arith.addf %24, %26 : vector<2x64xf32>
      %28 = vector.extract_strided_slice %27 {offsets = [0, 0], sizes = [2, 16], strides = [1, 1]} : vector<2x64xf32> to vector<2x16xf32>
      %29 = arith.negf %28 : vector<2x16xf32>
      %30 = math.exp %29 : vector<2x16xf32>
      %cst_30 = arith.constant 1.000000e+00 : f32
      %31 = vector.broadcast %cst_30 : f32 to vector<2x16xf32>
      %32 = arith.addf %31, %30 : vector<2x16xf32>
      %33 = arith.divf %31, %32 : vector<2x16xf32>
      %34 = vector.extract_strided_slice %27 {offsets = [0, 16], sizes = [2, 16], strides = [1, 1]} : vector<2x64xf32> to vector<2x16xf32>
      %35 = arith.negf %34 : vector<2x16xf32>
      %36 = math.exp %35 : vector<2x16xf32>
      %cst_31 = arith.constant 1.000000e+00 : f32
      %37 = vector.broadcast %cst_31 : f32 to vector<2x16xf32>
      %38 = arith.addf %37, %36 : vector<2x16xf32>
      %39 = arith.divf %37, %38 : vector<2x16xf32>
      %40 = vector.extract_strided_slice %27 {offsets = [0, 32], sizes = [2, 16], strides = [1, 1]} : vector<2x64xf32> to vector<2x16xf32>
      %41 = math.tanh %40 : vector<2x16xf32>
      %42 = vector.extract_strided_slice %27 {offsets = [0, 48], sizes = [2, 16], strides = [1, 1]} : vector<2x64xf32> to vector<2x16xf32>
      %43 = arith.negf %42 : vector<2x16xf32>
      %44 = math.exp %43 : vector<2x16xf32>
      %cst_32 = arith.constant 1.000000e+00 : f32
      %45 = vector.broadcast %cst_32 : f32 to vector<2x16xf32>
      %46 = arith.addf %45, %44 : vector<2x16xf32>
      %47 = arith.divf %45, %46 : vector<2x16xf32>
      %48 = arith.mulf %39, %arg16 : vector<2x16xf32>
      %49 = arith.mulf %33, %41 : vector<2x16xf32>
      %50 = arith.addf %48, %49 : vector<2x16xf32>
      %51 = math.tanh %50 : vector<2x16xf32>
      %52 = arith.mulf %47, %51 : vector<2x16xf32>
      %53 = vector.broadcast %arg14 : i32 to vector<2x1xi32>
      %54 = arith.cmpi slt, %53, %10 : vector<2x1xi32>
      %cst_33 = arith.constant 0.000000e+00 : f32
      %55 = vector.shape_cast %54 : vector<2x1xi1> to vector<2x1xi1>
      %56 = vector.broadcast %55 : vector<2x1xi1> to vector<2x16xi1>
      %57 = vector.broadcast %cst_33 : f32 to vector<2x16xf32>
      %58 = arith.select %56, %52, %57 : vector<2x16xi1>, vector<2x16xf32>
      %59 = arith.index_cast %arg14 : i32 to index
      %c0_34 = arith.constant 0 : index
      %c0_35 = arith.constant 0 : index
      %60 = vector.load %arg7[%59, %c0_34, %c0_35] : memref<8x2x16xf32, #tpu.memory_space<vmem>>, vector<1x2x16xf32>
      %61 = vector.shape_cast %60 : vector<1x2x16xf32> to vector<2x16xf32>
      %62 = vector.shape_cast %58 : vector<2x16xf32> to vector<1x2x16xf32>
      tpu.vector_store %arg7[%59, %c0_34, %c0_35], %62 {strides = array<i32>} : memref<8x2x16xf32, #tpu.memory_space<vmem>>, vector<1x2x16xf32>,
      %63 = vector.shape_cast %54 : vector<2x1xi1> to vector<2x1xi1>
      %64 = vector.broadcast %63 : vector<2x1xi1> to vector<2x16xi1>
      %65 = arith.select %64, %52, %arg15 : vector<2x16xi1>, vector<2x16xf32>
      %66 = vector.shape_cast %54 : vector<2x1xi1> to vector<2x1xi1>
      %67 = vector.broadcast %66 : vector<2x1xi1> to vector<2x16xi1>
      %68 = arith.select %67, %50, %arg16 : vector<2x16xi1>, vector<2x16xf32>
      %69 = arith.index_cast %18 : i32 to index
      %c0_36 = arith.constant 0 : index
      %c0_37 = arith.constant 0 : index
      %70 = vector.load %arg13[%69, %c0_36, %c0_37] : memref<8x2x128xf32, #tpu.memory_space<vmem>>, vector<1x2x128xf32>
      %71 = vector.shape_cast %70 : vector<1x2x128xf32> to vector<2x128xf32>
      %72 = vector.extract_strided_slice %71 {offsets = [0, 64], sizes = [2, 64], strides = [1, 1]} : vector<2x128xf32> to vector<2x64xf32>
      %73 = vector.broadcast %9 : vector<1x64xf32> to vector<2x64xf32>
      %74 = arith.addf %72, %73 : vector<2x64xf32>
      %75 = arith.truncf %arg17 : vector<2x16xf32> to vector<2x16xbf16>
      %cst_38 = arith.constant dense<0.000000e+00> : vector<2x64xf32>
      %76 = tpu.matmul %75, %7, %cst_38 {dimension_numbers = #tpu.dot_dimension_numbers<[1], [0], [0], [1], [0, 0, 1, 1], [], []>} : vector<2x16xbf16>, vector<16x64xbf16>, vector<2x64xf32> -> vector<2x64xf32>
      %77 = arith.addf %74, %76 : vector<2x64xf32>
      %78 = vector.extract_strided_slice %77 {offsets = [0, 0], sizes = [2, 16], strides = [1, 1]} : vector<2x64xf32> to vector<2x16xf32>
      %79 = arith.negf %78 : vector<2x16xf32>
      %80 = math.exp %79 : vector<2x16xf32>
      %cst_39 = arith.constant 1.000000e+00 : f32
      %81 = vector.broadcast %cst_39 : f32 to vector<2x16xf32>
      %82 = arith.addf %81, %80 : vector<2x16xf32>
      %83 = arith.divf %81, %82 : vector<2x16xf32>
      %84 = vector.extract_strided_slice %77 {offsets = [0, 16], sizes = [2, 16], strides = [1, 1]} : vector<2x64xf32> to vector<2x16xf32>
      %85 = arith.negf %84 : vector<2x16xf32>
      %86 = math.exp %85 : vector<2x16xf32>
      %cst_40 = arith.constant 1.000000e+00 : f32
      %87 = vector.broadcast %cst_40 : f32 to vector<2x16xf32>
      %88 = arith.addf %87, %86 : vector<2x16xf32>
      %89 = arith.divf %87, %88 : vector<2x16xf32>
      %90 = vector.extract_strided_slice %77 {offsets = [0, 32], sizes = [2, 16], strides = [1, 1]} : vector<2x64xf32> to vector<2x16xf32>
      %91 = math.tanh %90 : vector<2x16xf32>
      %92 = vector.extract_strided_slice %77 {offsets = [0, 48], sizes = [2, 16], strides = [1, 1]} : vector<2x64xf32> to vector<2x16xf32>
      %93 = arith.negf %92 : vector<2x16xf32>
      %94 = math.exp %93 : vector<2x16xf32>
      %cst_41 = arith.constant 1.000000e+00 : f32
      %95 = vector.broadcast %cst_41 : f32 to vector<2x16xf32>
      %96 = arith.addf %95, %94 : vector<2x16xf32>
      %97 = arith.divf %95, %96 : vector<2x16xf32>
      %98 = arith.mulf %89, %arg18 : vector<2x16xf32>
      %99 = arith.mulf %83, %91 : vector<2x16xf32>
      %100 = arith.addf %98, %99 : vector<2x16xf32>
      %101 = math.tanh %100 : vector<2x16xf32>
      %102 = arith.mulf %97, %101 : vector<2x16xf32>
      %103 = vector.broadcast %18 : i32 to vector<2x1xi32>
      %104 = arith.cmpi slt, %103, %10 : vector<2x1xi32>
      %cst_42 = arith.constant 0.000000e+00 : f32
      %105 = vector.shape_cast %104 : vector<2x1xi1> to vector<2x1xi1>
      %106 = vector.broadcast %105 : vector<2x1xi1> to vector<2x16xi1>
      %107 = vector.broadcast %cst_42 : f32 to vector<2x16xf32>
      %108 = arith.select %106, %102, %107 : vector<2x16xi1>, vector<2x16xf32>
      %109 = arith.index_cast %18 : i32 to index
      %c0_43 = arith.constant 0 : index
      %c0_44 = arith.constant 0 : index
      %110 = vector.load %arg8[%109, %c0_43, %c0_44] : memref<8x2x16xf32, #tpu.memory_space<vmem>>, vector<1x2x16xf32>
      %111 = vector.shape_cast %110 : vector<1x2x16xf32> to vector<2x16xf32>
      %112 = vector.shape_cast %108 : vector<2x16xf32> to vector<1x2x16xf32>
      tpu.vector_store %arg8[%109, %c0_43, %c0_44], %112 {strides = array<i32>} : memref<8x2x16xf32, #tpu.memory_space<vmem>>, vector<1x2x16xf32>,
      %113 = vector.shape_cast %104 : vector<2x1xi1> to vector<2x1xi1>
      %114 = vector.broadcast %113 : vector<2x1xi1> to vector<2x16xi1>
      %115 = arith.select %114, %102, %arg17 : vector<2x16xi1>, vector<2x16xf32>
      %116 = vector.shape_cast %104 : vector<2x1xi1> to vector<2x1xi1>
      %117 = vector.broadcast %116 : vector<2x1xi1> to vector<2x16xi1>
      %118 = arith.select %117, %100, %arg18 : vector<2x16xi1>, vector<2x16xf32>
      scf.yield %65, %68, %115, %118 : vector<2x16xf32>, vector<2x16xf32>, vector<2x16xf32>, vector<2x16xf32>
    }
    %c8_i32_18 = arith.constant 8 : i32
    %c0_19 = arith.constant 0 : index
    %c0_20 = arith.constant 0 : index
    %14 = vector.load %arg9[%c0_19, %c0_20] : memref<2x16xf32, #tpu.memory_space<vmem>>, vector<2x16xf32>
    tpu.vector_store %arg9[%c0_19, %c0_20], %13#0 {strides = array<i32>} : memref<2x16xf32, #tpu.memory_space<vmem>>, vector<2x16xf32>,
    %c0_21 = arith.constant 0 : index
    %c0_22 = arith.constant 0 : index
    %15 = vector.load %arg10[%c0_21, %c0_22] : memref<2x16xf32, #tpu.memory_space<vmem>>, vector<2x16xf32>
    tpu.vector_store %arg10[%c0_21, %c0_22], %13#1 {strides = array<i32>} : memref<2x16xf32, #tpu.memory_space<vmem>>, vector<2x16xf32>,
    %c0_23 = arith.constant 0 : index
    %c0_24 = arith.constant 0 : index
    %16 = vector.load %arg11[%c0_23, %c0_24] : memref<2x16xf32, #tpu.memory_space<vmem>>, vector<2x16xf32>
    tpu.vector_store %arg11[%c0_23, %c0_24], %13#2 {strides = array<i32>} : memref<2x16xf32, #tpu.memory_space<vmem>>, vector<2x16xf32>,
    %c0_25 = arith.constant 0 : index
    %c0_26 = arith.constant 0 : index
    %17 = vector.load %arg12[%c0_25, %c0_26] : memref<2x16xf32, #tpu.memory_space<vmem>>, vector<2x16xf32>
    tpu.vector_store %arg12[%c0_25, %c0_26], %13#3 {strides = array<i32>} : memref<2x16xf32, #tpu.memory_space<vmem>>, vector<2x16xf32>,
    return
  }
}

module attributes {stable_mosaic.version = 11 : i64} {
  func.func @_bilstm_layer_kernel(%arg0: memref<8x2x32xbf16, #tpu.memory_space<vmem>>, %arg1: memref<2x1xi32, #tpu.memory_space<vmem>>, %arg2: memref<32x128xbf16, #tpu.memory_space<vmem>>, %arg3: memref<16x64xbf16, #tpu.memory_space<vmem>>, %arg4: memref<16x64xbf16, #tpu.memory_space<vmem>>, %arg5: memref<1x64xf32, #tpu.memory_space<vmem>>, %arg6: memref<1x64xf32, #tpu.memory_space<vmem>>, %arg7: memref<8x2x16xf32, #tpu.memory_space<vmem>>, %arg8: memref<8x2x16xf32, #tpu.memory_space<vmem>>, %arg9: memref<2x16xf32, #tpu.memory_space<vmem>>, %arg10: memref<2x16xf32, #tpu.memory_space<vmem>>, %arg11: memref<2x16xf32, #tpu.memory_space<vmem>>, %arg12: memref<2x16xf32, #tpu.memory_space<vmem>>, %arg13: memref<8x2x128xf32, #tpu.memory_space<vmem>>) attributes {dimension_semantics = [], scalar_prefetch = 0 : i64, scratch_operands = 1 : i64, tpu.core_type = #tpu.core_type<tc>} {
    %c0 = arith.constant 0 : index
    %c0_0 = arith.constant 0 : index
    %c0_1 = arith.constant 0 : index
    %0 = vector.load %arg0[%c0, %c0_0, %c0_1] : memref<8x2x32xbf16, #tpu.memory_space<vmem>>, vector<8x2x32xbf16>
    %1 = vector.shape_cast %0 : vector<8x2x32xbf16> to vector<16x32xbf16>
    %c0_2 = arith.constant 0 : index
    %c0_3 = arith.constant 0 : index
    %2 = vector.load %arg2[%c0_2, %c0_3] : memref<32x128xbf16, #tpu.memory_space<vmem>>, vector<32x128xbf16>
    %cst = arith.constant dense<0.000000e+00> : vector<16x128xf32>
    %3 = tpu.matmul %1, %2, %cst {dimension_numbers = #tpu.dot_dimension_numbers<[1], [0], [0], [1], [0, 0, 1, 1], [], []>} : vector<16x32xbf16>, vector<32x128xbf16>, vector<16x128xf32> -> vector<16x128xf32>
    %4 = vector.shape_cast %3 : vector<16x128xf32> to vector<8x2x128xf32>
    %c0_4 = arith.constant 0 : index
    %c0_5 = arith.constant 0 : index
    %c0_6 = arith.constant 0 : index
    %5 = vector.load %arg13[%c0_4, %c0_5, %c0_6] : memref<8x2x128xf32, #tpu.memory_space<vmem>>, vector<8x2x128xf32>
    tpu.vector_store %arg13[%c0_4, %c0_5, %c0_6], %4 {strides = array<i32>} : memref<8x2x128xf32, #tpu.memory_space<vmem>>, vector<8x2x128xf32>,
    %c0_7 = arith.constant 0 : index
    %c0_8 = arith.constant 0 : index
    %6 = vector.load %arg3[%c0_7, %c0_8] : memref<16x64xbf16, #tpu.memory_space<vmem>>, vector<16x64xbf16>
    %c0_9 = arith.constant 0 : index
    %c0_10 = arith.constant 0 : index
    %7 = vector.load %arg4[%c0_9, %c0_10] : memref<16x64xbf16, #tpu.memory_space<vmem>>, vector<16x64xbf16>
    %c0_11 = arith.constant 0 : index
    %c0_12 = arith.constant 0 : index
    %8 = vector.load %arg5[%c0_11, %c0_12] : memref<1x64xf32, #tpu.memory_space<vmem>>, vector<1x64xf32>
    %c0_13 = arith.constant 0 : index
    %c0_14 = arith.constant 0 : index
    %9 = vector.load %arg6[%c0_13, %c0_14] : memref<1x64xf32, #tpu.memory_space<vmem>>, vector<1x64xf32>
    %c0_15 = arith.constant 0 : index
    %c0_16 = arith.constant 0 : index
    %10 = vector.load %arg1[%c0_15, %c0_16] : memref<2x1xi32, #tpu.memory_space<vmem>>, vector<2x1xi32>
    %cst_17 = arith.constant 0.000000e+00 : f32
    %11 = vector.broadcast %cst_17 : f32 to vector<2x16xf32>
    %c0_i32 = arith.constant 0 : i32
    %c8_i32 = arith.constant 8 : i32
    %12 = arith.addi %c0_i32, %c8_i32 : i32
    %c1_i32 = arith.constant 1 : i32
    %13:4 = scf.for %arg14 = %c0_i32 to %12 step %c1_i32 iter_args(%arg15 = %11, %arg16 = %11, %arg17 = %11, %arg18 = %11) -> (vector<2x16xf32>, vector<2x16xf32>, vector<2x16xf32>, vector<2x16xf32>)  : i32 {
      %c7_i32 = arith.constant 7 : i32
      %18 = arith.subi %c7_i32, %arg14 : i32
      %19 = arith.index_cast %arg14 : i32 to index
      %c0_27 = arith.constant 0 : index
      %c0_28 = arith.constant 0 : index
      %20 = vector.load %arg13[%19, %c0_27, %c0_28] : memref<8x2x128xf32, #tpu.memory_space<vmem>>, vector<1x2x128xf32>
      %21 = vector.shape_cast %20 : vector<1x2x128xf32> to vector<2x128xf32>
      %22 = vector.extract_strided_slice %21 {offsets = [0, 0], sizes = [2, 64], strides = [1, 1]} : vector<2x128xf32> to vector<2x64xf32>
      %23 = vector.broadcast %8 : vector<1x64xf32> to vector<2x64xf32>
      %24 = arith.addf %22, %23 : vector<2x64xf32>
      %25 = arith.truncf %arg15 : vector<2x16xf32> to vector<2x16xbf16>
      %cst_29 = arith.constant dense<0.000000e+00> : vector<2x64xf32>
      %26 = tpu.matmul %25, %6, %cst_29 {dimension_numbers = #tpu.dot_dimension_numbers<[1], [0], [0], [1], [0, 0, 1, 1], [], []>} : vector<2x16xbf16>, vector<16x64xbf16>, vector<2x64xf32> -> vector<2x64xf32>
      %27 = arith.addf %24, %26 : vector<2x64xf32>
      %28 = vector.extract_strided_slice %27 {offsets = [0, 0], sizes = [2, 16], strides = [1, 1]} : vector<2x64xf32> to vector<2x16xf32>
      %29 = arith.negf %28 : vector<2x16xf32>
      %30 = math.exp %29 : vector<2x16xf32>
      %cst_30 = arith.constant 1.000000e+00 : f32
      %31 = vector.broadcast %cst_30 : f32 to vector<2x16xf32>
      %32 = arith.addf %31, %30 : vector<2x16xf32>
      %33 = arith.divf %31, %32 : vector<2x16xf32>
      %34 = vector.extract_strided_slice %27 {offsets = [0, 16], sizes = [2, 16], strides = [1, 1]} : vector<2x64xf32> to vector<2x16xf32>
      %35 = arith.negf %34 : vector<2x16xf32>
      %36 = math.exp %35 : vector<2x16xf32>
      %cst_31 = arith.constant 1.000000e+00 : f32
      %37 = vector.broadcast %cst_31 : f32 to vector<2x16xf32>
      %38 = arith.addf %37, %36 : vector<2x16xf32>
      %39 = arith.divf %37, %38 : vector<2x16xf32>
      %40 = vector.extract_strided_slice %27 {offsets = [0, 32], sizes = [2, 16], strides = [1, 1]} : vector<2x64xf32> to vector<2x16xf32>
      %41 = math.tanh %40 : vector<2x16xf32>
      %42 = vector.extract_strided_slice %27 {offsets = [0, 48], sizes = [2, 16], strides = [1, 1]} : vector<2x64xf32> to vector<2x16xf32>
      %43 = arith.negf %42 : vector<2x16xf32>
      %44 = math.exp %43 : vector<2x16xf32>
      %cst_32 = arith.constant 1.000000e+00 : f32
      %45 = vector.broadcast %cst_32 : f32 to vector<2x16xf32>
      %46 = arith.addf %45, %44 : vector<2x16xf32>
      %47 = arith.divf %45, %46 : vector<2x16xf32>
      %48 = arith.mulf %39, %arg16 : vector<2x16xf32>
      %49 = arith.mulf %33, %41 : vector<2x16xf32>
      %50 = arith.addf %48, %49 : vector<2x16xf32>
      %51 = math.tanh %50 : vector<2x16xf32>
      %52 = arith.mulf %47, %51 : vector<2x16xf32>
      %53 = vector.broadcast %arg14 : i32 to vector<2x1xi32>
      %54 = arith.cmpi slt, %53, %10 : vector<2x1xi32>
      %cst_33 = arith.constant 0.000000e+00 : f32
      %55 = vector.shape_cast %54 : vector<2x1xi1> to vector<2x1xi1>
      %56 = vector.broadcast %55 : vector<2x1xi1> to vector<2x16xi1>
      %57 = vector.broadcast %cst_33 : f32 to vector<2x16xf32>
      %58 = arith.select %56, %52, %57 : vector<2x16xi1>, vector<2x16xf32>
      %59 = arith.index_cast %arg14 : i32 to index
      %c0_34 = arith.constant 0 : index
      %c0_35 = arith.constant 0 : index
      %60 = vector.load %arg7[%59, %c0_34, %c0_35] : memref<8x2x16xf32, #tpu.memory_space<vmem>>, vector<1x2x16xf32>
      %61 = vector.shape_cast %60 : vector<1x2x16xf32> to vector<2x16xf32>
      %62 = vector.shape_cast %58 : vector<2x16xf32> to vector<1x2x16xf32>
      tpu.vector_store %arg7[%59, %c0_34, %c0_35], %62 {strides = array<i32>} : memref<8x2x16xf32, #tpu.memory_space<vmem>>, vector<1x2x16xf32>,
      %63 = vector.shape_cast %54 : vector<2x1xi1> to vector<2x1xi1>
      %64 = vector.broadcast %63 : vector<2x1xi1> to vector<2x16xi1>
      %65 = arith.select %64, %52, %arg15 : vector<2x16xi1>, vector<2x16xf32>
      %66 = vector.shape_cast %54 : vector<2x1xi1> to vector<2x1xi1>
      %67 = vector.broadcast %66 : vector<2x1xi1> to vector<2x16xi1>
      %68 = arith.select %67, %50, %arg16 : vector<2x16xi1>, vector<2x16xf32>
      %69 = arith.index_cast %18 : i32 to index
      %c0_36 = arith.constant 0 : index
      %c0_37 = arith.constant 0 : index
      %70 = vector.load %arg13[%69, %c0_36, %c0_37] : memref<8x2x128xf32, #tpu.memory_space<vmem>>, vector<1x2x128xf32>
      %71 = vector.shape_cast %70 : vector<1x2x128xf32> to vector<2x128xf32>
      %72 = vector.extract_strided_slice %71 {offsets = [0, 64], sizes = [2, 64], strides = [1, 1]} : vector<2x128xf32> to vector<2x64xf32>
      %73 = vector.broadcast %9 : vector<1x64xf32> to vector<2x64xf32>
      %74 = arith.addf %72, %73 : vector<2x64xf32>
      %75 = arith.truncf %arg17 : vector<2x16xf32> to vector<2x16xbf16>
      %cst_38 = arith.constant dense<0.000000e+00> : vector<2x64xf32>
      %76 = tpu.matmul %75, %7, %cst_38 {dimension_numbers = #tpu.dot_dimension_numbers<[1], [0], [0], [1], [0, 0, 1, 1], [], []>} : vector<2x16xbf16>, vector<16x64xbf16>, vector<2x64xf32> -> vector<2x64xf32>
      %77 = arith.addf %74, %76 : vector<2x64xf32>
      %78 = vector.extract_strided_slice %77 {offsets = [0, 0], sizes = [2, 16], strides = [1, 1]} : vector<2x64xf32> to vector<2x16xf32>
      %79 = arith.negf %78 : vector<2x16xf32>
      %80 = math.exp %79 : vector<2x16xf32>
      %cst_39 = arith.constant 1.000000e+00 : f32
      %81 = vector.broadcast %cst_39 : f32 to vector<2x16xf32>
      %82 = arith.addf %81, %80 : vector<2x16xf32>
      %83 = arith.divf %81, %82 : vector<2x16xf32>
      %84 = vector.extract_strided_slice %77 {offsets = [0, 16], sizes = [2, 16], strides = [1, 1]} : vector<2x64xf32> to vector<2x16xf32>
      %85 = arith.negf %84 : vector<2x16xf32>
      %86 = math.exp %85 : vector<2x16xf32>
      %cst_40 = arith.constant 1.000000e+00 : f32
      %87 = vector.broadcast %cst_40 : f32 to vector<2x16xf32>
      %88 = arith.addf %87, %86 : vector<2x16xf32>
      %89 = arith.divf %87, %88 : vector<2x16xf32>
      %90 = vector.extract_strided_slice %77 {offsets = [0, 32], sizes = [2, 16], strides = [1, 1]} : vector<2x64xf32> to vector<2x16xf32>
      %91 = math.tanh %90 : vector<2x16xf32>
      %92 = vector.extract_strided_slice %77 {offsets = [0, 48], sizes = [2, 16], strides = [1, 1]} : vector<2x64xf32> to vector<2x16xf32>
      %93 = arith.negf %92 : vector<2x16xf32>
      %94 = math.exp %93 : vector<2x16xf32>
      %cst_41 = arith.constant 1.000000e+00 : f32
      %95 = vector.broadcast %cst_41 : f32 to vector<2x16xf32>
      %96 = arith.addf %95, %94 : vector<2x16xf32>
      %97 = arith.divf %95, %96 : vector<2x16xf32>
      %98 = arith.mulf %89, %arg18 : vector<2x16xf32>
      %99 = arith.mulf %83, %91 : vector<2x16xf32>
      %100 = arith.addf %98, %99 : vector<2x16xf32>
      %101 = math.tanh %100 : vector<2x16xf32>
      %102 = arith.mulf %97, %101 : vector<2x16xf32>
      %103 = vector.broadcast %18 : i32 to vector<2x1xi32>
      %104 = arith.cmpi slt, %103, %10 : vector<2x1xi32>
      %cst_42 = arith.constant 0.000000e+00 : f32
      %105 = vector.shape_cast %104 : vector<2x1xi1> to vector<2x1xi1>
      %106 = vector.broadcast %105 : vector<2x1xi1> to vector<2x16xi1>
      %107 = vector.broadcast %cst_42 : f32 to vector<2x16xf32>
      %108 = arith.select %106, %102, %107 : vector<2x16xi1>, vector<2x16xf32>
      %109 = arith.index_cast %18 : i32 to index
      %c0_43 = arith.constant 0 : index
      %c0_44 = arith.constant 0 : index
      %110 = vector.load %arg8[%109, %c0_43, %c0_44] : memref<8x2x16xf32, #tpu.memory_space<vmem>>, vector<1x2x16xf32>
      %111 = vector.shape_cast %110 : vector<1x2x16xf32> to vector<2x16xf32>
      %112 = vector.shape_cast %108 : vector<2x16xf32> to vector<1x2x16xf32>
      tpu.vector_store %arg8[%109, %c0_43, %c0_44], %112 {strides = array<i32>} : memref<8x2x16xf32, #tpu.memory_space<vmem>>, vector<1x2x16xf32>,
      %113 = vector.shape_cast %104 : vector<2x1xi1> to vector<2x1xi1>
      %114 = vector.broadcast %113 : vector<2x1xi1> to vector<2x16xi1>
      %115 = arith.select %114, %102, %arg17 : vector<2x16xi1>, vector<2x16xf32>
      %116 = vector.shape_cast %104 : vector<2x1xi1> to vector<2x1xi1>
      %117 = vector.broadcast %116 : vector<2x1xi1> to vector<2x16xi1>
      %118 = arith.select %117, %100, %arg18 : vector<2x16xi1>, vector<2x16xf32>
      scf.yield %65, %68, %115, %118 : vector<2x16xf32>, vector<2x16xf32>, vector<2x16xf32>, vector<2x16xf32>
    }
    %c8_i32_18 = arith.constant 8 : i32
    %c0_19 = arith.constant 0 : index
    %c0_20 = arith.constant 0 : index
    %14 = vector.load %arg9[%c0_19, %c0_20] : memref<2x16xf32, #tpu.memory_space<vmem>>, vector<2x16xf32>
    tpu.vector_store %arg9[%c0_19, %c0_20], %13#0 {strides = array<i32>} : memref<2x16xf32, #tpu.memory_space<vmem>>, vector<2x16xf32>,
    %c0_21 = arith.constant 0 : index
    %c0_22 = arith.constant 0 : index
    %15 = vector.load %arg10[%c0_21, %c0_22] : memref<2x16xf32, #tpu.memory_space<vmem>>, vector<2x16xf32>
    tpu.vector_store %arg10[%c0_21, %c0_22], %13#1 {strides = array<i32>} : memref<2x16xf32, #tpu.memory_space<vmem>>, vector<2x16xf32>,
    %c0_23 = arith.constant 0 : index
    %c0_24 = arith.constant 0 : index
    %16 = vector.load %arg11[%c0_23, %c0_24] : memref<2x16xf32, #tpu.memory_space<vmem>>, vector<2x16xf32>
    tpu.vector_store %arg11[%c0_23, %c0_24], %13#2 {strides = array<i32>} : memref<2x16xf32, #tpu.memory_space<vmem>>, vector<2x16xf32>,
    %c0_25 = arith.constant 0 : index
    %c0_26 = arith.constant 0 : index
    %17 = vector.load %arg12[%c0_25, %c0_26] : memref<2x16xf32, #tpu.memory_space<vmem>>, vector<2x16xf32>
    tpu.vector_store %arg12[%c0_25, %c0_26], %13#3 {strides = array<i32>} : memref<2x16xf32, #tpu.memory_space<vmem>>, vector<2x16xf32>,
    return
  }
}

module attributes {stable_mosaic.version = 11 : i64} {
  func.func @_lstm_layer_kernel(%arg0: memref<5x2x24xbf16, #tpu.memory_space<vmem>>, %arg1: memref<2x1xi32, #tpu.memory_space<vmem>>, %arg2: memref<2x32xf32, #tpu.memory_space<vmem>>, %arg3: memref<2x32xf32, #tpu.memory_space<vmem>>, %arg4: memref<24x128xbf16, #tpu.memory_space<vmem>>, %arg5: memref<32x128xbf16, #tpu.memory_space<vmem>>, %arg6: memref<1x128xf32, #tpu.memory_space<vmem>>, %arg7: memref<5x2x32xf32, #tpu.memory_space<vmem>>, %arg8: memref<5x2x128xf32, #tpu.memory_space<vmem>>) attributes {dimension_semantics = [], scalar_prefetch = 0 : i64, scratch_operands = 1 : i64, tpu.core_type = #tpu.core_type<tc>} {
    %c0 = arith.constant 0 : index
    %c0_0 = arith.constant 0 : index
    %c0_1 = arith.constant 0 : index
    %0 = vector.load %arg0[%c0, %c0_0, %c0_1] : memref<5x2x24xbf16, #tpu.memory_space<vmem>>, vector<5x2x24xbf16>
    %1 = vector.shape_cast %0 : vector<5x2x24xbf16> to vector<10x24xbf16>
    %c0_2 = arith.constant 0 : index
    %c0_3 = arith.constant 0 : index
    %2 = vector.load %arg4[%c0_2, %c0_3] : memref<24x128xbf16, #tpu.memory_space<vmem>>, vector<24x128xbf16>
    %cst = arith.constant dense<0.000000e+00> : vector<10x128xf32>
    %3 = tpu.matmul %1, %2, %cst {dimension_numbers = #tpu.dot_dimension_numbers<[1], [0], [0], [1], [0, 0, 1, 1], [], []>} : vector<10x24xbf16>, vector<24x128xbf16>, vector<10x128xf32> -> vector<10x128xf32>
    %c0_4 = arith.constant 0 : index
    %c0_5 = arith.constant 0 : index
    %4 = vector.load %arg6[%c0_4, %c0_5] : memref<1x128xf32, #tpu.memory_space<vmem>>, vector<1x128xf32>
    %5 = vector.broadcast %4 : vector<1x128xf32> to vector<10x128xf32>
    %6 = arith.addf %3, %5 : vector<10x128xf32>
    %7 = vector.shape_cast %6 : vector<10x128xf32> to vector<5x2x128xf32>
    %c0_6 = arith.constant 0 : index
    %c0_7 = arith.constant 0 : index
    %c0_8 = arith.constant 0 : index
    %8 = vector.load %arg8[%c0_6, %c0_7, %c0_8] : memref<5x2x128xf32, #tpu.memory_space<vmem>>, vector<5x2x128xf32>
    tpu.vector_store %arg8[%c0_6, %c0_7, %c0_8], %7 {strides = array<i32>} : memref<5x2x128xf32, #tpu.memory_space<vmem>>, vector<5x2x128xf32>,
    %c0_9 = arith.constant 0 : index
    %c0_10 = arith.constant 0 : index
    %9 = vector.load %arg5[%c0_9, %c0_10] : memref<32x128xbf16, #tpu.memory_space<vmem>>, vector<32x128xbf16>
    %c0_11 = arith.constant 0 : index
    %c0_12 = arith.constant 0 : index
    %10 = vector.load %arg1[%c0_11, %c0_12] : memref<2x1xi32, #tpu.memory_space<vmem>>, vector<2x1xi32>
    %c0_13 = arith.constant 0 : index
    %c0_14 = arith.constant 0 : index
    %11 = vector.load %arg2[%c0_13, %c0_14] : memref<2x32xf32, #tpu.memory_space<vmem>>, vector<2x32xf32>
    %c0_15 = arith.constant 0 : index
    %c0_16 = arith.constant 0 : index
    %12 = vector.load %arg3[%c0_15, %c0_16] : memref<2x32xf32, #tpu.memory_space<vmem>>, vector<2x32xf32>
    %c0_i32 = arith.constant 0 : i32
    %c5_i32 = arith.constant 5 : i32
    %13 = arith.addi %c0_i32, %c5_i32 : i32
    %c1_i32 = arith.constant 1 : i32
    %14:2 = scf.for %arg9 = %c0_i32 to %13 step %c1_i32 iter_args(%arg10 = %11, %arg11 = %12) -> (vector<2x32xf32>, vector<2x32xf32>)  : i32 {
      %15 = arith.index_cast %arg9 : i32 to index
      %c0_18 = arith.constant 0 : index
      %c0_19 = arith.constant 0 : index
      %16 = vector.load %arg8[%15, %c0_18, %c0_19] : memref<5x2x128xf32, #tpu.memory_space<vmem>>, vector<1x2x128xf32>
      %17 = vector.shape_cast %16 : vector<1x2x128xf32> to vector<2x128xf32>
      %18 = arith.truncf %arg10 : vector<2x32xf32> to vector<2x32xbf16>
      %cst_20 = arith.constant dense<0.000000e+00> : vector<2x128xf32>
      %19 = tpu.matmul %18, %9, %cst_20 {dimension_numbers = #tpu.dot_dimension_numbers<[1], [0], [0], [1], [0, 0, 1, 1], [], []>} : vector<2x32xbf16>, vector<32x128xbf16>, vector<2x128xf32> -> vector<2x128xf32>
      %20 = arith.addf %17, %19 : vector<2x128xf32>
      %21 = vector.extract_strided_slice %20 {offsets = [0, 0], sizes = [2, 32], strides = [1, 1]} : vector<2x128xf32> to vector<2x32xf32>
      %22 = arith.negf %21 : vector<2x32xf32>
      %23 = math.exp %22 : vector<2x32xf32>
      %cst_21 = arith.constant 1.000000e+00 : f32
      %24 = vector.broadcast %cst_21 : f32 to vector<2x32xf32>
      %25 = arith.addf %24, %23 : vector<2x32xf32>
      %26 = arith.divf %24, %25 : vector<2x32xf32>
      %27 = vector.extract_strided_slice %20 {offsets = [0, 32], sizes = [2, 32], strides = [1, 1]} : vector<2x128xf32> to vector<2x32xf32>
      %28 = arith.negf %27 : vector<2x32xf32>
      %29 = math.exp %28 : vector<2x32xf32>
      %cst_22 = arith.constant 1.000000e+00 : f32
      %30 = vector.broadcast %cst_22 : f32 to vector<2x32xf32>
      %31 = arith.addf %30, %29 : vector<2x32xf32>
      %32 = arith.divf %30, %31 : vector<2x32xf32>
      %33 = vector.extract_strided_slice %20 {offsets = [0, 64], sizes = [2, 32], strides = [1, 1]} : vector<2x128xf32> to vector<2x32xf32>
      %34 = math.tanh %33 : vector<2x32xf32>
      %35 = vector.extract_strided_slice %20 {offsets = [0, 96], sizes = [2, 32], strides = [1, 1]} : vector<2x128xf32> to vector<2x32xf32>
      %36 = arith.negf %35 : vector<2x32xf32>
      %37 = math.exp %36 : vector<2x32xf32>
      %cst_23 = arith.constant 1.000000e+00 : f32
      %38 = vector.broadcast %cst_23 : f32 to vector<2x32xf32>
      %39 = arith.addf %38, %37 : vector<2x32xf32>
      %40 = arith.divf %38, %39 : vector<2x32xf32>
      %41 = arith.mulf %32, %arg11 : vector<2x32xf32>
      %42 = arith.mulf %26, %34 : vector<2x32xf32>
      %43 = arith.addf %41, %42 : vector<2x32xf32>
      %44 = math.tanh %43 : vector<2x32xf32>
      %45 = arith.mulf %40, %44 : vector<2x32xf32>
      %46 = vector.broadcast %arg9 : i32 to vector<2x1xi32>
      %47 = arith.cmpi slt, %46, %10 : vector<2x1xi32>
      %cst_24 = arith.constant 0.000000e+00 : f32
      %48 = vector.shape_cast %47 : vector<2x1xi1> to vector<2x1xi1>
      %49 = vector.broadcast %48 : vector<2x1xi1> to vector<2x32xi1>
      %50 = vector.broadcast %cst_24 : f32 to vector<2x32xf32>
      %51 = arith.select %49, %45, %50 : vector<2x32xi1>, vector<2x32xf32>
      %52 = arith.index_cast %arg9 : i32 to index
      %c0_25 = arith.constant 0 : index
      %c0_26 = arith.constant 0 : index
      %53 = vector.load %arg7[%52, %c0_25, %c0_26] : memref<5x2x32xf32, #tpu.memory_space<vmem>>, vector<1x2x32xf32>
      %54 = vector.shape_cast %53 : vector<1x2x32xf32> to vector<2x32xf32>
      %55 = vector.shape_cast %51 : vector<2x32xf32> to vector<1x2x32xf32>
      tpu.vector_store %arg7[%52, %c0_25, %c0_26], %55 {strides = array<i32>} : memref<5x2x32xf32, #tpu.memory_space<vmem>>, vector<1x2x32xf32>,
      %56 = vector.shape_cast %47 : vector<2x1xi1> to vector<2x1xi1>
      %57 = vector.broadcast %56 : vector<2x1xi1> to vector<2x32xi1>
      %58 = arith.select %57, %45, %arg10 : vector<2x32xi1>, vector<2x32xf32>
      %59 = vector.shape_cast %47 : vector<2x1xi1> to vector<2x1xi1>
      %60 = vector.broadcast %59 : vector<2x1xi1> to vector<2x32xi1>
      %61 = arith.select %60, %43, %arg11 : vector<2x32xi1>, vector<2x32xf32>
      scf.yield %58, %61 : vector<2x32xf32>, vector<2x32xf32>
    }
    %c5_i32_17 = arith.constant 5 : i32
    return
  }
}

module attributes {stable_mosaic.version = 11 : i64} {
  func.func @_lstm_layer_kernel(%arg0: memref<5x2x32xbf16, #tpu.memory_space<vmem>>, %arg1: memref<2x1xi32, #tpu.memory_space<vmem>>, %arg2: memref<2x32xf32, #tpu.memory_space<vmem>>, %arg3: memref<2x32xf32, #tpu.memory_space<vmem>>, %arg4: memref<32x128xbf16, #tpu.memory_space<vmem>>, %arg5: memref<32x128xbf16, #tpu.memory_space<vmem>>, %arg6: memref<1x128xf32, #tpu.memory_space<vmem>>, %arg7: memref<5x2x32xf32, #tpu.memory_space<vmem>>, %arg8: memref<5x2x128xf32, #tpu.memory_space<vmem>>) attributes {dimension_semantics = [], scalar_prefetch = 0 : i64, scratch_operands = 1 : i64, tpu.core_type = #tpu.core_type<tc>} {
    %c0 = arith.constant 0 : index
    %c0_0 = arith.constant 0 : index
    %c0_1 = arith.constant 0 : index
    %0 = vector.load %arg0[%c0, %c0_0, %c0_1] : memref<5x2x32xbf16, #tpu.memory_space<vmem>>, vector<5x2x32xbf16>
    %1 = vector.shape_cast %0 : vector<5x2x32xbf16> to vector<10x32xbf16>
    %c0_2 = arith.constant 0 : index
    %c0_3 = arith.constant 0 : index
    %2 = vector.load %arg4[%c0_2, %c0_3] : memref<32x128xbf16, #tpu.memory_space<vmem>>, vector<32x128xbf16>
    %cst = arith.constant dense<0.000000e+00> : vector<10x128xf32>
    %3 = tpu.matmul %1, %2, %cst {dimension_numbers = #tpu.dot_dimension_numbers<[1], [0], [0], [1], [0, 0, 1, 1], [], []>} : vector<10x32xbf16>, vector<32x128xbf16>, vector<10x128xf32> -> vector<10x128xf32>
    %c0_4 = arith.constant 0 : index
    %c0_5 = arith.constant 0 : index
    %4 = vector.load %arg6[%c0_4, %c0_5] : memref<1x128xf32, #tpu.memory_space<vmem>>, vector<1x128xf32>
    %5 = vector.broadcast %4 : vector<1x128xf32> to vector<10x128xf32>
    %6 = arith.addf %3, %5 : vector<10x128xf32>
    %7 = vector.shape_cast %6 : vector<10x128xf32> to vector<5x2x128xf32>
    %c0_6 = arith.constant 0 : index
    %c0_7 = arith.constant 0 : index
    %c0_8 = arith.constant 0 : index
    %8 = vector.load %arg8[%c0_6, %c0_7, %c0_8] : memref<5x2x128xf32, #tpu.memory_space<vmem>>, vector<5x2x128xf32>
    tpu.vector_store %arg8[%c0_6, %c0_7, %c0_8], %7 {strides = array<i32>} : memref<5x2x128xf32, #tpu.memory_space<vmem>>, vector<5x2x128xf32>,
    %c0_9 = arith.constant 0 : index
    %c0_10 = arith.constant 0 : index
    %9 = vector.load %arg5[%c0_9, %c0_10] : memref<32x128xbf16, #tpu.memory_space<vmem>>, vector<32x128xbf16>
    %c0_11 = arith.constant 0 : index
    %c0_12 = arith.constant 0 : index
    %10 = vector.load %arg1[%c0_11, %c0_12] : memref<2x1xi32, #tpu.memory_space<vmem>>, vector<2x1xi32>
    %c0_13 = arith.constant 0 : index
    %c0_14 = arith.constant 0 : index
    %11 = vector.load %arg2[%c0_13, %c0_14] : memref<2x32xf32, #tpu.memory_space<vmem>>, vector<2x32xf32>
    %c0_15 = arith.constant 0 : index
    %c0_16 = arith.constant 0 : index
    %12 = vector.load %arg3[%c0_15, %c0_16] : memref<2x32xf32, #tpu.memory_space<vmem>>, vector<2x32xf32>
    %c0_i32 = arith.constant 0 : i32
    %c5_i32 = arith.constant 5 : i32
    %13 = arith.addi %c0_i32, %c5_i32 : i32
    %c1_i32 = arith.constant 1 : i32
    %14:2 = scf.for %arg9 = %c0_i32 to %13 step %c1_i32 iter_args(%arg10 = %11, %arg11 = %12) -> (vector<2x32xf32>, vector<2x32xf32>)  : i32 {
      %15 = arith.index_cast %arg9 : i32 to index
      %c0_18 = arith.constant 0 : index
      %c0_19 = arith.constant 0 : index
      %16 = vector.load %arg8[%15, %c0_18, %c0_19] : memref<5x2x128xf32, #tpu.memory_space<vmem>>, vector<1x2x128xf32>
      %17 = vector.shape_cast %16 : vector<1x2x128xf32> to vector<2x128xf32>
      %18 = arith.truncf %arg10 : vector<2x32xf32> to vector<2x32xbf16>
      %cst_20 = arith.constant dense<0.000000e+00> : vector<2x128xf32>
      %19 = tpu.matmul %18, %9, %cst_20 {dimension_numbers = #tpu.dot_dimension_numbers<[1], [0], [0], [1], [0, 0, 1, 1], [], []>} : vector<2x32xbf16>, vector<32x128xbf16>, vector<2x128xf32> -> vector<2x128xf32>
      %20 = arith.addf %17, %19 : vector<2x128xf32>
      %21 = vector.extract_strided_slice %20 {offsets = [0, 0], sizes = [2, 32], strides = [1, 1]} : vector<2x128xf32> to vector<2x32xf32>
      %22 = arith.negf %21 : vector<2x32xf32>
      %23 = math.exp %22 : vector<2x32xf32>
      %cst_21 = arith.constant 1.000000e+00 : f32
      %24 = vector.broadcast %cst_21 : f32 to vector<2x32xf32>
      %25 = arith.addf %24, %23 : vector<2x32xf32>
      %26 = arith.divf %24, %25 : vector<2x32xf32>
      %27 = vector.extract_strided_slice %20 {offsets = [0, 32], sizes = [2, 32], strides = [1, 1]} : vector<2x128xf32> to vector<2x32xf32>
      %28 = arith.negf %27 : vector<2x32xf32>
      %29 = math.exp %28 : vector<2x32xf32>
      %cst_22 = arith.constant 1.000000e+00 : f32
      %30 = vector.broadcast %cst_22 : f32 to vector<2x32xf32>
      %31 = arith.addf %30, %29 : vector<2x32xf32>
      %32 = arith.divf %30, %31 : vector<2x32xf32>
      %33 = vector.extract_strided_slice %20 {offsets = [0, 64], sizes = [2, 32], strides = [1, 1]} : vector<2x128xf32> to vector<2x32xf32>
      %34 = math.tanh %33 : vector<2x32xf32>
      %35 = vector.extract_strided_slice %20 {offsets = [0, 96], sizes = [2, 32], strides = [1, 1]} : vector<2x128xf32> to vector<2x32xf32>
      %36 = arith.negf %35 : vector<2x32xf32>
      %37 = math.exp %36 : vector<2x32xf32>
      %cst_23 = arith.constant 1.000000e+00 : f32
      %38 = vector.broadcast %cst_23 : f32 to vector<2x32xf32>
      %39 = arith.addf %38, %37 : vector<2x32xf32>
      %40 = arith.divf %38, %39 : vector<2x32xf32>
      %41 = arith.mulf %32, %arg11 : vector<2x32xf32>
      %42 = arith.mulf %26, %34 : vector<2x32xf32>
      %43 = arith.addf %41, %42 : vector<2x32xf32>
      %44 = math.tanh %43 : vector<2x32xf32>
      %45 = arith.mulf %40, %44 : vector<2x32xf32>
      %46 = vector.broadcast %arg9 : i32 to vector<2x1xi32>
      %47 = arith.cmpi slt, %46, %10 : vector<2x1xi32>
      %cst_24 = arith.constant 0.000000e+00 : f32
      %48 = vector.shape_cast %47 : vector<2x1xi1> to vector<2x1xi1>
      %49 = vector.broadcast %48 : vector<2x1xi1> to vector<2x32xi1>
      %50 = vector.broadcast %cst_24 : f32 to vector<2x32xf32>
      %51 = arith.select %49, %45, %50 : vector<2x32xi1>, vector<2x32xf32>
      %52 = arith.index_cast %arg9 : i32 to index
      %c0_25 = arith.constant 0 : index
      %c0_26 = arith.constant 0 : index
      %53 = vector.load %arg7[%52, %c0_25, %c0_26] : memref<5x2x32xf32, #tpu.memory_space<vmem>>, vector<1x2x32xf32>
      %54 = vector.shape_cast %53 : vector<1x2x32xf32> to vector<2x32xf32>
      %55 = vector.shape_cast %51 : vector<2x32xf32> to vector<1x2x32xf32>
      tpu.vector_store %arg7[%52, %c0_25, %c0_26], %55 {strides = array<i32>} : memref<5x2x32xf32, #tpu.memory_space<vmem>>, vector<1x2x32xf32>,
      %56 = vector.shape_cast %47 : vector<2x1xi1> to vector<2x1xi1>
      %57 = vector.broadcast %56 : vector<2x1xi1> to vector<2x32xi1>
      %58 = arith.select %57, %45, %arg10 : vector<2x32xi1>, vector<2x32xf32>
      %59 = vector.shape_cast %47 : vector<2x1xi1> to vector<2x1xi1>
      %60 = vector.broadcast %59 : vector<2x1xi1> to vector<2x32xi1>
      %61 = arith.select %60, %43, %arg11 : vector<2x32xi1>, vector<2x32xf32>
      scf.yield %58, %61 : vector<2x32xf32>, vector<2x32xf32>
    }
    %c5_i32_17 = arith.constant 5 : i32
    return
  }
}

module attributes {stable_mosaic.version = 11 : i64} {
  func.func @_score_proj_kernel(%arg0: memref<2x8x32xbf16, #tpu.memory_space<vmem>>, %arg1: memref<5x2x32xbf16, #tpu.memory_space<vmem>>, %arg2: memref<32x32xbf16, #tpu.memory_space<vmem>>, %arg3: memref<1x32xf32, #tpu.memory_space<vmem>>, %arg4: memref<32x32xbf16, #tpu.memory_space<vmem>>, %arg5: memref<1x32xf32, #tpu.memory_space<vmem>>, %arg6: memref<2x8x32xf32, #tpu.memory_space<vmem>>, %arg7: memref<5x2x32xf32, #tpu.memory_space<vmem>>) attributes {dimension_semantics = [], scalar_prefetch = 0 : i64, scratch_operands = 0 : i64, tpu.core_type = #tpu.core_type<tc>} {
    %c0 = arith.constant 0 : index
    %c0_0 = arith.constant 0 : index
    %c0_1 = arith.constant 0 : index
    %0 = vector.load %arg0[%c0, %c0_0, %c0_1] : memref<2x8x32xbf16, #tpu.memory_space<vmem>>, vector<2x8x32xbf16>
    %1 = vector.shape_cast %0 : vector<2x8x32xbf16> to vector<16x32xbf16>
    %c0_2 = arith.constant 0 : index
    %c0_3 = arith.constant 0 : index
    %2 = vector.load %arg2[%c0_2, %c0_3] : memref<32x32xbf16, #tpu.memory_space<vmem>>, vector<32x32xbf16>
    %cst = arith.constant dense<0.000000e+00> : vector<16x32xf32>
    %3 = tpu.matmul %1, %2, %cst {dimension_numbers = #tpu.dot_dimension_numbers<[1], [0], [0], [1], [0, 0, 1, 1], [], []>} : vector<16x32xbf16>, vector<32x32xbf16>, vector<16x32xf32> -> vector<16x32xf32>
    %c0_4 = arith.constant 0 : index
    %c0_5 = arith.constant 0 : index
    %4 = vector.load %arg3[%c0_4, %c0_5] : memref<1x32xf32, #tpu.memory_space<vmem>>, vector<1x32xf32>
    %5 = vector.broadcast %4 : vector<1x32xf32> to vector<16x32xf32>
    %6 = arith.addf %3, %5 : vector<16x32xf32>
    %7 = vector.shape_cast %6 : vector<16x32xf32> to vector<2x8x32xf32>
    %c0_6 = arith.constant 0 : index
    %c0_7 = arith.constant 0 : index
    %c0_8 = arith.constant 0 : index
    %8 = vector.load %arg6[%c0_6, %c0_7, %c0_8] : memref<2x8x32xf32, #tpu.memory_space<vmem>>, vector<2x8x32xf32>
    tpu.vector_store %arg6[%c0_6, %c0_7, %c0_8], %7 {strides = array<i32>} : memref<2x8x32xf32, #tpu.memory_space<vmem>>, vector<2x8x32xf32>,
    %c0_9 = arith.constant 0 : index
    %c0_10 = arith.constant 0 : index
    %c0_11 = arith.constant 0 : index
    %9 = vector.load %arg1[%c0_9, %c0_10, %c0_11] : memref<5x2x32xbf16, #tpu.memory_space<vmem>>, vector<5x2x32xbf16>
    %10 = vector.shape_cast %9 : vector<5x2x32xbf16> to vector<10x32xbf16>
    %c0_12 = arith.constant 0 : index
    %c0_13 = arith.constant 0 : index
    %11 = vector.load %arg4[%c0_12, %c0_13] : memref<32x32xbf16, #tpu.memory_space<vmem>>, vector<32x32xbf16>
    %cst_14 = arith.constant dense<0.000000e+00> : vector<10x32xf32>
    %12 = tpu.matmul %10, %11, %cst_14 {dimension_numbers = #tpu.dot_dimension_numbers<[1], [0], [0], [1], [0, 0, 1, 1], [], []>} : vector<10x32xbf16>, vector<32x32xbf16>, vector<10x32xf32> -> vector<10x32xf32>
    %c0_15 = arith.constant 0 : index
    %c0_16 = arith.constant 0 : index
    %13 = vector.load %arg5[%c0_15, %c0_16] : memref<1x32xf32, #tpu.memory_space<vmem>>, vector<1x32xf32>
    %14 = vector.broadcast %13 : vector<1x32xf32> to vector<10x32xf32>
    %15 = arith.addf %12, %14 : vector<10x32xf32>
    %16 = vector.shape_cast %15 : vector<10x32xf32> to vector<5x2x32xf32>
    %c0_17 = arith.constant 0 : index
    %c0_18 = arith.constant 0 : index
    %c0_19 = arith.constant 0 : index
    %17 = vector.load %arg7[%c0_17, %c0_18, %c0_19] : memref<5x2x32xf32, #tpu.memory_space<vmem>>, vector<5x2x32xf32>
    tpu.vector_store %arg7[%c0_17, %c0_18, %c0_19], %16 {strides = array<i32>} : memref<5x2x32xf32, #tpu.memory_space<vmem>>, vector<5x2x32xf32>,
    return
  }
}

module attributes {stable_mosaic.version = 11 : i64} {
  func.func @_score_kernel(%arg0: i32, %arg1: memref<2x1xi32, #tpu.memory_space<vmem>>, %arg2: memref<2x8x32xf32, #tpu.memory_space<vmem>>, %arg3: memref<1x2x32xf32, #tpu.memory_space<vmem>>, %arg4: memref<1x32xf32, #tpu.memory_space<vmem>>, %arg5: memref<1x1xf32, #tpu.memory_space<vmem>>, %arg6: memref<1x2x8xf32, #tpu.memory_space<vmem>>, %arg7: memref<1x2x8xf32, #tpu.memory_space<vmem>>) attributes {dimension_semantics = [#tpu.dimension_semantics<parallel>], iteration_bounds = array<i64: 5>, scalar_prefetch = 0 : i64, scratch_operands = 0 : i64, tpu.core_type = #tpu.core_type<tc>, window_params = [{pipeline_mode = #tpu.pipeline_mode<synchronous>, transform_indices = @transform_0, window_bounds = array<i64: 2, 1>}, {pipeline_mode = #tpu.pipeline_mode<synchronous>, transform_indices = @transform_1, window_bounds = array<i64: 2, 8, 32>}, {transform_indices = @transform_2, window_bounds = array<i64: 1, 2, 32>}, {pipeline_mode = #tpu.pipeline_mode<synchronous>, transform_indices = @transform_3, window_bounds = array<i64: 1, 32>}, {pipeline_mode = #tpu.pipeline_mode<synchronous>, transform_indices = @transform_4, window_bounds = array<i64: 1, 1>}, {transform_indices = @transform_5, window_bounds = array<i64: 1, 2, 8>}, {transform_indices = @transform_6, window_bounds = array<i64: 1, 2, 8>}]} {
    %c0 = arith.constant 0 : index
    %c0_0 = arith.constant 0 : index
    %c0_1 = arith.constant 0 : index
    %0 = vector.load %arg2[%c0, %c0_0, %c0_1] : memref<2x8x32xf32, #tpu.memory_space<vmem>>, vector<2x8x32xf32>
    %c0_2 = arith.constant 0 : index
    %c0_3 = arith.constant 0 : index
    %c0_4 = arith.constant 0 : index
    %1 = vector.load %arg3[%c0_2, %c0_3, %c0_4] : memref<1x2x32xf32, #tpu.memory_space<vmem>>, vector<1x2x32xf32>
    %2 = vector.shape_cast %1 : vector<1x2x32xf32> to vector<2x32xf32>
    %3 = vector.shape_cast %2 : vector<2x32xf32> to vector<2x1x32xf32>
    %4 = vector.broadcast %3 : vector<2x1x32xf32> to vector<2x8x32xf32>
    %5 = arith.addf %0, %4 : vector<2x8x32xf32>
    %6 = math.tanh %5 : vector<2x8x32xf32>
    %c0_5 = arith.constant 0 : index
    %c0_6 = arith.constant 0 : index
    %7 = vector.load %arg4[%c0_5, %c0_6] : memref<1x32xf32, #tpu.memory_space<vmem>>, vector<1x32xf32>
    %8 = vector.shape_cast %7 : vector<1x32xf32> to vector<1x1x32xf32>
    %9 = vector.broadcast %8 : vector<1x1x32xf32> to vector<2x8x32xf32>
    %10 = arith.mulf %6, %9 : vector<2x8x32xf32>
    %cst = arith.constant dense<0.000000e+00> : vector<2x8xf32>
    %11 = vector.multi_reduction <add>, %10, %cst [2] : vector<2x8x32xf32> to vector<2x8xf32>
    %c0_7 = arith.constant 0 : index
    %c0_8 = arith.constant 0 : index
    %12 = vector.load %arg5[%c0_7, %c0_8] : memref<1x1xf32, #tpu.memory_space<vmem>>, vector<1x1xf32>
    %13 = vector.broadcast %12 : vector<1x1xf32> to vector<2x8xf32>
    %14 = arith.addf %11, %13 : vector<2x8xf32>
    %15 = tpu.iota {dimensions = array<i32: 1>} : vector<2x8xi32>
    %c0_9 = arith.constant 0 : index
    %c0_10 = arith.constant 0 : index
    %16 = vector.load %arg1[%c0_9, %c0_10] : memref<2x1xi32, #tpu.memory_space<vmem>>, vector<2x1xi32>
    %17 = vector.broadcast %16 : vector<2x1xi32> to vector<2x8xi32>
    %18 = arith.cmpi slt, %15, %17 : vector<2x8xi32>
    %cst_11 = arith.constant -1.000000e+02 : f32
    %19 = vector.broadcast %cst_11 : f32 to vector<2x8xf32>
    %20 = arith.select %18, %14, %19 : vector<2x8xi1>, vector<2x8xf32>
    %c0_12 = arith.constant 0 : index
    %c0_13 = arith.constant 0 : index
    %c0_14 = arith.constant 0 : index
    %21 = vector.load %arg6[%c0_12, %c0_13, %c0_14] : memref<1x2x8xf32, #tpu.memory_space<vmem>>, vector<1x2x8xf32>
    %22 = vector.shape_cast %21 : vector<1x2x8xf32> to vector<2x8xf32>
    %23 = vector.shape_cast %20 : vector<2x8xf32> to vector<1x2x8xf32>
    tpu.vector_store %arg6[%c0_12, %c0_13, %c0_14], %23 {strides = array<i32>} : memref<1x2x8xf32, #tpu.memory_space<vmem>>, vector<1x2x8xf32>,
    %cst_15 = arith.constant dense<0xFF800000> : vector<8xf32>
    %24 = vector.multi_reduction <maximumf>, %20, %cst_15 [0] : vector<2x8xf32> to vector<8xf32>
    %25 = vector.shape_cast %24 : vector<8xf32> to vector<1x8xf32>
    %26 = vector.broadcast %25 : vector<1x8xf32> to vector<2x8xf32>
    %27 = arith.subf %20, %26 : vector<2x8xf32>
    %28 = math.exp %27 : vector<2x8xf32>
    %cst_16 = arith.constant dense<0.000000e+00> : vector<8xf32>
    %29 = vector.multi_reduction <add>, %28, %cst_16 [0] : vector<2x8xf32> to vector<8xf32>
    %30 = vector.shape_cast %29 : vector<8xf32> to vector<1x8xf32>
    %31 = vector.broadcast %30 : vector<1x8xf32> to vector<2x8xf32>
    %32 = arith.divf %28, %31 : vector<2x8xf32>
    %c0_17 = arith.constant 0 : index
    %c0_18 = arith.constant 0 : index
    %c0_19 = arith.constant 0 : index
    %33 = vector.load %arg7[%c0_17, %c0_18, %c0_19] : memref<1x2x8xf32, #tpu.memory_space<vmem>>, vector<1x2x8xf32>
    %34 = vector.shape_cast %33 : vector<1x2x8xf32> to vector<2x8xf32>
    %35 = vector.shape_cast %32 : vector<2x8xf32> to vector<1x2x8xf32>
    tpu.vector_store %arg7[%c0_17, %c0_18, %c0_19], %35 {strides = array<i32>} : memref<1x2x8xf32, #tpu.memory_space<vmem>>, vector<1x2x8xf32>,
    return
  }
  func.func @transform_0(%arg0: i32) -> (i32, i32) {
    %c0_i32 = arith.constant 0 : i32
    %c0_i32_0 = arith.constant 0 : i32
    %c0_i32_1 = arith.constant 0 : i32
    return %c0_i32, %c0_i32_0 : i32, i32
  }
  func.func @transform_1(%arg0: i32) -> (i32, i32, i32) {
    %c0_i32 = arith.constant 0 : i32
    %c0_i32_0 = arith.constant 0 : i32
    %c0_i32_1 = arith.constant 0 : i32
    %c0_i32_2 = arith.constant 0 : i32
    return %c0_i32, %c0_i32_0, %c0_i32_1 : i32, i32, i32
  }
  func.func @transform_2(%arg0: i32) -> (i32, i32, i32) {
    %c0_i32 = arith.constant 0 : i32
    %c0_i32_0 = arith.constant 0 : i32
    %c0_i32_1 = arith.constant 0 : i32
    return %arg0, %c0_i32, %c0_i32_0 : i32, i32, i32
  }
  func.func @transform_3(%arg0: i32) -> (i32, i32) {
    %c0_i32 = arith.constant 0 : i32
    %c0_i32_0 = arith.constant 0 : i32
    %c0_i32_1 = arith.constant 0 : i32
    return %c0_i32, %c0_i32_0 : i32, i32
  }
  func.func @transform_4(%arg0: i32) -> (i32, i32) {
    %c0_i32 = arith.constant 0 : i32
    %c0_i32_0 = arith.constant 0 : i32
    %c0_i32_1 = arith.constant 0 : i32
    return %c0_i32, %c0_i32_0 : i32, i32
  }
  func.func @transform_5(%arg0: i32) -> (i32, i32, i32) {
    %c0_i32 = arith.constant 0 : i32
    %c0_i32_0 = arith.constant 0 : i32
    %c0_i32_1 = arith.constant 0 : i32
    return %arg0, %c0_i32, %c0_i32_0 : i32, i32, i32
  }
  func.func @transform_6(%arg0: i32) -> (i32, i32, i32) {
    %c0_i32 = arith.constant 0 : i32
    %c0_i32_0 = arith.constant 0 : i32
    %c0_i32_1 = arith.constant 0 : i32
    return %arg0, %c0_i32, %c0_i32_0 : i32, i32, i32
  }
}

</mosaic_0001>

<llo_original>
// kernel: seq2sql_forward.6
$region0: #{seq2sql_forward.6}
  #allocation0 [shape = 'u32[]', space=smem, size = 0x4, offset = 0x4, fixed_abs, tag = 'smem constant byte address 0x4 - core index']
  #allocation1 [shape = 'u32[144,128]{1,0:T(1,128)}', space=vmem, size = 0x12000, scoped, tag = 'internal scratch']
  #allocation2 [shape = 'f32[8,2,128]{2,1,0:T(2,128)}', space=vmem, size = 0x2000, scoped, tag = 'scratch operand']
  %s0 = inlined_call_operand.vmem [shape: bf16[8,2,16], index: 0, kind: input, shape index: {}]
  %s1 = inlined_call_operand.vmem [shape: s32[2,1], index: 1, kind: input, shape index: {}]
  %s2 = inlined_call_operand.vmem [shape: bf16[16,128], index: 2, kind: input, shape index: {}]
  %s3 = inlined_call_operand.vmem [shape: bf16[16,64], index: 3, kind: input, shape index: {}]
  %s4 = inlined_call_operand.vmem [shape: bf16[16,64], index: 4, kind: input, shape index: {}]
  %s5 = inlined_call_operand.vmem [shape: f32[1,64], index: 5, kind: input, shape index: {}]
  %s6 = inlined_call_operand.vmem [shape: f32[1,64], index: 6, kind: input, shape index: {}]
  %s7 = inlined_call_operand.vmem [shape: f32[8,2,16], index: 7, kind: output, shape index: {0}]
  %s8 = inlined_call_operand.vmem [shape: f32[8,2,16], index: 8, kind: output, shape index: {1}]
  %s9 = inlined_call_operand.vmem [shape: f32[2,16], index: 9, kind: output, shape index: {2}]
  %s10 = inlined_call_operand.vmem [shape: f32[2,16], index: 10, kind: output, shape index: {3}]
  %s11 = inlined_call_operand.vmem [shape: f32[2,16], index: 11, kind: output, shape index: {4}]
  %s12 = inlined_call_operand.vmem [shape: f32[2,16], index: 12, kind: output, shape index: {5}]
  %13 = xla_tuple %s7, %s8, %s9, %s10, %s11, %s12
  %s14 = sld [smem:[#allocation0]]
  $region85: #{seq2sql_forward.6} parent=0
    _
  %s16 = ssub.s32 1, %s14
  %s17 = scalar_select 0, %s16, %s14
  // Predicated region
  $region2: #{seq2sql_forward.6} parent=0 // pred_check
    _
  $region3: #{seq2sql_forward.6} parent=0 // pred_check_branch
    %19 = sbr.rel (0) target = $region5
  $region4: #{seq2sql_forward.6} parent=0 // pred_region
    _
  $region5: #{seq2sql_forward.6} parent=0 // pred_fallthru
    _
  // Predicated region
  $region6: #{seq2sql_forward.6} parent=0 // pred_check
    _
  $region7: #{seq2sql_forward.6} parent=0 // pred_check_branch
    %21 = sbr.rel (0) target = $region9
  $region8: #{seq2sql_forward.6} parent=0 // pred_region
    _
  $region9: #{seq2sql_forward.6} parent=0 // pred_fallthru
    _
  // Predicated region
  $region10: #{seq2sql_forward.6} parent=0 // pred_check
    _
  $region11: #{seq2sql_forward.6} parent=0 // pred_check_branch
    %23 = sbr.rel (0) target = $region13
  $region12: #{seq2sql_forward.6} parent=0 // pred_region
    _
  $region13: #{seq2sql_forward.6} parent=0 // pred_fallthru
    _
  // Predicated region
  $region14: #{seq2sql_forward.6} parent=0 // pred_check
    _
  $region15: #{seq2sql_forward.6} parent=0 // pred_check_branch
    %25 = sbr.rel (0) target = $region17
  $region16: #{seq2sql_forward.6} parent=0 // pred_region
    _
  $region17: #{seq2sql_forward.6} parent=0 // pred_fallthru
    _
  // Predicated region
  $region18: #{seq2sql_forward.6} parent=0 // pred_check
    _
  $region19: #{seq2sql_forward.6} parent=0 // pred_check_branch
    %27 = sbr.rel (0) target = $region21
  $region20: #{seq2sql_forward.6} parent=0 // pred_region
    _
  $region21: #{seq2sql_forward.6} parent=0 // pred_fallthru
    _
  // Predicated region
  $region22: #{seq2sql_forward.6} parent=0 // pred_check
    _
  $region23: #{seq2sql_forward.6} parent=0 // pred_check_branch
    %29 = sbr.rel (0) target = $region25
  $region24: #{seq2sql_forward.6} parent=0 // pred_region
    _
  $region25: #{seq2sql_forward.6} parent=0 // pred_fallthru
    _
  // Predicated region
  $region26: #{seq2sql_forward.6} parent=0 // pred_check
    _
  $region27: #{seq2sql_forward.6} parent=0 // pred_check_branch
    %31 = sbr.rel (0) target = $region29
  $region28: #{seq2sql_forward.6} parent=0 // pred_region
    _
  $region29: #{seq2sql_forward.6} parent=0 // pred_fallthru
    _
  %v33 = vld [vmem:[%s0] sm:$0x1]
  %v34 = vld [vmem:[%s0 + $0x1] sm:$0x1]
  %v35 = vld [vmem:[%s0 + $0x2] sm:$0x1]
  %v36 = vld [vmem:[%s0 + $0x3] sm:$0x1]
  %v37 = vld [vmem:[%s0 + $0x4] sm:$0x1]
  %v38 = vld [vmem:[%s0 + $0x5] sm:$0x1]
  %v39 = vld [vmem:[%s0 + $0x6] sm:$0x1]
  %v40 = vld [vmem:[%s0 + $0x7] sm:$0x1]
  %v41 = vld [vmem:[%s2] sm:$0xf]
  %v42 = vld [vmem:[%s2 + $0x4] sm:$0xf]
  %v51 = vcombine.low %v33, %v34
  %v52 = vcombine.low %v35, %v36
  %v53 = vcombine.low %v37, %v38
  %v54 = vcombine.low %v39, %v40
  %v56 = vunpack.c.l.s4 1966171168
  %v57 = vunpack.c.0.s8 %v56
  %v58 = vlaneseq
  %v59 = vshrl.u32 %v58, 7
  %v60 = vsub.s32 %v57, %v59
  %v61 = vrot.slane %v51, %v60
  %v63 = vunpack.c.l.s4 1966171168
  %v64 = vunpack.c.0.s8 %v63
  %v65 = vlaneseq
  %v66 = vshrl.u32 %v65, 7
  %v67 = vsub.s32 %v64, %v66
  %v68 = vrot.slane %v52, %v67
  %v70 = vunpack.c.l.s4 1966171168
  %v71 = vunpack.c.0.s8 %v70
  %v72 = vlaneseq
  %v73 = vshrl.u32 %v72, 7
  %v74 = vsub.s32 %v71, %v73
  %v75 = vrot.slane %v53, %v74
  %v77 = vunpack.c.l.s4 1966171168
  %v78 = vunpack.c.0.s8 %v77
  %v79 = vlaneseq
  %v80 = vshrl.u32 %v79, 7
  %v81 = vsub.s32 %v78, %v80
  %v82 = vrot.slane %v54, %v81
  %v83 = vcombine.low %v61, %v68
  %v84 = vcombine.low %v75, %v82
  %v86 = vunpack.c.l.s4 1966171168
  %v87 = vunpack.c.0.s8 %v86
  %v88 = vlaneseq
  %v89 = vshrl.u32 %v88, 7
  %v90 = vsub.s32 %v87, %v89
  %v91 = vrot.slane %v83, %v90
  %v93 = vunpack.c.l.s4 1966171168
  %v94 = vunpack.c.0.s8 %v93
  %v95 = vlaneseq
  %v96 = vshrl.u32 %v95, 7
  %v97 = vsub.s32 %v94, %v96
  %v98 = vrot.slane %v84, %v97
  %v99 = vcombine.low %v91, %v98
  %v102 = vunpack.c.l.b16 %v41
  %v103 = vunpack.c.l.b16 %v42
  %v104 = vpack.c.b16 %v103, %v102
  %vm106 = vcmask 130048
  %v108 = vsel %vm106, %v99, 0
  %110 = vmatprep.subr.bf16.mxu0 0
  %111 = vmatpush1.bf16.msra.mxu0 %v104
  %112 = vmatprep.subr.bf16.mxu0 0
  %113 = vmatpush1.bf16.msra.mxu0 0
  %114 = vmatprep.subr.bf16.mxu0 0
  %115 = vmatpush1.bf16.msra.mxu0 0
  %116 = vmatprep.subr.bf16.mxu0 0
  %117 = vmatpush1.bf16.msra.mxu0 0
  %118 = vmatprep.subr.bf16.mxu0 0
  %119 = vmatpush1.bf16.msra.mxu0 0
  %120 = vmatprep.subr.bf16.mxu0 0
  %121 = vmatpush1.bf16.msra.mxu0 0
  %122 = vmatprep.subr.bf16.mxu0 0
  %123 = vmatpush1.bf16.msra.mxu0 0
  %124 = vmatprep.subr.bf16.mxu0 0
  %125 = vmatpush1.bf16.msra.mxu0 0
  %126 = vmatprep.subr.bf16.mxu0 0
  %127 = vmatpush1.bf16.msra.mxu0 0
  %128 = vmatprep.subr.bf16.mxu0 0
  %129 = vmatpush1.bf16.msra.mxu0 0
  %130 = vmatprep.subr.bf16.mxu0 0
  %131 = vmatpush1.bf16.msra.mxu0 0
  %132 = vmatprep.subr.bf16.mxu0 0
  %133 = vmatpush1.bf16.msra.mxu0 0
  %134 = vmatprep.subr.bf16.mxu0 0
  %135 = vmatpush1.bf16.msra.mxu0 0
  %136 = vmatprep.subr.bf16.mxu0 0
  %137 = vmatpush1.bf16.msra.mxu0 0
  %138 = vmatprep.subr.bf16.mxu0 0
  %139 = vmatpush1.bf16.msra.mxu0 0
  %140 = vmatprep.subr.bf16.mxu0 0
  %141 = vmatpush1.bf16.msra.mxu0 0
  %142 = vmatprep.mubr.bf16.mxu0 0
  %143 = vmatmul.mubr.bf16.gmra.mrb[0].mxu0 %v108
  %v144 = vpop.f32.mrb[0].mxu0
  %v145 = vadd.f32 0.0, %v144
  %v146 = vpop.f32.mrb[0].mxu0
  %v147 = vpop.f32.mrb[0].mxu0
  %v148 = vadd.f32 0.0, %v147
  %v149 = vpop.f32.mrb[0].mxu0
  %150 = vdwg.mxu0
  %v153 = vcombine.high %v145, %v145
  %v155 = vunpack.c.l.s4 1983009808
  %v156 = vunpack.c.0.s8 %v155
  %v157 = vlaneseq
  %v158 = vshrl.u32 %v157, 7
  %v159 = vsub.s32 %v156, %v158
  %v160 = vrot.slane %v145, %v159
  %v162 = vunpack.c.l.s4 1983009808
  %v163 = vunpack.c.0.s8 %v162
  %v164 = vlaneseq
  %v165 = vshrl.u32 %v164, 7
  %v166 = vsub.s32 %v163, %v165
  %v167 = vrot.slane %v153, %v166
  %v168 = vcombine.high %v160, %v160
  %v169 = vcombine.high %v167, %v167
  %v170 = vcombine.high %v148, %v148
  %v172 = vunpack.c.l.s4 1983009808
  %v173 = vunpack.c.0.s8 %v172
  %v174 = vlaneseq
  %v175 = vshrl.u32 %v174, 7
  %v176 = vsub.s32 %v173, %v175
  %v177 = vrot.slane %v148, %v176
  %v179 = vunpack.c.l.s4 1983009808
  %v180 = vunpack.c.0.s8 %v179
  %v181 = vlaneseq
  %v182 = vshrl.u32 %v181, 7
  %v183 = vsub.s32 %v180, %v182
  %v184 = vrot.slane %v170, %v183
  %v185 = vcombine.high %v177, %v177
  %v186 = vcombine.high %v184, %v184
  %195 = vst [vmem:[#allocation2] sm:$0x3] %v160
  %196 = vst [vmem:[#allocation2 + $0x2] sm:$0x3] %v168
  %197 = vst [vmem:[#allocation2 + $0x4] sm:$0x3] %v167
  %198 = vst [vmem:[#allocation2 + $0x6] sm:$0x3] %v169
  %199 = vst [vmem:[#allocation2 + $0x8] sm:$0x3] %v177
  %200 = vst [vmem:[#allocation2 + $0xa] sm:$0x3] %v185
  %201 = vst [vmem:[#allocation2 + $0xc] sm:$0x3] %v184
  %202 = vst [vmem:[#allocation2 + $0xe] sm:$0x3] %v186
  %v203 = vld [vmem:[%s3] sm:$0xf]
  %v204 = vld [vmem:[%s3 + $0x4] sm:$0xf]
  %v205 = vld [vmem:[%s4] sm:$0xf]
  %v206 = vld [vmem:[%s4 + $0x4] sm:$0xf]
  %v207 = vld [vmem:[%s5] sm:$0x1]
  %v208 = vld [vmem:[%s6] sm:$0x1]
  %v209 = vld [vmem:[%s1] sm:$0x3]
  loop: start=0, step=1, limit=8
  $region30: #{seq2sql_forward.6} parent=0 // loop_pre_header
    _
  $region31: #{seq2sql_forward.6} parent=0 // loop_header
    %s211 = sphi 0, %s215
    %p212 = scmp.ge.s32.totalorder %s211, 8
    %v216 = vphi 0.0, %v324
    %v217 = vphi 0.0, %v325
    %v218 = vphi 0.0, %v434
    %v219 = vphi 0.0, %v435
  $region32: #{seq2sql_forward.6} parent=0 // loop_header_branch
    %214 = sbr.rel (%p212) target = $region36
  $region33: #{seq2sql_forward.6} parent=0 // loop_body
    %s220 = ssub.s32 7, %s211
    %s221 = smul.u32 %s211, 2
    %s222 = scalar_lea.vmem [#allocation2], %s221
    %v223 = vld [vmem:[%s222] sm:$0x3]
    %v225 = vlaneseq
    %v226 = vshrl.u32 %v225, 7
    %v227 = vsub.s32 0, %v226
    %v228 = vrot.slane %v207, %v227
    %v230 = vadd.f32 %v223, %v228
    %v231 = vpack.c.bf16 %v216, %v216
    %233 = vrot.lane.b32.xlu0 %v231, 80
    %v234 = vpop.permute.xlu0 %233
    %v237 = vunpack.c.l.b16 %v203
    %v238 = vunpack.c.l.b16 %v204
    %v239 = vpack.c.b16 %v238, %v237
    %v242 = vsel %vm106, %v234, 0
    %244 = vmatprep.subr.bf16.mxu0 0
    %245 = vmatpush1.bf16.msra.mxu0 %v239
    %246 = vmatprep.subr.bf16.mxu0 0
    %247 = vmatpush1.bf16.msra.mxu0 0
    %248 = vmatprep.subr.bf16.mxu0 0
    %249 = vmatpush1.bf16.msra.mxu0 0
    %250 = vmatprep.subr.bf16.mxu0 0
    %251 = vmatpush1.bf16.msra.mxu0 0
    %252 = vmatprep.subr.bf16.mxu0 0
    %253 = vmatpush1.bf16.msra.mxu0 0
    %254 = vmatprep.subr.bf16.mxu0 0
    %255 = vmatpush1.bf16.msra.mxu0 0
    %256 = vmatprep.subr.bf16.mxu0 0
    %257 = vmatpush1.bf16.msra.mxu0 0
    %258 = vmatprep.subr.bf16.mxu0 0
    %259 = vmatpush1.bf16.msra.mxu0 0
    %260 = vmatprep.subr.bf16.mxu0 0
    %261 = vmatpush1.bf16.msra.mxu0 0
    %262 = vmatprep.subr.bf16.mxu0 0
    %263 = vmatpush1.bf16.msra.mxu0 0
    %264 = vmatprep.subr.bf16.mxu0 0
    %265 = vmatpush1.bf16.msra.mxu0 0
    %266 = vmatprep.subr.bf16.mxu0 0
    %267 = vmatpush1.bf16.msra.mxu0 0
    %268 = vmatprep.subr.bf16.mxu0 0
    %269 = vmatpush1.bf16.msra.mxu0 0
    %270 = vmatprep.subr.bf16.mxu0 0
    %271 = vmatpush1.bf16.msra.mxu0 0
    %272 = vmatprep.subr.bf16.mxu0 0
    %273 = vmatpush1.bf16.msra.mxu0 0
    %274 = vmatprep.subr.bf16.mxu0 0
    %275 = vmatpush1.bf16.msra.mxu0 0
    %276 = vmatprep.mubr.bf16.mxu0 0
    %277 = vmatmul.mubr.bf16.gmra.mrb[0].mxu0 %v242
    %v278 = vpop.f32.mrb[0].mxu0
    %v279 = vadd.f32 0.0, %v278
    %v280 = vpop.f32.mrb[0].mxu0
    %v281 = vpop.f32.mrb[0].mxu0
    %v282 = vpop.f32.mrb[0].mxu0
    %283 = vdwg.mxu0
    %v284 = vadd.f32 %v230, %v279
    %v285 = vxor.u32 %v284, 2147483648
    %v286 = vmul.f32 %v285, 1.442695
    %v287 = vpow.pop %v286
    %v288 = vadd.f32 %v287, 1.0
    %v289 = vrcp.pop %v288
    %v290 = vmul.f32 1.0, %v289
    %v291 = vtanh.pop %v284
    %v292 = vmul.f32 %v290, %v217
    %294 = vrot.lane.b32.xlu0 %v291, 96
    %v295 = vpop.permute.xlu0 %294
    %v297 = vmul.f32 %v290, %v295
    %299 = vrot.lane.b32.xlu0 %v297, 16
    %v300 = vpop.permute.xlu0 %299
    %v302 = vadd.f32 %v292, %v300
    %v303 = vtanh.pop %v302
    %305 = vrot.lane.b32.xlu0 %v303, 32
    %v306 = vpop.permute.xlu0 %305
    %v308 = vmul.f32 %v290, %v306
    %v309 = vstv %s211
    %vm310 = vcmp.lt.s32.totalorder %v309, %v209
    %v311 = vsel %vm310, 1, 0
    %312 = vset.pattern.permute.xlu0 0
    %313 = vperm.xlu0 %312, %v311
    %v314 = vpop.permute.xlu0 %313
    %vm315 = vcmp.eq.s32.totalorder %v314, 1
    %v316 = vsel %vm315, %v308, 0.0
    %318 = vrot.lane.b32.xlu0 %v316, 80
    %v319 = vpop.permute.xlu0 %318
    %s321 = scalar_lea.vmem %s7, %s221
    %vm322 = vcmask 123904
    %323 = vst.msk [vmem:[%s321] sm:$0x3] %vm322, %v319
    %v324 = vsel %vm315, %v308, %v216
    %v325 = vsel %vm315, %v302, %v217
    %s326 = smul.u32 %s220, 2
    %s327 = scalar_lea.vmem [#allocation2], %s326
    %v328 = vld [vmem:[%s327] sm:$0x3]
    %v330 = vlaneseq
    %v331 = vshrl.u32 %v330, 7
    %v332 = vsub.s32 0, %v331
    %v333 = vrot.slane %v208, %v332
    %334 = vrot.lane.b32.xlu0 %v333, 64
    %v335 = vpop.permute.xlu0 %334
    %v337 = vadd.f32 %v328, %v335
    %v338 = vpack.c.bf16 %v218, %v218
    %340 = vrot.lane.b32.xlu0 %v338, 16
    %v341 = vpop.permute.xlu0 %340
    %v344 = vunpack.c.l.b16 %v205
    %v345 = vunpack.c.l.b16 %v206
    %v346 = vpack.c.b16 %v345, %v344
    %v349 = vsel %vm106, %v341, 0
    %351 = vmatprep.subr.bf16.mxu0 0
    %352 = vmatpush1.bf16.msra.mxu0 %v346
    %353 = vmatprep.subr.bf16.mxu0 0
    %354 = vmatpush1.bf16.msra.mxu0 0
    %355 = vmatprep.subr.bf16.mxu0 0
    %356 = vmatpush1.bf16.msra.mxu0 0
    %357 = vmatprep.subr.bf16.mxu0 0
    %358 = vmatpush1.bf16.msra.mxu0 0
    %359 = vmatprep.subr.bf16.mxu0 0
    %360 = vmatpush1.bf16.msra.mxu0 0
    %361 = vmatprep.subr.bf16.mxu0 0
    %362 = vmatpush1.bf16.msra.mxu0 0
    %363 = vmatprep.subr.bf16.mxu0 0
    %364 = vmatpush1.bf16.msra.mxu0 0
    %365 = vmatprep.subr.bf16.mxu0 0
    %366 = vmatpush1.bf16.msra.mxu0 0
    %367 = vmatprep.subr.bf16.mxu0 0
    %368 = vmatpush1.bf16.msra.mxu0 0
    %369 = vmatprep.subr.bf16.mxu0 0
    %370 = vmatpush1.bf16.msra.mxu0 0
    %371 = vmatprep.subr.bf16.mxu0 0
    %372 = vmatpush1.bf16.msra.mxu0 0
    %373 = vmatprep.subr.bf16.mxu0 0
    %374 = vmatpush1.bf16.msra.mxu0 0
    %375 = vmatprep.subr.bf16.mxu0 0
    %376 = vmatpush1.bf16.msra.mxu0 0
    %377 = vmatprep.subr.bf16.mxu0 0
    %378 = vmatpush1.bf16.msra.mxu0 0
    %379 = vmatprep.subr.bf16.mxu0 0
    %380 = vmatpush1.bf16.msra.mxu0 0
    %381 = vmatprep.subr.bf16.mxu0 0
    %382 = vmatpush1.bf16.msra.mxu0 0
    %383 = vmatprep.mubr.bf16.mxu0 0
    %384 = vmatmul.mubr.bf16.gmra.mrb[0].mxu0 %v349
    %v385 = vpop.f32.mrb[0].mxu0
    %v386 = vadd.f32 0.0, %v385
    %v387 = vpop.f32.mrb[0].mxu0
    %v388 = vpop.f32.mrb[0].mxu0
    %v389 = vpop.f32.mrb[0].mxu0
    %390 = vdwg.mxu0
    %392 = vrot.lane.b32.xlu0 %v386, 64
    %v393 = vpop.permute.xlu0 %392
    %v395 = vadd.f32 %v337, %v393
    %v396 = vxor.u32 %v395, 2147483648
    %v397 = vmul.f32 %v396, 1.442695
    %v398 = vpow.pop %v397
    %v399 = vadd.f32 %v398, 1.0
    %v400 = vrcp.pop %v399
    %v401 = vmul.f32 1.0, %v400
    %v402 = vtanh.pop %v395
    %v403 = vmul.f32 %v401, %v219
    %405 = vrot.lane.b32.xlu0 %v402, 96
    %v406 = vpop.permute.xlu0 %405
    %v408 = vmul.f32 %v401, %v406
    %410 = vrot.lane.b32.xlu0 %v408, 16
    %v411 = vpop.permute.xlu0 %410
    %v413 = vadd.f32 %v403, %v411
    %v414 = vtanh.pop %v413
    %416 = vrot.lane.b32.xlu0 %v414, 32
    %v417 = vpop.permute.xlu0 %416
    %v419 = vmul.f32 %v401, %v417
    %v420 = vstv %s220
    %vm421 = vcmp.lt.s32.totalorder %v420, %v209
    %v422 = vsel %vm421, 1, 0
    %423 = vset.pattern.permute.xlu0 0
    %424 = vperm.xlu0 %423, %v422
    %v425 = vpop.permute.xlu0 %424
    %vm426 = vcmp.eq.s32.totalorder %v425, 1
    %v427 = vsel %vm426, %v419, 0.0
    %429 = vrot.lane.b32.xlu0 %v427, 16
    %v430 = vpop.permute.xlu0 %429
    %s432 = scalar_lea.vmem %s8, %s326
    %433 = vst.msk [vmem:[%s432] sm:$0x3] %vm322, %v430
    %v434 = vsel %vm426, %v419, %v218
    %v435 = vsel %vm426, %v413, %v219
  $region34: #{seq2sql_forward.6} parent=0 // loop_footer
    %s215 = sadd.s32 1, %s211
  $region35: #{seq2sql_forward.6} parent=0 // loop_footer_branch
    %210 = sbr.rel target = $region31
  $region36: #{seq2sql_forward.6} parent=0 // loop_exit
    _
  %437 = vrot.lane.b32.xlu0 %v216, 80
  %v438 = vpop.permute.xlu0 %437
  %vm440 = vcmask 123904
  %441 = vst.msk [vmem:[%s9] sm:$0x3] %vm440, %v438
  %443 = vrot.lane.b32.xlu0 %v217, 112
  %v444 = vpop.permute.xlu0 %443
  %446 = vst.msk [vmem:[%s10] sm:$0x3] %vm440, %v444
  %448 = vrot.lane.b32.xlu0 %v218, 16
  %v449 = vpop.permute.xlu0 %448
  %451 = vst.msk [vmem:[%s11] sm:$0x3] %vm440, %v449
  %453 = vrot.lane.b32.xlu0 %v219, 48
  %v454 = vpop.permute.xlu0 %453
  %456 = vst.msk [vmem:[%s12] sm:$0x3] %vm440, %v454
  // Predicated region
  $region37: #{seq2sql_forward.6} parent=0 // pred_check
    _
  $region38: #{seq2sql_forward.6} parent=0 // pred_check_branch
    %458 = sbr.rel (0) target = $region40
  $region39: #{seq2sql_forward.6} parent=0 // pred_region
    _
  $region40: #{seq2sql_forward.6} parent=0 // pred_fallthru
    _
  // Predicated region
  $region41: #{seq2sql_forward.6} parent=0 // pred_check
    _
  $region42: #{seq2sql_forward.6} parent=0 // pred_check_branch
    %460 = sbr.rel (0) target = $region44
  $region43: #{seq2sql_forward.6} parent=0 // pred_region
    _
  $region44: #{seq2sql_forward.6} parent=0 // pred_fallthru
    _
  // Predicated region
  $region45: #{seq2sql_forward.6} parent=0 // pred_check
    _
  $region46: #{seq2sql_forward.6} parent=0 // pred_check_branch
    %462 = sbr.rel (0) target = $region48
  $region47: #{seq2sql_forward.6} parent=0 // pred_region
    _
  $region48: #{seq2sql_forward.6} parent=0 // pred_fallthru
    _
  // Predicated region
  $region49: #{seq2sql_forward.6} parent=0 // pred_check
    _
  $region50: #{seq2sql_forward.6} parent=0 // pred_check_branch
    %464 = sbr.rel (0) target = $region52
  $region51: #{seq2sql_forward.6} parent=0 // pred_region
    _
  $region52: #{seq2sql_forward.6} parent=0 // pred_fallthru
    _
  // Predicated region
  $region53: #{seq2sql_forward.6} parent=0 // pred_check
    _
  $region54: #{seq2sql_forward.6} parent=0 // pred_check_branch
    %466 = sbr.rel (0) target = $region56
  $region55: #{seq2sql_forward.6} parent=0 // pred_region
    _
  $region56: #{seq2sql_forward.6} parent=0 // pred_fallthru
    _
  // Predicated region
  $region57: #{seq2sql_forward.6} parent=0 // pred_check
    _
  $region58: #{seq2sql_forward.6} parent=0 // pred_check_branch
    %468 = sbr.rel (0) target = $region60
  $region59: #{seq2sql_forward.6} parent=0 // pred_region
    _
  $region60: #{seq2sql_forward.6} parent=0 // pred_fallthru
    _
  // Predicated region
  $region61: #{seq2sql_forward.6} parent=0 // pred_check
    _
  $region62: #{seq2sql_forward.6} parent=0 // pred_check_branch
    %470 = sbr.rel (0) target = $region64
  $region63: #{seq2sql_forward.6} parent=0 // pred_region
    _
  $region64: #{seq2sql_forward.6} parent=0 // pred_fallthru
    _
  // Predicated region
  $region65: #{seq2sql_forward.6} parent=0 // pred_check
    _
  $region66: #{seq2sql_forward.6} parent=0 // pred_check_branch
    %472 = sbr.rel (0) target = $region68
  $region67: #{seq2sql_forward.6} parent=0 // pred_region
    _
  $region68: #{seq2sql_forward.6} parent=0 // pred_fallthru
    _
  // Predicated region
  $region69: #{seq2sql_forward.6} parent=0 // pred_check
    _
  $region70: #{seq2sql_forward.6} parent=0 // pred_check_branch
    %474 = sbr.rel (0) target = $region72
  $region71: #{seq2sql_forward.6} parent=0 // pred_region
    _
  $region72: #{seq2sql_forward.6} parent=0 // pred_fallthru
    _
  // Predicated region
  $region73: #{seq2sql_forward.6} parent=0 // pred_check
    _
  $region74: #{seq2sql_forward.6} parent=0 // pred_check_branch
    %476 = sbr.rel (0) target = $region76
  $region75: #{seq2sql_forward.6} parent=0 // pred_region
    _
  $region76: #{seq2sql_forward.6} parent=0 // pred_fallthru
    _
  // Predicated region
  $region77: #{seq2sql_forward.6} parent=0 // pred_check
    _
  $region78: #{seq2sql_forward.6} parent=0 // pred_check_branch
    %478 = sbr.rel (0) target = $region80
  $region79: #{seq2sql_forward.6} parent=0 // pred_region
    _
  $region80: #{seq2sql_forward.6} parent=0 // pred_fallthru
    _
  // Predicated region
  $region81: #{seq2sql_forward.6} parent=0 // pred_check
    _
  $region82: #{seq2sql_forward.6} parent=0 // pred_check_branch
    %480 = sbr.rel (0) target = $region84
  $region83: #{seq2sql_forward.6} parent=0 // pred_region
    _
  $region84: #{seq2sql_forward.6} parent=0 // pred_fallthru
    _

// kernel: seq2sql_forward.9
$region0: #{seq2sql_forward.9}
  #allocation0 [shape = 'u32[]', space=smem, size = 0x4, offset = 0x4, fixed_abs, tag = 'smem constant byte address 0x4 - core index']
  #allocation1 [shape = 'u32[144,128]{1,0:T(1,128)}', space=vmem, size = 0x12000, scoped, tag = 'internal scratch']
  #allocation2 [shape = 'f32[5,2,128]{2,1,0:T(2,128)}', space=vmem, size = 0x1400, scoped, tag = 'scratch operand']
  %s0 = inlined_call_operand.vmem [shape: bf16[5,2,32], index: 0, kind: input, shape index: {}]
  %s1 = inlined_call_operand.vmem [shape: s32[2,1], index: 1, kind: input, shape index: {}]
  %s2 = inlined_call_operand.vmem [shape: f32[2,32], index: 2, kind: input, shape index: {}]
  %s3 = inlined_call_operand.vmem [shape: f32[2,32], index: 3, kind: input, shape index: {}]
  %s4 = inlined_call_operand.vmem [shape: bf16[32,128], index: 4, kind: input, shape index: {}]
  %s5 = inlined_call_operand.vmem [shape: bf16[32,128], index: 5, kind: input, shape index: {}]
  %s6 = inlined_call_operand.vmem [shape: f32[1,128], index: 6, kind: input, shape index: {}]
  %s7 = inlined_call_operand.vmem [shape: f32[5,2,32], index: 7, kind: output, shape index: {}]
  %s8 = sld [smem:[#allocation0]]
  $region45: #{seq2sql_forward.9} parent=0
    _
  %s10 = ssub.s32 1, %s8
  %s11 = scalar_select 0, %s10, %s8
  // Predicated region
  $region2: #{seq2sql_forward.9} parent=0 // pred_check
    _
  $region3: #{seq2sql_forward.9} parent=0 // pred_check_branch
    %13 = sbr.rel (0) target = $region5
  $region4: #{seq2sql_forward.9} parent=0 // pred_region
    _
  $region5: #{seq2sql_forward.9} parent=0 // pred_fallthru
    _
  // Predicated region
  $region6: #{seq2sql_forward.9} parent=0 // pred_check
    _
  $region7: #{seq2sql_forward.9} parent=0 // pred_check_branch
    %15 = sbr.rel (0) target = $region9
  $region8: #{seq2sql_forward.9} parent=0 // pred_region
    _
  $region9: #{seq2sql_forward.9} parent=0 // pred_fallthru
    _
  // Predicated region
  $region10: #{seq2sql_forward.9} parent=0 // pred_check
    _
  $region11: #{seq2sql_forward.9} parent=0 // pred_check_branch
    %17 = sbr.rel (0) target = $region13
  $region12: #{seq2sql_forward.9} parent=0 // pred_region
    _
  $region13: #{seq2sql_forward.9} parent=0 // pred_fallthru
    _
  // Predicated region
  $region14: #{seq2sql_forward.9} parent=0 // pred_check
    _
  $region15: #{seq2sql_forward.9} parent=0 // pred_check_branch
    %19 = sbr.rel (0) target = $region17
  $region16: #{seq2sql_forward.9} parent=0 // pred_region
    _
  $region17: #{seq2sql_forward.9} parent=0 // pred_fallthru
    _
  // Predicated region
  $region18: #{seq2sql_forward.9} parent=0 // pred_check
    _
  $region19: #{seq2sql_forward.9} parent=0 // pred_check_branch
    %21 = sbr.rel (0) target = $region21
  $region20: #{seq2sql_forward.9} parent=0 // pred_region
    _
  $region21: #{seq2sql_forward.9} parent=0 // pred_fallthru
    _
  // Predicated region
  $region22: #{seq2sql_forward.9} parent=0 // pred_check
    _
  $region23: #{seq2sql_forward.9} parent=0 // pred_check_branch
    %23 = sbr.rel (0) target = $region25
  $region24: #{seq2sql_forward.9} parent=0 // pred_region
    _
  $region25: #{seq2sql_forward.9} parent=0 // pred_fallthru
    _
  // Predicated region
  $region26: #{seq2sql_forward.9} parent=0 // pred_check
    _
  $region27: #{seq2sql_forward.9} parent=0 // pred_check_branch
    %25 = sbr.rel (0) target = $region29
  $region28: #{seq2sql_forward.9} parent=0 // pred_region
    _
  $region29: #{seq2sql_forward.9} parent=0 // pred_fallthru
    _
  %v27 = vld [vmem:[%s0] sm:$0x1]
  %v28 = vld [vmem:[%s0 + $0x1] sm:$0x1]
  %v29 = vld [vmem:[%s0 + $0x2] sm:$0x1]
  %v30 = vld [vmem:[%s0 + $0x3] sm:$0x1]
  %v31 = vld [vmem:[%s0 + $0x4] sm:$0x1]
  %v32 = vld [vmem:[%s4] sm:$0xf]
  %v33 = vld [vmem:[%s4 + $0x4] sm:$0xf]
  %v34 = vld [vmem:[%s4 + $0x8] sm:$0xf]
  %v35 = vld [vmem:[%s4 + $0xc] sm:$0xf]
  %v36 = vld [vmem:[%s6] sm:$0x1]
  %v38 = vlaneseq
  %v39 = vshrl.u32 %v38, 7
  %v40 = vsub.s32 0, %v39
  %v41 = vrot.slane %v36, %v40
  %v48 = vcombine.low %v27, %v28
  %v49 = vcombine.low %v29, %v30
  %v51 = vunpack.c.l.s4 1966171168
  %v52 = vunpack.c.0.s8 %v51
  %v53 = vlaneseq
  %v54 = vshrl.u32 %v53, 7
  %v55 = vsub.s32 %v52, %v54
  %v56 = vrot.slane %v48, %v55
  %v58 = vunpack.c.l.s4 1966171168
  %v59 = vunpack.c.0.s8 %v58
  %v60 = vlaneseq
  %v61 = vshrl.u32 %v60, 7
  %v62 = vsub.s32 %v59, %v61
  %v63 = vrot.slane %v49, %v62
  %v65 = vunpack.c.l.s4 1966171168
  %v66 = vunpack.c.0.s8 %v65
  %v67 = vlaneseq
  %v68 = vshrl.u32 %v67, 7
  %v69 = vsub.s32 %v66, %v68
  %v70 = vrot.slane %v31, %v69
  %v71 = vcombine.low %v56, %v63
  %v73 = vunpack.c.l.s4 1966171168
  %v74 = vunpack.c.0.s8 %v73
  %v75 = vlaneseq
  %v76 = vshrl.u32 %v75, 7
  %v77 = vsub.s32 %v74, %v76
  %v78 = vrot.slane %v71, %v77
  %v80 = vunpack.c.l.s4 1966171168
  %v81 = vunpack.c.0.s8 %v80
  %v82 = vlaneseq
  %v83 = vshrl.u32 %v82, 7
  %v84 = vsub.s32 %v81, %v83
  %v85 = vrot.slane %v70, %v84
  %v86 = vcombine.low %v78, %v85
  %v91 = vunpack.c.l.b16 %v32
  %v92 = vunpack.c.l.b16 %v33
  %v93 = vunpack.c.l.b16 %v34
  %v94 = vunpack.c.l.b16 %v35
  %v95 = vpack.c.b16 %v92, %v91
  %v96 = vpack.c.b16 %v94, %v93
  %vm99 = vcmask 261120
  %v101 = vsel %vm99, %v86, 0
  %103 = vmatprep.subr.bf16.mxu0 0
  %104 = vmatpush1.bf16.msra.mxu0 %v95
  %105 = vmatprep.subr.bf16.mxu0 0
  %106 = vmatpush1.bf16.msra.mxu0 %v96
  %107 = vmatprep.subr.bf16.mxu0 0
  %108 = vmatpush1.bf16.msra.mxu0 0
  %109 = vmatprep.subr.bf16.mxu0 0
  %110 = vmatpush1.bf16.msra.mxu0 0
  %111 = vmatprep.subr.bf16.mxu0 0
  %112 = vmatpush1.bf16.msra.mxu0 0
  %113 = vmatprep.subr.bf16.mxu0 0
  %114 = vmatpush1.bf16.msra.mxu0 0
  %115 = vmatprep.subr.bf16.mxu0 0
  %116 = vmatpush1.bf16.msra.mxu0 0
  %117 = vmatprep.subr.bf16.mxu0 0
  %118 = vmatpush1.bf16.msra.mxu0 0
  %119 = vmatprep.subr.bf16.mxu0 0
  %120 = vmatpush1.bf16.msra.mxu0 0
  %121 = vmatprep.subr.bf16.mxu0 0
  %122 = vmatpush1.bf16.msra.mxu0 0
  %123 = vmatprep.subr.bf16.mxu0 0
  %124 = vmatpush1.bf16.msra.mxu0 0
  %125 = vmatprep.subr.bf16.mxu0 0
  %126 = vmatpush1.bf16.msra.mxu0 0
  %127 = vmatprep.subr.bf16.mxu0 0
  %128 = vmatpush1.bf16.msra.mxu0 0
  %129 = vmatprep.subr.bf16.mxu0 0
  %130 = vmatpush1.bf16.msra.mxu0 0
  %131 = vmatprep.subr.bf16.mxu0 0
  %132 = vmatpush1.bf16.msra.mxu0 0
  %133 = vmatprep.subr.bf16.mxu0 0
  %134 = vmatpush1.bf16.msra.mxu0 0
  %135 = vmatprep.mubr.bf16.mxu0 0
  %136 = vmatmul.mubr.bf16.gmra.mrb[0].mxu0 %v101
  %v137 = vpop.f32.mrb[0].mxu0
  %v138 = vadd.f32 %v41, %v137
  %v139 = vpop.f32.mrb[0].mxu0
  %v140 = vpop.f32.mrb[0].mxu0
  %v141 = vadd.f32 %v41, %v140
  %v142 = vpop.f32.mrb[0].mxu0
  %143 = vdwg.mxu0
  %v146 = vcombine.high %v138, %v138
  %v148 = vunpack.c.l.s4 1983009808
  %v149 = vunpack.c.0.s8 %v148
  %v150 = vlaneseq
  %v151 = vshrl.u32 %v150, 7
  %v152 = vsub.s32 %v149, %v151
  %v153 = vrot.slane %v138, %v152
  %v155 = vunpack.c.l.s4 1983009808
  %v156 = vunpack.c.0.s8 %v155
  %v157 = vlaneseq
  %v158 = vshrl.u32 %v157, 7
  %v159 = vsub.s32 %v156, %v158
  %v160 = vrot.slane %v146, %v159
  %v161 = vcombine.high %v153, %v153
  %v162 = vcombine.high %v160, %v160
  %v164 = vunpack.c.l.s4 1983009808
  %v165 = vunpack.c.0.s8 %v164
  %v166 = vlaneseq
  %v167 = vshrl.u32 %v166, 7
  %v168 = vsub.s32 %v165, %v167
  %v169 = vrot.slane %v141, %v168
  %175 = vst [vmem:[#allocation2] sm:$0x3] %v153
  %176 = vst [vmem:[#allocation2 + $0x2] sm:$0x3] %v161
  %177 = vst [vmem:[#allocation2 + $0x4] sm:$0x3] %v160
  %178 = vst [vmem:[#allocation2 + $0x6] sm:$0x3] %v162
  %179 = vst [vmem:[#allocation2 + $0x8] sm:$0x3] %v169
  %v180 = vld [vmem:[%s5] sm:$0xf]
  %v181 = vld [vmem:[%s5 + $0x4] sm:$0xf]
  %v182 = vld [vmem:[%s5 + $0x8] sm:$0xf]
  %v183 = vld [vmem:[%s5 + $0xc] sm:$0xf]
  %v184 = vld [vmem:[%s1] sm:$0x3]
  %v185 = vld [vmem:[%s2] sm:$0x3]
  %v186 = vld [vmem:[%s3] sm:$0x3]
  loop: start=0, step=1, limit=5
  $region30: #{seq2sql_forward.9} parent=0 // loop_pre_header
    _
  $region31: #{seq2sql_forward.9} parent=0 // loop_header
    %s188 = sphi 0, %s192
    %p189 = scmp.ge.s32.totalorder %s188, 5
    %v193 = vphi %v185, %v306
    %v194 = vphi %v186, %v310
  $region32: #{seq2sql_forward.9} parent=0 // loop_header_branch
    %191 = sbr.rel (%p189) target = $region36
  $region33: #{seq2sql_forward.9} parent=0 // loop_body
    %s195 = smul.u32 %s188, 2
    %s196 = scalar_lea.vmem [#allocation2], %s195
    %v197 = vld [vmem:[%s196] sm:$0x3]
    %v198 = vpack.c.bf16 %v193, %v193
    %v203 = vunpack.c.l.b16 %v180
    %v204 = vunpack.c.l.b16 %v181
    %v205 = vunpack.c.l.b16 %v182
    %v206 = vunpack.c.l.b16 %v183
    %v207 = vpack.c.b16 %v204, %v203
    %v208 = vpack.c.b16 %v206, %v205
    %v212 = vsel %vm99, %v198, 0
    %214 = vmatprep.subr.bf16.mxu0 0
    %215 = vmatpush1.bf16.msra.mxu0 %v207
    %216 = vmatprep.subr.bf16.mxu0 0
    %217 = vmatpush1.bf16.msra.mxu0 %v208
    %218 = vmatprep.subr.bf16.mxu0 0
    %219 = vmatpush1.bf16.msra.mxu0 0
    %220 = vmatprep.subr.bf16.mxu0 0
    %221 = vmatpush1.bf16.msra.mxu0 0
    %222 = vmatprep.subr.bf16.mxu0 0
    %223 = vmatpush1.bf16.msra.mxu0 0
    %224 = vmatprep.subr.bf16.mxu0 0
    %225 = vmatpush1.bf16.msra.mxu0 0
    %226 = vmatprep.subr.bf16.mxu0 0
    %227 = vmatpush1.bf16.msra.mxu0 0
    %228 = vmatprep.subr.bf16.mxu0 0
    %229 = vmatpush1.bf16.msra.mxu0 0
    %230 = vmatprep.subr.bf16.mxu0 0
    %231 = vmatpush1.bf16.msra.mxu0 0
    %232 = vmatprep.subr.bf16.mxu0 0
    %233 = vmatpush1.bf16.msra.mxu0 0
    %234 = vmatprep.subr.bf16.mxu0 0
    %235 = vmatpush1.bf16.msra.mxu0 0
    %236 = vmatprep.subr.bf16.mxu0 0
    %237 = vmatpush1.bf16.msra.mxu0 0
    %238 = vmatprep.subr.bf16.mxu0 0
    %239 = vmatpush1.bf16.msra.mxu0 0
    %240 = vmatprep.subr.bf16.mxu0 0
    %241 = vmatpush1.bf16.msra.mxu0 0
    %242 = vmatprep.subr.bf16.mxu0 0
    %243 = vmatpush1.bf16.msra.mxu0 0
    %244 = vmatprep.subr.bf16.mxu0 0
    %245 = vmatpush1.bf16.msra.mxu0 0
    %246 = vmatprep.mubr.bf16.mxu0 0
    %247 = vmatmul.mubr.bf16.gmra.mrb[0].mxu0 %v212
    %v248 = vpop.f32.mrb[0].mxu0
    %v249 = vadd.f32 0.0, %v248
    %v250 = vpop.f32.mrb[0].mxu0
    %v251 = vpop.f32.mrb[0].mxu0
    %v252 = vpop.f32.mrb[0].mxu0
    %253 = vdwg.mxu0
    %v254 = vadd.f32 %v197, %v249
    %v255 = vxor.u32 %v254, 2147483648
    %v256 = vmul.f32 %v255, 1.442695
    %v257 = vpow.pop %v256
    %v258 = vadd.f32 %v257, 1.0
    %v259 = vrcp.pop %v258
    %v260 = vmul.f32 1.0, %v259
    %v261 = vtanh.pop %v254
    %263 = vrot.lane.b32.xlu0 %v194, 32
    %v264 = vpop.permute.xlu0 %263
    %v266 = vmul.f32 %v260, %v264
    %268 = vrot.lane.b32.xlu0 %v261, 64
    %v269 = vpop.permute.xlu0 %268
    %v271 = vmul.f32 %v260, %v269
    %273 = vrot.lane.b32.xlu0 %v271, 32
    %v274 = vpop.permute.xlu0 %273
    %v276 = vadd.f32 %v266, %v274
    %v277 = vtanh.pop %v276
    %279 = vrot.lane.b32.xlu0 %v277, 64
    %v280 = vpop.permute.xlu0 %279
    %v282 = vmul.f32 %v260, %v280
    %v283 = vstv %s188
    %vm284 = vcmp.lt.s32.totalorder %v283, %v184
    %v285 = vsel %vm284, 1, 0
    %286 = vset.pattern.permute.xlu0 0
    %287 = vperm.xlu0 %286, %v285
    %v288 = vpop.permute.xlu0 %287
    %vm289 = vcmp.eq.s32.totalorder %v288, 1
    %v290 = vsel %vm289, %v282, 0.0
    %292 = vrot.lane.b32.xlu0 %v290, 32
    %v293 = vpop.permute.xlu0 %292
    %s295 = scalar_lea.vmem %s7, %s195
    %vm296 = vcmask 254976
    %297 = vst.msk [vmem:[%s295] sm:$0x3] %vm296, %v293
    %299 = vrot.lane.b32.xlu0 %v193, 96
    %v300 = vpop.permute.xlu0 %299
    %v302 = vsel %vm289, %v282, %v300
    %v303 = vsel %vm289, %v276, %v264
    %305 = vrot.lane.b32.xlu0 %v302, 32
    %v306 = vpop.permute.xlu0 %305
    %309 = vrot.lane.b32.xlu0 %v303, 96
    %v310 = vpop.permute.xlu0 %309
  $region34: #{seq2sql_forward.9} parent=0 // loop_footer
    %s192 = sadd.s32 1, %s188
  $region35: #{seq2sql_forward.9} parent=0 // loop_footer_branch
    %187 = sbr.rel target = $region31
  $region36: #{seq2sql_forward.9} parent=0 // loop_exit
    _
  // Predicated region
  $region37: #{seq2sql_forward.9} parent=0 // pred_check
    _
  $region38: #{seq2sql_forward.9} parent=0 // pred_check_branch
    %313 = sbr.rel (0) target = $region40
  $region39: #{seq2sql_forward.9} parent=0 // pred_region
    _
  $region40: #{seq2sql_forward.9} parent=0 // pred_fallthru
    _
  // Predicated region
  $region41: #{seq2sql_forward.9} parent=0 // pred_check
    _
  $region42: #{seq2sql_forward.9} parent=0 // pred_check_branch
    %315 = sbr.rel (0) target = $region44
  $region43: #{seq2sql_forward.9} parent=0 // pred_region
    _
  $region44: #{seq2sql_forward.9} parent=0 // pred_fallthru
    _

// kernel: seq2sql_forward.8
$region0: #{seq2sql_forward.8}
  #allocation0 [shape = 'u32[]', space=smem, size = 0x4, offset = 0x4, fixed_abs, tag = 'smem constant byte address 0x4 - core index']
  #allocation1 [shape = 'u32[144,128]{1,0:T(1,128)}', space=vmem, size = 0x12000, scoped, tag = 'internal scratch']
  #allocation2 [shape = 'f32[5,2,128]{2,1,0:T(2,128)}', space=vmem, size = 0x1400, scoped, tag = 'scratch operand']
  %s0 = inlined_call_operand.vmem [shape: bf16[5,2,24], index: 0, kind: input, shape index: {}]
  %s1 = inlined_call_operand.vmem [shape: s32[2,1], index: 1, kind: input, shape index: {}]
  %s2 = inlined_call_operand.vmem [shape: f32[2,32], index: 2, kind: input, shape index: {}]
  %s3 = inlined_call_operand.vmem [shape: f32[2,32], index: 3, kind: input, shape index: {}]
  %s4 = inlined_call_operand.vmem [shape: bf16[24,128], index: 4, kind: input, shape index: {}]
  %s5 = inlined_call_operand.vmem [shape: bf16[32,128], index: 5, kind: input, shape index: {}]
  %s6 = inlined_call_operand.vmem [shape: f32[1,128], index: 6, kind: input, shape index: {}]
  %s7 = inlined_call_operand.vmem [shape: f32[5,2,32], index: 7, kind: output, shape index: {}]
  %s8 = sld [smem:[#allocation0]]
  $region45: #{seq2sql_forward.8} parent=0
    _
  %s10 = ssub.s32 1, %s8
  %s11 = scalar_select 0, %s10, %s8
  // Predicated region
  $region2: #{seq2sql_forward.8} parent=0 // pred_check
    _
  $region3: #{seq2sql_forward.8} parent=0 // pred_check_branch
    %13 = sbr.rel (0) target = $region5
  $region4: #{seq2sql_forward.8} parent=0 // pred_region
    _
  $region5: #{seq2sql_forward.8} parent=0 // pred_fallthru
    _
  // Predicated region
  $region6: #{seq2sql_forward.8} parent=0 // pred_check
    _
  $region7: #{seq2sql_forward.8} parent=0 // pred_check_branch
    %15 = sbr.rel (0) target = $region9
  $region8: #{seq2sql_forward.8} parent=0 // pred_region
    _
  $region9: #{seq2sql_forward.8} parent=0 // pred_fallthru
    _
  // Predicated region
  $region10: #{seq2sql_forward.8} parent=0 // pred_check
    _
  $region11: #{seq2sql_forward.8} parent=0 // pred_check_branch
    %17 = sbr.rel (0) target = $region13
  $region12: #{seq2sql_forward.8} parent=0 // pred_region
    _
  $region13: #{seq2sql_forward.8} parent=0 // pred_fallthru
    _
  // Predicated region
  $region14: #{seq2sql_forward.8} parent=0 // pred_check
    _
  $region15: #{seq2sql_forward.8} parent=0 // pred_check_branch
    %19 = sbr.rel (0) target = $region17
  $region16: #{seq2sql_forward.8} parent=0 // pred_region
    _
  $region17: #{seq2sql_forward.8} parent=0 // pred_fallthru
    _
  // Predicated region
  $region18: #{seq2sql_forward.8} parent=0 // pred_check
    _
  $region19: #{seq2sql_forward.8} parent=0 // pred_check_branch
    %21 = sbr.rel (0) target = $region21
  $region20: #{seq2sql_forward.8} parent=0 // pred_region
    _
  $region21: #{seq2sql_forward.8} parent=0 // pred_fallthru
    _
  // Predicated region
  $region22: #{seq2sql_forward.8} parent=0 // pred_check
    _
  $region23: #{seq2sql_forward.8} parent=0 // pred_check_branch
    %23 = sbr.rel (0) target = $region25
  $region24: #{seq2sql_forward.8} parent=0 // pred_region
    _
  $region25: #{seq2sql_forward.8} parent=0 // pred_fallthru
    _
  // Predicated region
  $region26: #{seq2sql_forward.8} parent=0 // pred_check
    _
  $region27: #{seq2sql_forward.8} parent=0 // pred_check_branch
    %25 = sbr.rel (0) target = $region29
  $region28: #{seq2sql_forward.8} parent=0 // pred_region
    _
  $region29: #{seq2sql_forward.8} parent=0 // pred_fallthru
    _
  %v27 = vld [vmem:[%s0] sm:$0x1]
  %v28 = vld [vmem:[%s0 + $0x1] sm:$0x1]
  %v29 = vld [vmem:[%s0 + $0x2] sm:$0x1]
  %v30 = vld [vmem:[%s0 + $0x3] sm:$0x1]
  %v31 = vld [vmem:[%s0 + $0x4] sm:$0x1]
  %v32 = vld [vmem:[%s4] sm:$0xf]
  %v33 = vld [vmem:[%s4 + $0x4] sm:$0xf]
  %v34 = vld [vmem:[%s4 + $0x8] sm:$0xf]
  %v35 = vld [vmem:[%s6] sm:$0x1]
  %v37 = vlaneseq
  %v38 = vshrl.u32 %v37, 7
  %v39 = vsub.s32 0, %v38
  %v40 = vrot.slane %v35, %v39
  %v47 = vcombine.low %v27, %v28
  %v48 = vcombine.low %v29, %v30
  %v50 = vunpack.c.l.s4 1966171168
  %v51 = vunpack.c.0.s8 %v50
  %v52 = vlaneseq
  %v53 = vshrl.u32 %v52, 7
  %v54 = vsub.s32 %v51, %v53
  %v55 = vrot.slane %v47, %v54
  %v57 = vunpack.c.l.s4 1966171168
  %v58 = vunpack.c.0.s8 %v57
  %v59 = vlaneseq
  %v60 = vshrl.u32 %v59, 7
  %v61 = vsub.s32 %v58, %v60
  %v62 = vrot.slane %v48, %v61
  %v64 = vunpack.c.l.s4 1966171168
  %v65 = vunpack.c.0.s8 %v64
  %v66 = vlaneseq
  %v67 = vshrl.u32 %v66, 7
  %v68 = vsub.s32 %v65, %v67
  %v69 = vrot.slane %v31, %v68
  %v70 = vcombine.low %v55, %v62
  %v72 = vunpack.c.l.s4 1966171168
  %v73 = vunpack.c.0.s8 %v72
  %v74 = vlaneseq
  %v75 = vshrl.u32 %v74, 7
  %v76 = vsub.s32 %v73, %v75
  %v77 = vrot.slane %v70, %v76
  %v79 = vunpack.c.l.s4 1966171168
  %v80 = vunpack.c.0.s8 %v79
  %v81 = vlaneseq
  %v82 = vshrl.u32 %v81, 7
  %v83 = vsub.s32 %v80, %v82
  %v84 = vrot.slane %v69, %v83
  %v85 = vcombine.low %v77, %v84
  %v89 = vunpack.c.l.b16 %v32
  %v90 = vunpack.c.l.b16 %v33
  %v91 = vunpack.c.l.b16 %v34
  %v92 = vpack.c.b16 %v90, %v89
  %v93 = vpack.c.b16 %v91, %v91
  %vm95 = vcmask 195584
  %v97 = vsel %vm95, %v85, 0
  %vm99 = vcmask 1043456
  %v101 = vsel %vm99, %v93, 0
  %103 = vmatprep.subr.bf16.mxu0 0
  %104 = vmatpush1.bf16.msra.mxu0 %v92
  %105 = vmatprep.subr.bf16.mxu0 0
  %106 = vmatpush1.bf16.msra.mxu0 %v101
  %107 = vmatprep.subr.bf16.mxu0 0
  %108 = vmatpush1.bf16.msra.mxu0 0
  %109 = vmatprep.subr.bf16.mxu0 0
  %110 = vmatpush1.bf16.msra.mxu0 0
  %111 = vmatprep.subr.bf16.mxu0 0
  %112 = vmatpush1.bf16.msra.mxu0 0
  %113 = vmatprep.subr.bf16.mxu0 0
  %114 = vmatpush1.bf16.msra.mxu0 0
  %115 = vmatprep.subr.bf16.mxu0 0
  %116 = vmatpush1.bf16.msra.mxu0 0
  %117 = vmatprep.subr.bf16.mxu0 0
  %118 = vmatpush1.bf16.msra.mxu0 0
  %119 = vmatprep.subr.bf16.mxu0 0
  %120 = vmatpush1.bf16.msra.mxu0 0
  %121 = vmatprep.subr.bf16.mxu0 0
  %122 = vmatpush1.bf16.msra.mxu0 0
  %123 = vmatprep.subr.bf16.mxu0 0
  %124 = vmatpush1.bf16.msra.mxu0 0
  %125 = vmatprep.subr.bf16.mxu0 0
  %126 = vmatpush1.bf16.msra.mxu0 0
  %127 = vmatprep.subr.bf16.mxu0 0
  %128 = vmatpush1.bf16.msra.mxu0 0
  %129 = vmatprep.subr.bf16.mxu0 0
  %130 = vmatpush1.bf16.msra.mxu0 0
  %131 = vmatprep.subr.bf16.mxu0 0
  %132 = vmatpush1.bf16.msra.mxu0 0
  %133 = vmatprep.subr.bf16.mxu0 0
  %134 = vmatpush1.bf16.msra.mxu0 0
  %135 = vmatprep.mubr.bf16.mxu0 0
  %136 = vmatmul.mubr.bf16.gmra.mrb[0].mxu0 %v97
  %v137 = vpop.f32.mrb[0].mxu0
  %v138 = vadd.f32 %v40, %v137
  %v139 = vpop.f32.mrb[0].mxu0
  %v140 = vpop.f32.mrb[0].mxu0
  %v141 = vadd.f32 %v40, %v140
  %v142 = vpop.f32.mrb[0].mxu0
  %143 = vdwg.mxu0
  %v146 = vcombine.high %v138, %v138
  %v148 = vunpack.c.l.s4 1983009808
  %v149 = vunpack.c.0.s8 %v148
  %v150 = vlaneseq
  %v151 = vshrl.u32 %v150, 7
  %v152 = vsub.s32 %v149, %v151
  %v153 = vrot.slane %v138, %v152
  %v155 = vunpack.c.l.s4 1983009808
  %v156 = vunpack.c.0.s8 %v155
  %v157 = vlaneseq
  %v158 = vshrl.u32 %v157, 7
  %v159 = vsub.s32 %v156, %v158
  %v160 = vrot.slane %v146, %v159
  %v161 = vcombine.high %v153, %v153
  %v162 = vcombine.high %v160, %v160
  %v164 = vunpack.c.l.s4 1983009808
  %v165 = vunpack.c.0.s8 %v164
  %v166 = vlaneseq
  %v167 = vshrl.u32 %v166, 7
  %v168 = vsub.s32 %v165, %v167
  %v169 = vrot.slane %v141, %v168
  %175 = vst [vmem:[#allocation2] sm:$0x3] %v153
  %176 = vst [vmem:[#allocation2 + $0x2] sm:$0x3] %v161
  %177 = vst [vmem:[#allocation2 + $0x4] sm:$0x3] %v160
  %178 = vst [vmem:[#allocation2 + $0x6] sm:$0x3] %v162
  %179 = vst [vmem:[#allocation2 + $0x8] sm:$0x3] %v169
  %v180 = vld [vmem:[%s5] sm:$0xf]
  %v181 = vld [vmem:[%s5 + $0x4] sm:$0xf]
  %v182 = vld [vmem:[%s5 + $0x8] sm:$0xf]
  %v183 = vld [vmem:[%s5 + $0xc] sm:$0xf]
  %v184 = vld [vmem:[%s1] sm:$0x3]
  %v185 = vld [vmem:[%s2] sm:$0x3]
  %v186 = vld [vmem:[%s3] sm:$0x3]
  loop: start=0, step=1, limit=5
  $region30: #{seq2sql_forward.8} parent=0 // loop_pre_header
    _
  $region31: #{seq2sql_forward.8} parent=0 // loop_header
    %s188 = sphi 0, %s192
    %p189 = scmp.ge.s32.totalorder %s188, 5
    %v193 = vphi %v185, %v307
    %v194 = vphi %v186, %v311
  $region32: #{seq2sql_forward.8} parent=0 // loop_header_branch
    %191 = sbr.rel (%p189) target = $region36
  $region33: #{seq2sql_forward.8} parent=0 // loop_body
    %s195 = smul.u32 %s188, 2
    %s196 = scalar_lea.vmem [#allocation2], %s195
    %v197 = vld [vmem:[%s196] sm:$0x3]
    %v198 = vpack.c.bf16 %v193, %v193
    %v203 = vunpack.c.l.b16 %v180
    %v204 = vunpack.c.l.b16 %v181
    %v205 = vunpack.c.l.b16 %v182
    %v206 = vunpack.c.l.b16 %v183
    %v207 = vpack.c.b16 %v204, %v203
    %v208 = vpack.c.b16 %v206, %v205
    %vm211 = vcmask 261120
    %v213 = vsel %vm211, %v198, 0
    %215 = vmatprep.subr.bf16.mxu0 0
    %216 = vmatpush1.bf16.msra.mxu0 %v207
    %217 = vmatprep.subr.bf16.mxu0 0
    %218 = vmatpush1.bf16.msra.mxu0 %v208
    %219 = vmatprep.subr.bf16.mxu0 0
    %220 = vmatpush1.bf16.msra.mxu0 0
    %221 = vmatprep.subr.bf16.mxu0 0
    %222 = vmatpush1.bf16.msra.mxu0 0
    %223 = vmatprep.subr.bf16.mxu0 0
    %224 = vmatpush1.bf16.msra.mxu0 0
    %225 = vmatprep.subr.bf16.mxu0 0
    %226 = vmatpush1.bf16.msra.mxu0 0
    %227 = vmatprep.subr.bf16.mxu0 0
    %228 = vmatpush1.bf16.msra.mxu0 0
    %229 = vmatprep.subr.bf16.mxu0 0
    %230 = vmatpush1.bf16.msra.mxu0 0
    %231 = vmatprep.subr.bf16.mxu0 0
    %232 = vmatpush1.bf16.msra.mxu0 0
    %233 = vmatprep.subr.bf16.mxu0 0
    %234 = vmatpush1.bf16.msra.mxu0 0
    %235 = vmatprep.subr.bf16.mxu0 0
    %236 = vmatpush1.bf16.msra.mxu0 0
    %237 = vmatprep.subr.bf16.mxu0 0
    %238 = vmatpush1.bf16.msra.mxu0 0
    %239 = vmatprep.subr.bf16.mxu0 0
    %240 = vmatpush1.bf16.msra.mxu0 0
    %241 = vmatprep.subr.bf16.mxu0 0
    %242 = vmatpush1.bf16.msra.mxu0 0
    %243 = vmatprep.subr.bf16.mxu0 0
    %244 = vmatpush1.bf16.msra.mxu0 0
    %245 = vmatprep.subr.bf16.mxu0 0
    %246 = vmatpush1.bf16.msra.mxu0 0
    %247 = vmatprep.mubr.bf16.mxu0 0
    %248 = vmatmul.mubr.bf16.gmra.mrb[0].mxu0 %v213
    %v249 = vpop.f32.mrb[0].mxu0
    %v250 = vadd.f32 0.0, %v249
    %v251 = vpop.f32.mrb[0].mxu0
    %v252 = vpop.f32.mrb[0].mxu0
    %v253 = vpop.f32.mrb[0].mxu0
    %254 = vdwg.mxu0
    %v255 = vadd.f32 %v197, %v250
    %v256 = vxor.u32 %v255, 2147483648
    %v257 = vmul.f32 %v256, 1.442695
    %v258 = vpow.pop %v257
    %v259 = vadd.f32 %v258, 1.0
    %v260 = vrcp.pop %v259
    %v261 = vmul.f32 1.0, %v260
    %v262 = vtanh.pop %v255
    %264 = vrot.lane.b32.xlu0 %v194, 32
    %v265 = vpop.permute.xlu0 %264
    %v267 = vmul.f32 %v261, %v265
    %269 = vrot.lane.b32.xlu0 %v262, 64
    %v270 = vpop.permute.xlu0 %269
    %v272 = vmul.f32 %v261, %v270
    %274 = vrot.lane.b32.xlu0 %v272, 32
    %v275 = vpop.permute.xlu0 %274
    %v277 = vadd.f32 %v267, %v275
    %v278 = vtanh.pop %v277
    %280 = vrot.lane.b32.xlu0 %v278, 64
    %v281 = vpop.permute.xlu0 %280
    %v283 = vmul.f32 %v261, %v281
    %v284 = vstv %s188
    %vm285 = vcmp.lt.s32.totalorder %v284, %v184
    %v286 = vsel %vm285, 1, 0
    %287 = vset.pattern.permute.xlu0 0
    %288 = vperm.xlu0 %287, %v286
    %v289 = vpop.permute.xlu0 %288
    %vm290 = vcmp.eq.s32.totalorder %v289, 1
    %v291 = vsel %vm290, %v283, 0.0
    %293 = vrot.lane.b32.xlu0 %v291, 32
    %v294 = vpop.permute.xlu0 %293
    %s296 = scalar_lea.vmem %s7, %s195
    %vm297 = vcmask 254976
    %298 = vst.msk [vmem:[%s296] sm:$0x3] %vm297, %v294
    %300 = vrot.lane.b32.xlu0 %v193, 96
    %v301 = vpop.permute.xlu0 %300
    %v303 = vsel %vm290, %v283, %v301
    %v304 = vsel %vm290, %v277, %v265
    %306 = vrot.lane.b32.xlu0 %v303, 32
    %v307 = vpop.permute.xlu0 %306
    %310 = vrot.lane.b32.xlu0 %v304, 96
    %v311 = vpop.permute.xlu0 %310
  $region34: #{seq2sql_forward.8} parent=0 // loop_footer
    %s192 = sadd.s32 1, %s188
  $region35: #{seq2sql_forward.8} parent=0 // loop_footer_branch
    %187 = sbr.rel target = $region31
  $region36: #{seq2sql_forward.8} parent=0 // loop_exit
    _
  // Predicated region
  $region37: #{seq2sql_forward.8} parent=0 // pred_check
    _
  $region38: #{seq2sql_forward.8} parent=0 // pred_check_branch
    %314 = sbr.rel (0) target = $region40
  $region39: #{seq2sql_forward.8} parent=0 // pred_region
    _
  $region40: #{seq2sql_forward.8} parent=0 // pred_fallthru
    _
  // Predicated region
  $region41: #{seq2sql_forward.8} parent=0 // pred_check
    _
  $region42: #{seq2sql_forward.8} parent=0 // pred_check_branch
    %316 = sbr.rel (0) target = $region44
  $region43: #{seq2sql_forward.8} parent=0 // pred_region
    _
  $region44: #{seq2sql_forward.8} parent=0 // pred_fallthru
    _

// kernel: seq2sql_forward.7
$region0: #{seq2sql_forward.7}
  #allocation0 [shape = 'u32[]', space=smem, size = 0x4, offset = 0x4, fixed_abs, tag = 'smem constant byte address 0x4 - core index']
  #allocation1 [shape = 'u32[144,128]{1,0:T(1,128)}', space=vmem, size = 0x12000, scoped, tag = 'internal scratch']
  #allocation2 [shape = 'f32[8,2,128]{2,1,0:T(2,128)}', space=vmem, size = 0x2000, scoped, tag = 'scratch operand']
  %s0 = inlined_call_operand.vmem [shape: bf16[8,2,32], index: 0, kind: input, shape index: {}]
  %s1 = inlined_call_operand.vmem [shape: s32[2,1], index: 1, kind: input, shape index: {}]
  %s2 = inlined_call_operand.vmem [shape: bf16[32,128], index: 2, kind: input, shape index: {}]
  %s3 = inlined_call_operand.vmem [shape: bf16[16,64], index: 3, kind: input, shape index: {}]
  %s4 = inlined_call_operand.vmem [shape: bf16[16,64], index: 4, kind: input, shape index: {}]
  %s5 = inlined_call_operand.vmem [shape: f32[1,64], index: 5, kind: input, shape index: {}]
  %s6 = inlined_call_operand.vmem [shape: f32[1,64], index: 6, kind: input, shape index: {}]
  %s7 = inlined_call_operand.vmem [shape: f32[8,2,16], index: 7, kind: output, shape index: {0}]
  %s8 = inlined_call_operand.vmem [shape: f32[8,2,16], index: 8, kind: output, shape index: {1}]
  %s9 = inlined_call_operand.hbm [shape: f32[2,16], index: 9, kind: output, shape index: {2}]
  %s10 = inlined_call_operand.hbm [shape: f32[2,16], index: 10, kind: output, shape index: {3}]
  %s11 = inlined_call_operand.hbm [shape: f32[2,16], index: 11, kind: output, shape index: {4}]
  %s12 = inlined_call_operand.hbm [shape: f32[2,16], index: 12, kind: output, shape index: {5}]
  %13 = xla_tuple %s7, %s8, %s9, %s10, %s11, %s12
  %s14 = sld [smem:[#allocation0]]
  $region85: #{seq2sql_forward.7} parent=0
    _
  %s16 = ssub.s32 1, %s14
  %s17 = scalar_select 0, %s16, %s14
  $region1: #{seq2sql_forward.7} parent=0
    #allocation3 [shape = 'u8[1024]{0}', space=vmem, size = 0x400, scoped, tag = 'output window, operand 2, single buffered']
    #allocation4 [shape = 's32[1]{0}', space=sflag, size = 0x4, scoped, tag = 'scoped memory for seq2sql_forward.7']
    #allocation5 [shape = 'u8[1024]{0}', space=vmem, size = 0x400, scoped, tag = 'output window, operand 3, single buffered']
    #allocation6 [shape = 's32[1]{0}', space=sflag, size = 0x4, scoped, tag = 'scoped memory for seq2sql_forward.7']
    #allocation7 [shape = 'u8[1024]{0}', space=vmem, size = 0x400, scoped, tag = 'output window, operand 4, single buffered']
    #allocation8 [shape = 'u8[1024]{0}', space=vmem, size = 0x400, scoped, tag = 'output window, operand 5, single buffered']
    #allocation9 [shape = 's32[1]{0}', space=sflag, size = 0x4, scoped, tag = 'scoped memory for seq2sql_forward.7']
    %18 = vsyncpa [#allocation4], 0
    %19 = vsyncpa [#allocation6], 0
    %20 = vsyncpa [#allocation9], 0
    // Predicated region
    $region2: #{seq2sql_forward.7} parent=1 // pred_check
      _
    $region3: #{seq2sql_forward.7} parent=1 // pred_check_branch
      %22 = sbr.rel (0) target = $region5
    $region4: #{seq2sql_forward.7} parent=1 // pred_region
      _
    $region5: #{seq2sql_forward.7} parent=1 // pred_fallthru
      _
    // Predicated region
    $region6: #{seq2sql_forward.7} parent=1 // pred_check
      _
    $region7: #{seq2sql_forward.7} parent=1 // pred_check_branch
      %24 = sbr.rel (0) target = $region9
    $region8: #{seq2sql_forward.7} parent=1 // pred_region
      _
    $region9: #{seq2sql_forward.7} parent=1 // pred_fallthru
      _
    // Predicated region
    $region10: #{seq2sql_forward.7} parent=1 // pred_check
      _
    $region11: #{seq2sql_forward.7} parent=1 // pred_check_branch
      %26 = sbr.rel (0) target = $region13
    $region12: #{seq2sql_forward.7} parent=1 // pred_region
      _
    $region13: #{seq2sql_forward.7} parent=1 // pred_fallthru
      _
    // Predicated region
    $region14: #{seq2sql_forward.7} parent=1 // pred_check
      _
    $region15: #{seq2sql_forward.7} parent=1 // pred_check_branch
      %28 = sbr.rel (0) target = $region17
    $region16: #{seq2sql_forward.7} parent=1 // pred_region
      _
    $region17: #{seq2sql_forward.7} parent=1 // pred_fallthru
      _
    // Predicated region
    $region18: #{seq2sql_forward.7} parent=1 // pred_check
      _
    $region19: #{seq2sql_forward.7} parent=1 // pred_check_branch
      %30 = sbr.rel (0) target = $region21
    $region20: #{seq2sql_forward.7} parent=1 // pred_region
      _
    $region21: #{seq2sql_forward.7} parent=1 // pred_fallthru
      _
    // Predicated region
    $region22: #{seq2sql_forward.7} parent=1 // pred_check
      _
    $region23: #{seq2sql_forward.7} parent=1 // pred_check_branch
      %32 = sbr.rel (0) target = $region25
    $region24: #{seq2sql_forward.7} parent=1 // pred_region
      _
    $region25: #{seq2sql_forward.7} parent=1 // pred_fallthru
      _
    // Predicated region
    $region26: #{seq2sql_forward.7} parent=1 // pred_check
      _
    $region27: #{seq2sql_forward.7} parent=1 // pred_check_branch
      %34 = sbr.rel (0) target = $region29
    $region28: #{seq2sql_forward.7} parent=1 // pred_region
      _
    $region29: #{seq2sql_forward.7} parent=1 // pred_fallthru
      _
    %v36 = vld [vmem:[%s0] sm:$0x1]
    %v37 = vld [vmem:[%s0 + $0x1] sm:$0x1]
    %v38 = vld [vmem:[%s0 + $0x2] sm:$0x1]
    %v39 = vld [vmem:[%s0 + $0x3] sm:$0x1]
    %v40 = vld [vmem:[%s0 + $0x4] sm:$0x1]
    %v41 = vld [vmem:[%s0 + $0x5] sm:$0x1]
    %v42 = vld [vmem:[%s0 + $0x6] sm:$0x1]
    %v43 = vld [vmem:[%s0 + $0x7] sm:$0x1]
    %v44 = vld [vmem:[%s2] sm:$0xf]
    %v45 = vld [vmem:[%s2 + $0x4] sm:$0xf]
    %v46 = vld [vmem:[%s2 + $0x8] sm:$0xf]
    %v47 = vld [vmem:[%s2 + $0xc] sm:$0xf]
    %v56 = vcombine.low %v36, %v37
    %v57 = vcombine.low %v38, %v39
    %v58 = vcombine.low %v40, %v41
    %v59 = vcombine.low %v42, %v43
    %v61 = vunpack.c.l.s4 1966171168
    %v62 = vunpack.c.0.s8 %v61
    %v63 = vlaneseq
    %v64 = vshrl.u32 %v63, 7
    %v65 = vsub.s32 %v62, %v64
    %v66 = vrot.slane %v56, %v65
    %v68 = vunpack.c.l.s4 1966171168
    %v69 = vunpack.c.0.s8 %v68
    %v70 = vlaneseq
    %v71 = vshrl.u32 %v70, 7
    %v72 = vsub.s32 %v69, %v71
    %v73 = vrot.slane %v57, %v72
    %v75 = vunpack.c.l.s4 1966171168
    %v76 = vunpack.c.0.s8 %v75
    %v77 = vlaneseq
    %v78 = vshrl.u32 %v77, 7
    %v79 = vsub.s32 %v76, %v78
    %v80 = vrot.slane %v58, %v79
    %v82 = vunpack.c.l.s4 1966171168
    %v83 = vunpack.c.0.s8 %v82
    %v84 = vlaneseq
    %v85 = vshrl.u32 %v84, 7
    %v86 = vsub.s32 %v83, %v85
    %v87 = vrot.slane %v59, %v86
    %v88 = vcombine.low %v66, %v73
    %v89 = vcombine.low %v80, %v87
    %v91 = vunpack.c.l.s4 1966171168
    %v92 = vunpack.c.0.s8 %v91
    %v93 = vlaneseq
    %v94 = vshrl.u32 %v93, 7
    %v95 = vsub.s32 %v92, %v94
    %v96 = vrot.slane %v88, %v95
    %v98 = vunpack.c.l.s4 1966171168
    %v99 = vunpack.c.0.s8 %v98
    %v100 = vlaneseq
    %v101 = vshrl.u32 %v100, 7
    %v102 = vsub.s32 %v99, %v101
    %v103 = vrot.slane %v89, %v102
    %v104 = vcombine.low %v96, %v103
    %v109 = vunpack.c.l.b16 %v44
    %v110 = vunpack.c.l.b16 %v45
    %v111 = vunpack.c.l.b16 %v46
    %v112 = vunpack.c.l.b16 %v47
    %v113 = vpack.c.b16 %v110, %v109
    %v114 = vpack.c.b16 %v112, %v111
    %vm117 = vcmask 261120
    %v119 = vsel %vm117, %v104, 0
    %121 = vmatprep.subr.bf16.mxu0 0
    %122 = vmatpush1.bf16.msra.mxu0 %v113
    %123 = vmatprep.subr.bf16.mxu0 0
    %124 = vmatpush1.bf16.msra.mxu0 %v114
    %125 = vmatprep.subr.bf16.mxu0 0
    %126 = vmatpush1.bf16.msra.mxu0 0
    %127 = vmatprep.subr.bf16.mxu0 0
    %128 = vmatpush1.bf16.msra.mxu0 0
    %129 = vmatprep.subr.bf16.mxu0 0
    %130 = vmatpush1.bf16.msra.mxu0 0
    %131 = vmatprep.subr.bf16.mxu0 0
    %132 = vmatpush1.bf16.msra.mxu0 0
    %133 = vmatprep.subr.bf16.mxu0 0
    %134 = vmatpush1.bf16.msra.mxu0 0
    %135 = vmatprep.subr.bf16.mxu0 0
    %136 = vmatpush1.bf16.msra.mxu0 0
    %137 = vmatprep.subr.bf16.mxu0 0
    %138 = vmatpush1.bf16.msra.mxu0 0
    %139 = vmatprep.subr.bf16.mxu0 0
    %140 = vmatpush1.bf16.msra.mxu0 0
    %141 = vmatprep.subr.bf16.mxu0 0
    %142 = vmatpush1.bf16.msra.mxu0 0
    %143 = vmatprep.subr.bf16.mxu0 0
    %144 = vmatpush1.bf16.msra.mxu0 0
    %145 = vmatprep.subr.bf16.mxu0 0
    %146 = vmatpush1.bf16.msra.mxu0 0
    %147 = vmatprep.subr.bf16.mxu0 0
    %148 = vmatpush1.bf16.msra.mxu0 0
    %149 = vmatprep.subr.bf16.mxu0 0
    %150 = vmatpush1.bf16.msra.mxu0 0
    %151 = vmatprep.subr.bf16.mxu0 0
    %152 = vmatpush1.bf16.msra.mxu0 0
    %153 = vmatprep.mubr.bf16.mxu0 0
    %154 = vmatmul.mubr.bf16.gmra.mrb[0].mxu0 %v119
    %v155 = vpop.f32.mrb[0].mxu0
    %v156 = vadd.f32 0.0, %v155
    %v157 = vpop.f32.mrb[0].mxu0
    %v158 = vpop.f32.mrb[0].mxu0
    %v159 = vadd.f32 0.0, %v158
    %v160 = vpop.f32.mrb[0].mxu0
    %161 = vdwg.mxu0
    %v164 = vcombine.high %v156, %v156
    %v166 = vunpack.c.l.s4 1983009808
    %v167 = vunpack.c.0.s8 %v166
    %v168 = vlaneseq
    %v169 = vshrl.u32 %v168, 7
    %v170 = vsub.s32 %v167, %v169
    %v171 = vrot.slane %v156, %v170
    %v173 = vunpack.c.l.s4 1983009808
    %v174 = vunpack.c.0.s8 %v173
    %v175 = vlaneseq
    %v176 = vshrl.u32 %v175, 7
    %v177 = vsub.s32 %v174, %v176
    %v178 = vrot.slane %v164, %v177
    %v179 = vcombine.high %v171, %v171
    %v180 = vcombine.high %v178, %v178
    %v181 = vcombine.high %v159, %v159
    %v183 = vunpack.c.l.s4 1983009808
    %v184 = vunpack.c.0.s8 %v183
    %v185 = vlaneseq
    %v186 = vshrl.u32 %v185, 7
    %v187 = vsub.s32 %v184, %v186
    %v188 = vrot.slane %v159, %v187
    %v190 = vunpack.c.l.s4 1983009808
    %v191 = vunpack.c.0.s8 %v190
    %v192 = vlaneseq
    %v193 = vshrl.u32 %v192, 7
    %v194 = vsub.s32 %v191, %v193
    %v195 = vrot.slane %v181, %v194
    %v196 = vcombine.high %v188, %v188
    %v197 = vcombine.high %v195, %v195
    %206 = vst [vmem:[#allocation2] sm:$0x3] %v171
    %207 = vst [vmem:[#allocation2 + $0x2] sm:$0x3] %v179
    %208 = vst [vmem:[#allocation2 + $0x4] sm:$0x3] %v178
    %209 = vst [vmem:[#allocation2 + $0x6] sm:$0x3] %v180
    %210 = vst [vmem:[#allocation2 + $0x8] sm:$0x3] %v188
    %211 = vst [vmem:[#allocation2 + $0xa] sm:$0x3] %v196
    %212 = vst [vmem:[#allocation2 + $0xc] sm:$0x3] %v195
    %213 = vst [vmem:[#allocation2 + $0xe] sm:$0x3] %v197
    %v214 = vld [vmem:[%s3] sm:$0xf]
    %v215 = vld [vmem:[%s3 + $0x4] sm:$0xf]
    %v216 = vld [vmem:[%s4] sm:$0xf]
    %v217 = vld [vmem:[%s4 + $0x4] sm:$0xf]
    %v218 = vld [vmem:[%s5] sm:$0x1]
    %v219 = vld [vmem:[%s6] sm:$0x1]
    %v220 = vld [vmem:[%s1] sm:$0x3]
    loop: start=0, step=1, limit=8
    $region30: #{seq2sql_forward.7} parent=1 // loop_pre_header
      _
    $region31: #{seq2sql_forward.7} parent=1 // loop_header
      %s222 = sphi 0, %s226
      %p223 = scmp.ge.s32.totalorder %s222, 8
      %v227 = vphi 0.0, %v336
      %v228 = vphi 0.0, %v337
      %v229 = vphi 0.0, %v446
      %v230 = vphi 0.0, %v447
    $region32: #{seq2sql_forward.7} parent=1 // loop_header_branch
      %225 = sbr.rel (%p223) target = $region36
    $region33: #{seq2sql_forward.7} parent=1 // loop_body
      %s231 = ssub.s32 7, %s222
      %s232 = smul.u32 %s222, 2
      %s233 = scalar_lea.vmem [#allocation2], %s232
      %v234 = vld [vmem:[%s233] sm:$0x3]
      %v236 = vlaneseq
      %v237 = vshrl.u32 %v236, 7
      %v238 = vsub.s32 0, %v237
      %v239 = vrot.slane %v218, %v238
      %v241 = vadd.f32 %v234, %v239
      %v242 = vpack.c.bf16 %v227, %v227
      %244 = vrot.lane.b32.xlu0 %v242, 80
      %v245 = vpop.permute.xlu0 %244
      %v248 = vunpack.c.l.b16 %v214
      %v249 = vunpack.c.l.b16 %v215
      %v250 = vpack.c.b16 %v249, %v248
      %vm252 = vcmask 130048
      %v254 = vsel %vm252, %v245, 0
      %256 = vmatprep.subr.bf16.mxu0 0
      %257 = vmatpush1.bf16.msra.mxu0 %v250
      %258 = vmatprep.subr.bf16.mxu0 0
      %259 = vmatpush1.bf16.msra.mxu0 0
      %260 = vmatprep.subr.bf16.mxu0 0
      %261 = vmatpush1.bf16.msra.mxu0 0
      %262 = vmatprep.subr.bf16.mxu0 0
      %263 = vmatpush1.bf16.msra.mxu0 0
      %264 = vmatprep.subr.bf16.mxu0 0
      %265 = vmatpush1.bf16.msra.mxu0 0
      %266 = vmatprep.subr.bf16.mxu0 0
      %267 = vmatpush1.bf16.msra.mxu0 0
      %268 = vmatprep.subr.bf16.mxu0 0
      %269 = vmatpush1.bf16.msra.mxu0 0
      %270 = vmatprep.subr.bf16.mxu0 0
      %271 = vmatpush1.bf16.msra.mxu0 0
      %272 = vmatprep.subr.bf16.mxu0 0
      %273 = vmatpush1.bf16.msra.mxu0 0
      %274 = vmatprep.subr.bf16.mxu0 0
      %275 = vmatpush1.bf16.msra.mxu0 0
      %276 = vmatprep.subr.bf16.mxu0 0
      %277 = vmatpush1.bf16.msra.mxu0 0
      %278 = vmatprep.subr.bf16.mxu0 0
      %279 = vmatpush1.bf16.msra.mxu0 0
      %280 = vmatprep.subr.bf16.mxu0 0
      %281 = vmatpush1.bf16.msra.mxu0 0
      %282 = vmatprep.subr.bf16.mxu0 0
      %283 = vmatpush1.bf16.msra.mxu0 0
      %284 = vmatprep.subr.bf16.mxu0 0
      %285 = vmatpush1.bf16.msra.mxu0 0
      %286 = vmatprep.subr.bf16.mxu0 0
      %287 = vmatpush1.bf16.msra.mxu0 0
      %288 = vmatprep.mubr.bf16.mxu0 0
      %289 = vmatmul.mubr.bf16.gmra.mrb[0].mxu0 %v254
      %v290 = vpop.f32.mrb[0].mxu0
      %v291 = vadd.f32 0.0, %v290
      %v292 = vpop.f32.mrb[0].mxu0
      %v293 = vpop.f32.mrb[0].mxu0
      %v294 = vpop.f32.mrb[0].mxu0
      %295 = vdwg.mxu0
      %v296 = vadd.f32 %v241, %v291
      %v297 = vxor.u32 %v296, 2147483648
      %v298 = vmul.f32 %v297, 1.442695
      %v299 = vpow.pop %v298
      %v300 = vadd.f32 %v299, 1.0
      %v301 = vrcp.pop %v300
      %v302 = vmul.f32 1.0, %v301
      %v303 = vtanh.pop %v296
      %v304 = vmul.f32 %v302, %v228
      %306 = vrot.lane.b32.xlu0 %v303, 96
      %v307 = vpop.permute.xlu0 %306
      %v309 = vmul.f32 %v302, %v307
      %311 = vrot.lane.b32.xlu0 %v309, 16
      %v312 = vpop.permute.xlu0 %311
      %v314 = vadd.f32 %v304, %v312
      %v315 = vtanh.pop %v314
      %317 = vrot.lane.b32.xlu0 %v315, 32
      %v318 = vpop.permute.xlu0 %317
      %v320 = vmul.f32 %v302, %v318
      %v321 = vstv %s222
      %vm322 = vcmp.lt.s32.totalorder %v321, %v220
      %v323 = vsel %vm322, 1, 0
      %324 = vset.pattern.permute.xlu0 0
      %325 = vperm.xlu0 %324, %v323
      %v326 = vpop.permute.xlu0 %325
      %vm327 = vcmp.eq.s32.totalorder %v326, 1
      %v328 = vsel %vm327, %v320, 0.0
      %330 = vrot.lane.b32.xlu0 %v328, 80
      %v331 = vpop.permute.xlu0 %330
      %s333 = scalar_lea.vmem %s7, %s232
      %vm334 = vcmask 123904
      %335 = vst.msk [vmem:[%s333] sm:$0x3] %vm334, %v331
      %v336 = vsel %vm327, %v320, %v227
      %v337 = vsel %vm327, %v314, %v228
      %s338 = smul.u32 %s231, 2
      %s339 = scalar_lea.vmem [#allocation2], %s338
      %v340 = vld [vmem:[%s339] sm:$0x3]
      %v342 = vlaneseq
      %v343 = vshrl.u32 %v342, 7
      %v344 = vsub.s32 0, %v343
      %v345 = vrot.slane %v219, %v344
      %346 = vrot.lane.b32.xlu0 %v345, 64
      %v347 = vpop.permute.xlu0 %346
      %v349 = vadd.f32 %v340, %v347
      %v350 = vpack.c.bf16 %v229, %v229
      %352 = vrot.lane.b32.xlu0 %v350, 16
      %v353 = vpop.permute.xlu0 %352
      %v356 = vunpack.c.l.b16 %v216
      %v357 = vunpack.c.l.b16 %v217
      %v358 = vpack.c.b16 %v357, %v356
      %v361 = vsel %vm252, %v353, 0
      %363 = vmatprep.subr.bf16.mxu0 0
      %364 = vmatpush1.bf16.msra.mxu0 %v358
      %365 = vmatprep.subr.bf16.mxu0 0
      %366 = vmatpush1.bf16.msra.mxu0 0
      %367 = vmatprep.subr.bf16.mxu0 0
      %368 = vmatpush1.bf16.msra.mxu0 0
      %369 = vmatprep.subr.bf16.mxu0 0
      %370 = vmatpush1.bf16.msra.mxu0 0
      %371 = vmatprep.subr.bf16.mxu0 0
      %372 = vmatpush1.bf16.msra.mxu0 0
      %373 = vmatprep.subr.bf16.mxu0 0
      %374 = vmatpush1.bf16.msra.mxu0 0
      %375 = vmatprep.subr.bf16.mxu0 0
      %376 = vmatpush1.bf16.msra.mxu0 0
      %377 = vmatprep.subr.bf16.mxu0 0
      %378 = vmatpush1.bf16.msra.mxu0 0
      %379 = vmatprep.subr.bf16.mxu0 0
      %380 = vmatpush1.bf16.msra.mxu0 0
      %381 = vmatprep.subr.bf16.mxu0 0
      %382 = vmatpush1.bf16.msra.mxu0 0
      %383 = vmatprep.subr.bf16.mxu0 0
      %384 = vmatpush1.bf16.msra.mxu0 0
      %385 = vmatprep.subr.bf16.mxu0 0
      %386 = vmatpush1.bf16.msra.mxu0 0
      %387 = vmatprep.subr.bf16.mxu0 0
      %388 = vmatpush1.bf16.msra.mxu0 0
      %389 = vmatprep.subr.bf16.mxu0 0
      %390 = vmatpush1.bf16.msra.mxu0 0
      %391 = vmatprep.subr.bf16.mxu0 0
      %392 = vmatpush1.bf16.msra.mxu0 0
      %393 = vmatprep.subr.bf16.mxu0 0
      %394 = vmatpush1.bf16.msra.mxu0 0
      %395 = vmatprep.mubr.bf16.mxu0 0
      %396 = vmatmul.mubr.bf16.gmra.mrb[0].mxu0 %v361
      %v397 = vpop.f32.mrb[0].mxu0
      %v398 = vadd.f32 0.0, %v397
      %v399 = vpop.f32.mrb[0].mxu0
      %v400 = vpop.f32.mrb[0].mxu0
      %v401 = vpop.f32.mrb[0].mxu0
      %402 = vdwg.mxu0
      %404 = vrot.lane.b32.xlu0 %v398, 64
      %v405 = vpop.permute.xlu0 %404
      %v407 = vadd.f32 %v349, %v405
      %v408 = vxor.u32 %v407, 2147483648
      %v409 = vmul.f32 %v408, 1.442695
      %v410 = vpow.pop %v409
      %v411 = vadd.f32 %v410, 1.0
      %v412 = vrcp.pop %v411
      %v413 = vmul.f32 1.0, %v412
      %v414 = vtanh.pop %v407
      %v415 = vmul.f32 %v413, %v230
      %417 = vrot.lane.b32.xlu0 %v414, 96
      %v418 = vpop.permute.xlu0 %417
      %v420 = vmul.f32 %v413, %v418
      %422 = vrot.lane.b32.xlu0 %v420, 16
      %v423 = vpop.permute.xlu0 %422
      %v425 = vadd.f32 %v415, %v423
      %v426 = vtanh.pop %v425
      %428 = vrot.lane.b32.xlu0 %v426, 32
      %v429 = vpop.permute.xlu0 %428
      %v431 = vmul.f32 %v413, %v429
      %v432 = vstv %s231
      %vm433 = vcmp.lt.s32.totalorder %v432, %v220
      %v434 = vsel %vm433, 1, 0
      %435 = vset.pattern.permute.xlu0 0
      %436 = vperm.xlu0 %435, %v434
      %v437 = vpop.permute.xlu0 %436
      %vm438 = vcmp.eq.s32.totalorder %v437, 1
      %v439 = vsel %vm438, %v431, 0.0
      %441 = vrot.lane.b32.xlu0 %v439, 16
      %v442 = vpop.permute.xlu0 %441
      %s444 = scalar_lea.vmem %s8, %s338
      %445 = vst.msk [vmem:[%s444] sm:$0x3] %vm334, %v442
      %v446 = vsel %vm438, %v431, %v229
      %v447 = vsel %vm438, %v425, %v230
    $region34: #{seq2sql_forward.7} parent=1 // loop_footer
      %s226 = sadd.s32 1, %s222
    $region35: #{seq2sql_forward.7} parent=1 // loop_footer_branch
      %221 = sbr.rel target = $region31
    $region36: #{seq2sql_forward.7} parent=1 // loop_exit
      _
    %449 = vrot.lane.b32.xlu0 %v227, 80
    %v450 = vpop.permute.xlu0 %449
    %vm452 = vcmask 123904
    %453 = vst.msk [vmem:[#allocation3] sm:$0x3] %vm452, %v450
    %455 = vrot.lane.b32.xlu0 %v228, 112
    %v456 = vpop.permute.xlu0 %455
    %458 = vst.msk [vmem:[#allocation5] sm:$0x3] %vm452, %v456
    %460 = vrot.lane.b32.xlu0 %v229, 16
    %v461 = vpop.permute.xlu0 %460
    %463 = vst.msk [vmem:[#allocation7] sm:$0x3] %vm452, %v461
    %465 = vrot.lane.b32.xlu0 %v230, 48
    %v466 = vpop.permute.xlu0 %465
    %468 = vst.msk [vmem:[#allocation8] sm:$0x3] %vm452, %v466
    // Predicated region
    $region37: #{seq2sql_forward.7} parent=1 // pred_check
      _
    $region38: #{seq2sql_forward.7} parent=1 // pred_check_branch
      %470 = sbr.rel (0) target = $region40
    $region39: #{seq2sql_forward.7} parent=1 // pred_region
      _
    $region40: #{seq2sql_forward.7} parent=1 // pred_fallthru
      _
    // Predicated region
    $region41: #{seq2sql_forward.7} parent=1 // pred_check
      _
    $region42: #{seq2sql_forward.7} parent=1 // pred_check_branch
      %472 = sbr.rel (0) target = $region44
    $region43: #{seq2sql_forward.7} parent=1 // pred_region
      _
    $region44: #{seq2sql_forward.7} parent=1 // pred_fallthru
      _
    // Predicated region
    $region45: #{seq2sql_forward.7} parent=1 // pred_check
      _
    $region46: #{seq2sql_forward.7} parent=1 // pred_check_branch
      %474 = sbr.rel (0) target = $region48
    $region47: #{seq2sql_forward.7} parent=1 // pred_region
      %s476 = ssub.s32 32, 32
      %477 = vsyncadd [#allocation4], %s476
      %s479 = sshll.u32 [#allocation3], 4
      %s480 = int_to_ptr.vmem [resolvable:$true] %s479
      %482 = dma.vmem_to_hbm [thread:$0]  %s480, 32, %s9, [#allocation4]
    $region48: #{seq2sql_forward.7} parent=1 // pred_fallthru
      _
    // Predicated region
    $region49: #{seq2sql_forward.7} parent=1 // pred_check
      _
    $region50: #{seq2sql_forward.7} parent=1 // pred_check_branch
      %484 = sbr.rel (0) target = $region52
    $region51: #{seq2sql_forward.7} parent=1 // pred_region
      %s486 = ssub.s32 32, 32
      %487 = vsyncadd [#allocation6], %s486
      %s489 = sshll.u32 [#allocation5], 4
      %s490 = int_to_ptr.vmem [resolvable:$true] %s489
      %492 = dma.vmem_to_hbm [thread:$0]  %s490, 32, %s10, [#allocation6]
    $region52: #{seq2sql_forward.7} parent=1 // pred_fallthru
      _
    // Predicated region
    $region53: #{seq2sql_forward.7} parent=1 // pred_check
      _
    $region54: #{seq2sql_forward.7} parent=1 // pred_check_branch
      %494 = sbr.rel (0) target = $region56
    $region55: #{seq2sql_forward.7} parent=1 // pred_region
      %s496 = ssub.s32 32, 32
      %497 = vsyncadd [#allocation6], %s496
      %s499 = sshll.u32 [#allocation7], 4
      %s500 = int_to_ptr.vmem [resolvable:$true] %s499
      %502 = dma.vmem_to_hbm [thread:$0]  %s500, 32, %s11, [#allocation6]
    $region56: #{seq2sql_forward.7} parent=1 // pred_fallthru
      _
    // Predicated region
    $region57: #{seq2sql_forward.7} parent=1 // pred_check
      _
    $region58: #{seq2sql_forward.7} parent=1 // pred_check_branch
      %504 = sbr.rel (0) target = $region60
    $region59: #{seq2sql_forward.7} parent=1 // pred_region
      %s506 = ssub.s32 32, 32
      %507 = vsyncadd [#allocation9], %s506
      %s509 = sshll.u32 [#allocation8], 4
      %s510 = int_to_ptr.vmem [resolvable:$true] %s509
      %512 = dma.vmem_to_hbm [thread:$0]  %s510, 32, %s12, [#allocation9]
    $region60: #{seq2sql_forward.7} parent=1 // pred_fallthru
      _
    // Predicated region
    $region61: #{seq2sql_forward.7} parent=1 // pred_check
      _
    $region62: #{seq2sql_forward.7} parent=1 // pred_check_branch
      %514 = sbr.rel (0) target = $region64
    $region63: #{seq2sql_forward.7} parent=1 // pred_region
      _
    $region64: #{seq2sql_forward.7} parent=1 // pred_fallthru
      _
    // Predicated region
    $region65: #{seq2sql_forward.7} parent=1 // pred_check
      _
    $region66: #{seq2sql_forward.7} parent=1 // pred_check_branch
      %516 = sbr.rel (0) target = $region68
    $region67: #{seq2sql_forward.7} parent=1 // pred_region
      _
    $region68: #{seq2sql_forward.7} parent=1 // pred_fallthru
      _
    // Predicated region
    $region69: #{seq2sql_forward.7} parent=1 // pred_check
      _
    $region70: #{seq2sql_forward.7} parent=1 // pred_check_branch
      %518 = sbr.rel (0) target = $region72
    $region71: #{seq2sql_forward.7} parent=1 // pred_region
      %519 = dma.done [#allocation4], 32
    $region72: #{seq2sql_forward.7} parent=1 // pred_fallthru
      _
    // Predicated region
    $region73: #{seq2sql_forward.7} parent=1 // pred_check
      _
    $region74: #{seq2sql_forward.7} parent=1 // pred_check_branch
      %521 = sbr.rel (0) target = $region76
    $region75: #{seq2sql_forward.7} parent=1 // pred_region
      %522 = dma.done [#allocation6], 32
    $region76: #{seq2sql_forward.7} parent=1 // pred_fallthru
      _
    // Predicated region
    $region77: #{seq2sql_forward.7} parent=1 // pred_check
      _
    $region78: #{seq2sql_forward.7} parent=1 // pred_check_branch
      %524 = sbr.rel (0) target = $region80
    $region79: #{seq2sql_forward.7} parent=1 // pred_region
      %525 = dma.done [#allocation6], 32
    $region80: #{seq2sql_forward.7} parent=1 // pred_fallthru
      _
    // Predicated region
    $region81: #{seq2sql_forward.7} parent=1 // pred_check
      _
    $region82: #{seq2sql_forward.7} parent=1 // pred_check_branch
      %527 = sbr.rel (0) target = $region84
    $region83: #{seq2sql_forward.7} parent=1 // pred_region
      %528 = dma.done [#allocation9], 32
    $region84: #{seq2sql_forward.7} parent=1 // pred_fallthru
      _
    %529 = vsyncpa [#allocation4], 1
    %530 = vsyncpa [#allocation6], 1
    %531 = vsyncpa [#allocation9], 1

// kernel: seq2sql_forward.10
$region0: #{seq2sql_forward.10}
  #allocation0 [shape = 'u32[]', space=smem, size = 0x4, offset = 0x4, fixed_abs, tag = 'smem constant byte address 0x4 - core index']
  #allocation1 [shape = 'u32[144,128]{1,0:T(1,128)}', space=vmem, size = 0x12000, scoped, tag = 'internal scratch']
  %s0 = inlined_call_operand.vmem [shape: bf16[2,8,32], index: 0, kind: input, shape index: {}]
  %s1 = inlined_call_operand.vmem [shape: bf16[5,2,32], index: 1, kind: input, shape index: {}]
  %s2 = inlined_call_operand.vmem [shape: bf16[32,32], index: 2, kind: input, shape index: {}]
  %s3 = inlined_call_operand.vmem [shape: f32[1,32], index: 3, kind: input, shape index: {}]
  %s4 = inlined_call_operand.vmem [shape: bf16[32,32], index: 4, kind: input, shape index: {}]
  %s5 = inlined_call_operand.vmem [shape: f32[1,32], index: 5, kind: input, shape index: {}]
  %s6 = inlined_call_operand.vmem [shape: f32[2,8,32], index: 6, kind: output, shape index: {0}]
  %s7 = inlined_call_operand.vmem [shape: f32[5,2,32], index: 7, kind: output, shape index: {1}]
  %8 = xla_tuple %s6, %s7
  %s9 = sld [smem:[#allocation0]]
  $region42: #{seq2sql_forward.10} parent=0
    _
  %s11 = ssub.s32 1, %s9
  %s12 = scalar_select 0, %s11, %s9
  // Predicated region
  $region2: #{seq2sql_forward.10} parent=0 // pred_check
    _
  $region3: #{seq2sql_forward.10} parent=0 // pred_check_branch
    %14 = sbr.rel (0) target = $region5
  $region4: #{seq2sql_forward.10} parent=0 // pred_region
    _
  $region5: #{seq2sql_forward.10} parent=0 // pred_fallthru
    _
  // Predicated region
  $region6: #{seq2sql_forward.10} parent=0 // pred_check
    _
  $region7: #{seq2sql_forward.10} parent=0 // pred_check_branch
    %16 = sbr.rel (0) target = $region9
  $region8: #{seq2sql_forward.10} parent=0 // pred_region
    _
  $region9: #{seq2sql_forward.10} parent=0 // pred_fallthru
    _
  // Predicated region
  $region10: #{seq2sql_forward.10} parent=0 // pred_check
    _
  $region11: #{seq2sql_forward.10} parent=0 // pred_check_branch
    %18 = sbr.rel (0) target = $region13
  $region12: #{seq2sql_forward.10} parent=0 // pred_region
    _
  $region13: #{seq2sql_forward.10} parent=0 // pred_fallthru
    _
  // Predicated region
  $region14: #{seq2sql_forward.10} parent=0 // pred_check
    _
  $region15: #{seq2sql_forward.10} parent=0 // pred_check_branch
    %20 = sbr.rel (0) target = $region17
  $region16: #{seq2sql_forward.10} parent=0 // pred_region
    _
  $region17: #{seq2sql_forward.10} parent=0 // pred_fallthru
    _
  // Predicated region
  $region18: #{seq2sql_forward.10} parent=0 // pred_check
    _
  $region19: #{seq2sql_forward.10} parent=0 // pred_check_branch
    %22 = sbr.rel (0) target = $region21
  $region20: #{seq2sql_forward.10} parent=0 // pred_region
    _
  $region21: #{seq2sql_forward.10} parent=0 // pred_fallthru
    _
  // Predicated region
  $region22: #{seq2sql_forward.10} parent=0 // pred_check
    _
  $region23: #{seq2sql_forward.10} parent=0 // pred_check_branch
    %24 = sbr.rel (0) target = $region25
  $region24: #{seq2sql_forward.10} parent=0 // pred_region
    _
  $region25: #{seq2sql_forward.10} parent=0 // pred_fallthru
    _
  %v26 = vld [vmem:[%s0] sm:$0xf]
  %v27 = vld [vmem:[%s0 + $0x4] sm:$0xf]
  %v28 = vld [vmem:[%s2] sm:$0xf]
  %v29 = vld [vmem:[%s2 + $0x4] sm:$0xf]
  %v30 = vld [vmem:[%s2 + $0x8] sm:$0xf]
  %v31 = vld [vmem:[%s2 + $0xc] sm:$0xf]
  %v32 = vld [vmem:[%s3] sm:$0x1]
  %v34 = vlaneseq
  %v35 = vshrl.u32 %v34, 7
  %v36 = vsub.s32 0, %v35
  %v37 = vrot.slane %v32, %v36
  %v41 = vunpack.c.l.b16 %v26
  %v42 = vunpack.c.l.b16 %v27
  %v43 = vpack.c.b16 %v42, %v41
  %v48 = vunpack.c.l.b16 %v28
  %v49 = vunpack.c.l.b16 %v29
  %v50 = vunpack.c.l.b16 %v30
  %v51 = vunpack.c.l.b16 %v31
  %v52 = vpack.c.b16 %v49, %v48
  %v53 = vpack.c.b16 %v51, %v50
  %vm56 = vcmask 261120
  %v58 = vsel %vm56, %v43, 0
  %60 = vmatprep.subr.bf16.mxu0 0
  %61 = vmatpush1.bf16.msra.mxu0 %v52
  %62 = vmatprep.subr.bf16.mxu0 0
  %63 = vmatpush1.bf16.msra.mxu0 %v53
  %64 = vmatprep.subr.bf16.mxu0 0
  %65 = vmatpush1.bf16.msra.mxu0 0
  %66 = vmatprep.subr.bf16.mxu0 0
  %67 = vmatpush1.bf16.msra.mxu0 0
  %68 = vmatprep.subr.bf16.mxu0 0
  %69 = vmatpush1.bf16.msra.mxu0 0
  %70 = vmatprep.subr.bf16.mxu0 0
  %71 = vmatpush1.bf16.msra.mxu0 0
  %72 = vmatprep.subr.bf16.mxu0 0
  %73 = vmatpush1.bf16.msra.mxu0 0
  %74 = vmatprep.subr.bf16.mxu0 0
  %75 = vmatpush1.bf16.msra.mxu0 0
  %76 = vmatprep.subr.bf16.mxu0 0
  %77 = vmatpush1.bf16.msra.mxu0 0
  %78 = vmatprep.subr.bf16.mxu0 0
  %79 = vmatpush1.bf16.msra.mxu0 0
  %80 = vmatprep.subr.bf16.mxu0 0
  %81 = vmatpush1.bf16.msra.mxu0 0
  %82 = vmatprep.subr.bf16.mxu0 0
  %83 = vmatpush1.bf16.msra.mxu0 0
  %84 = vmatprep.subr.bf16.mxu0 0
  %85 = vmatpush1.bf16.msra.mxu0 0
  %86 = vmatprep.subr.bf16.mxu0 0
  %87 = vmatpush1.bf16.msra.mxu0 0
  %88 = vmatprep.subr.bf16.mxu0 0
  %89 = vmatpush1.bf16.msra.mxu0 0
  %90 = vmatprep.subr.bf16.mxu0 0
  %91 = vmatpush1.bf16.msra.mxu0 0
  %92 = vmatprep.mubr.bf16.mxu0 0
  %93 = vmatmul.mubr.bf16.gmra.mrb[0].mxu0 %v58
  %v94 = vpop.f32.mrb[0].mxu0
  %v95 = vadd.f32 %v37, %v94
  %v96 = vpop.f32.mrb[0].mxu0
  %v97 = vpop.f32.mrb[0].mxu0
  %v98 = vadd.f32 %v37, %v97
  %v99 = vpop.f32.mrb[0].mxu0
  %100 = vdwg.mxu0
  %101 = vst.msk [vmem:[%s6] sm:$0xff] %vm56, %v95
  %102 = vst.msk [vmem:[%s6 + $0x8] sm:$0xff] %vm56, %v98
  %v103 = vld [vmem:[%s1] sm:$0x1]
  %v104 = vld [vmem:[%s1 + $0x1] sm:$0x1]
  %v105 = vld [vmem:[%s1 + $0x2] sm:$0x1]
  %v106 = vld [vmem:[%s1 + $0x3] sm:$0x1]
  %v107 = vld [vmem:[%s1 + $0x4] sm:$0x1]
  %v108 = vld [vmem:[%s4] sm:$0xf]
  %v109 = vld [vmem:[%s4 + $0x4] sm:$0xf]
  %v110 = vld [vmem:[%s4 + $0x8] sm:$0xf]
  %v111 = vld [vmem:[%s4 + $0xc] sm:$0xf]
  %v112 = vld [vmem:[%s5] sm:$0x1]
  %v114 = vlaneseq
  %v115 = vshrl.u32 %v114, 7
  %v116 = vsub.s32 0, %v115
  %v117 = vrot.slane %v112, %v116
  %v124 = vcombine.low %v103, %v104
  %v125 = vcombine.low %v105, %v106
  %v127 = vunpack.c.l.s4 1966171168
  %v128 = vunpack.c.0.s8 %v127
  %v129 = vlaneseq
  %v130 = vshrl.u32 %v129, 7
  %v131 = vsub.s32 %v128, %v130
  %v132 = vrot.slane %v124, %v131
  %v134 = vunpack.c.l.s4 1966171168
  %v135 = vunpack.c.0.s8 %v134
  %v136 = vlaneseq
  %v137 = vshrl.u32 %v136, 7
  %v138 = vsub.s32 %v135, %v137
  %v139 = vrot.slane %v125, %v138
  %v141 = vunpack.c.l.s4 1966171168
  %v142 = vunpack.c.0.s8 %v141
  %v143 = vlaneseq
  %v144 = vshrl.u32 %v143, 7
  %v145 = vsub.s32 %v142, %v144
  %v146 = vrot.slane %v107, %v145
  %v147 = vcombine.low %v132, %v139
  %v149 = vunpack.c.l.s4 1966171168
  %v150 = vunpack.c.0.s8 %v149
  %v151 = vlaneseq
  %v152 = vshrl.u32 %v151, 7
  %v153 = vsub.s32 %v150, %v152
  %v154 = vrot.slane %v147, %v153
  %v156 = vunpack.c.l.s4 1966171168
  %v157 = vunpack.c.0.s8 %v156
  %v158 = vlaneseq
  %v159 = vshrl.u32 %v158, 7
  %v160 = vsub.s32 %v157, %v159
  %v161 = vrot.slane %v146, %v160
  %v162 = vcombine.low %v154, %v161
  %v167 = vunpack.c.l.b16 %v108
  %v168 = vunpack.c.l.b16 %v109
  %v169 = vunpack.c.l.b16 %v110
  %v170 = vunpack.c.l.b16 %v111
  %v171 = vpack.c.b16 %v168, %v167
  %v172 = vpack.c.b16 %v170, %v169
  %v176 = vsel %vm56, %v162, 0
  %178 = vmatprep.subr.bf16.mxu0 0
  %179 = vmatpush1.bf16.msra.mxu0 %v171
  %180 = vmatprep.subr.bf16.mxu0 0
  %181 = vmatpush1.bf16.msra.mxu0 %v172
  %182 = vmatprep.subr.bf16.mxu0 0
  %183 = vmatpush1.bf16.msra.mxu0 0
  %184 = vmatprep.subr.bf16.mxu0 0
  %185 = vmatpush1.bf16.msra.mxu0 0
  %186 = vmatprep.subr.bf16.mxu0 0
  %187 = vmatpush1.bf16.msra.mxu0 0
  %188 = vmatprep.subr.bf16.mxu0 0
  %189 = vmatpush1.bf16.msra.mxu0 0
  %190 = vmatprep.subr.bf16.mxu0 0
  %191 = vmatpush1.bf16.msra.mxu0 0
  %192 = vmatprep.subr.bf16.mxu0 0
  %193 = vmatpush1.bf16.msra.mxu0 0
  %194 = vmatprep.subr.bf16.mxu0 0
  %195 = vmatpush1.bf16.msra.mxu0 0
  %196 = vmatprep.subr.bf16.mxu0 0
  %197 = vmatpush1.bf16.msra.mxu0 0
  %198 = vmatprep.subr.bf16.mxu0 0
  %199 = vmatpush1.bf16.msra.mxu0 0
  %200 = vmatprep.subr.bf16.mxu0 0
  %201 = vmatpush1.bf16.msra.mxu0 0
  %202 = vmatprep.subr.bf16.mxu0 0
  %203 = vmatpush1.bf16.msra.mxu0 0
  %204 = vmatprep.subr.bf16.mxu0 0
  %205 = vmatpush1.bf16.msra.mxu0 0
  %206 = vmatprep.subr.bf16.mxu0 0
  %207 = vmatpush1.bf16.msra.mxu0 0
  %208 = vmatprep.subr.bf16.mxu0 0
  %209 = vmatpush1.bf16.msra.mxu0 0
  %210 = vmatprep.mubr.bf16.mxu0 0
  %211 = vmatmul.mubr.bf16.gmra.mrb[0].mxu0 %v176
  %v212 = vpop.f32.mrb[0].mxu0
  %v213 = vadd.f32 %v117, %v212
  %v214 = vpop.f32.mrb[0].mxu0
  %v215 = vpop.f32.mrb[0].mxu0
  %v216 = vadd.f32 %v117, %v215
  %v217 = vpop.f32.mrb[0].mxu0
  %218 = vdwg.mxu0
  %v221 = vcombine.high %v213, %v213
  %v223 = vunpack.c.l.s4 1983009808
  %v224 = vunpack.c.0.s8 %v223
  %v225 = vlaneseq
  %v226 = vshrl.u32 %v225, 7
  %v227 = vsub.s32 %v224, %v226
  %v228 = vrot.slane %v213, %v227
  %v230 = vunpack.c.l.s4 1983009808
  %v231 = vunpack.c.0.s8 %v230
  %v232 = vlaneseq
  %v233 = vshrl.u32 %v232, 7
  %v234 = vsub.s32 %v231, %v233
  %v235 = vrot.slane %v221, %v234
  %v236 = vcombine.high %v228, %v228
  %v237 = vcombine.high %v235, %v235
  %v239 = vunpack.c.l.s4 1983009808
  %v240 = vunpack.c.0.s8 %v239
  %v241 = vlaneseq
  %v242 = vshrl.u32 %v241, 7
  %v243 = vsub.s32 %v240, %v242
  %v244 = vrot.slane %v216, %v243
  %vm250 = vcmask 254976
  %251 = vst.msk [vmem:[%s7] sm:$0x3] %vm250, %v228
  %252 = vst.msk [vmem:[%s7 + $0x2] sm:$0x3] %vm250, %v236
  %253 = vst.msk [vmem:[%s7 + $0x4] sm:$0x3] %vm250, %v235
  %254 = vst.msk [vmem:[%s7 + $0x6] sm:$0x3] %vm250, %v237
  %255 = vst.msk [vmem:[%s7 + $0x8] sm:$0x3] %vm250, %v244
  // Predicated region
  $region26: #{seq2sql_forward.10} parent=0 // pred_check
    _
  $region27: #{seq2sql_forward.10} parent=0 // pred_check_branch
    %257 = sbr.rel (0) target = $region29
  $region28: #{seq2sql_forward.10} parent=0 // pred_region
    _
  $region29: #{seq2sql_forward.10} parent=0 // pred_fallthru
    _
  // Predicated region
  $region30: #{seq2sql_forward.10} parent=0 // pred_check
    _
  $region31: #{seq2sql_forward.10} parent=0 // pred_check_branch
    %259 = sbr.rel (0) target = $region33
  $region32: #{seq2sql_forward.10} parent=0 // pred_region
    _
  $region33: #{seq2sql_forward.10} parent=0 // pred_fallthru
    _
  // Predicated region
  $region34: #{seq2sql_forward.10} parent=0 // pred_check
    _
  $region35: #{seq2sql_forward.10} parent=0 // pred_check_branch
    %261 = sbr.rel (0) target = $region37
  $region36: #{seq2sql_forward.10} parent=0 // pred_region
    _
  $region37: #{seq2sql_forward.10} parent=0 // pred_fallthru
    _
  // Predicated region
  $region38: #{seq2sql_forward.10} parent=0 // pred_check
    _
  $region39: #{seq2sql_forward.10} parent=0 // pred_check_branch
    %263 = sbr.rel (0) target = $region41
  $region40: #{seq2sql_forward.10} parent=0 // pred_region
    _
  $region41: #{seq2sql_forward.10} parent=0 // pred_fallthru
    _

// kernel: seq2sql_forward.11
$region0: #{seq2sql_forward.11}
  #allocation0 [shape = 'u32[]', space=smem, size = 0x4, offset = 0x4, fixed_abs, tag = 'smem constant byte address 0x4 - core index']
  #allocation1 [shape = 'u32[144,128]{1,0:T(1,128)}', space=vmem, size = 0x12000, scoped, tag = 'internal scratch']
  #allocation2 [shape = 'f32[1,1]{1,0:T(1,128)S(1)}', space=vmem, size = 0x200, scoped, tag = 'scoped memory for seq2sql_forward.11']
  %s0 = inlined_call_operand.vmem [shape: s32[2,1], index: 0, kind: input, shape index: {}]
  %s1 = inlined_call_operand.vmem [shape: f32[2,8,32], index: 1, kind: input, shape index: {}]
  %s2 = inlined_call_operand.vmem [shape: f32[5,2,32], index: 2, kind: input, shape index: {}]
  %s3 = inlined_call_operand.vmem [shape: f32[1,32], index: 3, kind: input, shape index: {}]
  %s4 = inlined_call_operand.<no memory space> [shape: f32[1,1], index: 4, kind: input, shape index: {}]
  %s5 = inlined_call_operand.vmem [shape: f32[5,2,8], index: 5, kind: output, shape index: {0}]
  %s6 = inlined_call_operand.hbm [shape: f32[5,2,8], index: 6, kind: output, shape index: {1}]
  %7 = xla_tuple %s5, %s6
  %s8 = sld [smem:[#allocation0]]
  $region61: #{seq2sql_forward.11} parent=0
    _
  %s10 = ssub.s32 1, %s8
  %s11 = scalar_select 0, %s10, %s8
  %v12 = vstv %s4
  %13 = vst [vmem:[#allocation2] sm:$0x1] %v12
  $region1: #{seq2sql_forward.11} parent=0
    #allocation3 [shape = 'u8[2048]{0}', space=vmem, size = 0x800, scoped, tag = 'output window, operand 1']
    #allocation4 [shape = 's32[2]{0}', space=sflag, size = 0x8, scoped, tag = 'scoped memory for seq2sql_forward.11']
    %14 = vsyncpa [#allocation4], 0
    %s15 = scalar_lea.sflag [#allocation4], 1
    %16 = vsyncpa %s15, 0
    loop: start=0, step=1, limit=7
    $region2: #{seq2sql_forward.11} parent=1 // loop_pre_header
      _
    $region3: #{seq2sql_forward.11} parent=1 // loop_header
      %s18 = sphi 0, %s22
      %p19 = scmp.ge.s32.totalorder %s18, 7
      %s26 = sphi 0, %s26
      %s28 = sphi 0, %s26
      %s29 = sphi 0, %s28
      %s43 = sphi 0, %s29
      %s47 = sphi 0, %s47
      %s49 = sphi 0, %s47
      %s50 = sphi 0, %s49
      %s64 = sphi 0, %s50
      %s70 = sphi 0, %s72
      %s73 = sphi 0, %s70
      %s74 = sphi 0, %s73
      %s90 = sphi 0, %s74
      %s94 = sphi 0, %s94
      %s96 = sphi 0, %s94
      %s97 = sphi 0, %s96
      %s111 = sphi 0, %s97
      %s115 = sphi 0, %s115
      %s117 = sphi 0, %s115
      %s118 = sphi 0, %s117
      %s132 = sphi 0, %s118
      %s138 = sphi 0, %s140
      %s141 = sphi 0, %s138
      %s142 = sphi 0, %s141
      %s158 = sphi 0, %s142
      %s164 = sphi 0, %s166
      %s167 = sphi 0, %s164
      %s168 = sphi 0, %s167
      %s184 = sphi 0, %s168
    $region4: #{seq2sql_forward.11} parent=1 // loop_header_branch
      %21 = sbr.rel (%p19) target = $region8
    $region5: #{seq2sql_forward.11} parent=1 // loop_body
      %s23 = ssub.s32 %s18, 1
      %s24 = ssub.s32 %s18, 2
      %s25 = sadd.s32 %s18, 1
      %s27 = sadd.s32 %s26, 1
      %p30 = scmp.eq.s32.totalorder %s18, 4
      %p31 = scmp.ne.s32.totalorder %s26, %s28
      %p32 = scmp.eq.s32.totalorder %s18, 0
      %p33 = por %p31, %p32
      %p34 = scmp.ne.s32.totalorder %s26, %s28
      %p35 = scmp.eq.s32.totalorder %s23, 4
      %p36 = por %p34, %p35
      %p37 = scmp.ne.s32.totalorder %s28, %s29
      %p38 = scmp.eq.s32.totalorder %s23, 0
      %p39 = por %p37, %p38
      %p40 = scmp.ne.s32.totalorder %s28, %s29
      %p41 = scmp.eq.s32.totalorder %s24, 4
      %p42 = por %p40, %p41
      %p44 = scmp.ne.s32.totalorder %s29, %s43
      %p45 = scmp.eq.s32.totalorder %s24, 0
      %p46 = por %p44, %p45
      %s48 = sadd.s32 %s47, 1
      %p51 = scmp.eq.s32.totalorder %s18, 4
      %p52 = scmp.ne.s32.totalorder %s47, %s49
      %p53 = scmp.eq.s32.totalorder %s18, 0
      %p54 = por %p52, %p53
      %p55 = scmp.ne.s32.totalorder %s47, %s49
      %p56 = scmp.eq.s32.totalorder %s23, 4
      %p57 = por %p55, %p56
      %p58 = scmp.ne.s32.totalorder %s49, %s50
      %p59 = scmp.eq.s32.totalorder %s23, 0
      %p60 = por %p58, %p59
      %p61 = scmp.ne.s32.totalorder %s49, %s50
      %p62 = scmp.eq.s32.totalorder %s24, 4
      %p63 = por %p61, %p62
      %p65 = scmp.ne.s32.totalorder %s50, %s64
      %p66 = scmp.eq.s32.totalorder %s24, 0
      %p67 = por %p65, %p66
      %s68 = ssub.s32 %s18, %s25
      %p69 = scmp.eq.s32.totalorder %s68, 0
      %s71 = sadd.s32 %s70, 1
      %s72 = scalar_select %p69, %s70, %s71
      %p75 = pneg %p69
      %p76 = scmp.eq.s32.totalorder %s18, 4
      %p77 = por %p75, %p76
      %p78 = scmp.ne.s32.totalorder %s70, %s73
      %p79 = scmp.eq.s32.totalorder %s18, 0
      %p80 = por %p78, %p79
      %p81 = scmp.ne.s32.totalorder %s70, %s73
      %p82 = scmp.eq.s32.totalorder %s23, 4
      %p83 = por %p81, %p82
      %p84 = scmp.ne.s32.totalorder %s73, %s74
      %p85 = scmp.eq.s32.totalorder %s23, 0
      %p86 = por %p84, %p85
      %p87 = scmp.ne.s32.totalorder %s73, %s74
      %p88 = scmp.eq.s32.totalorder %s24, 4
      %p89 = por %p87, %p88
      %p91 = scmp.ne.s32.totalorder %s74, %s90
      %p92 = scmp.eq.s32.totalorder %s24, 0
      %p93 = por %p91, %p92
      %s95 = sadd.s32 %s94, 1
      %p98 = scmp.eq.s32.totalorder %s18, 4
      %p99 = scmp.ne.s32.totalorder %s94, %s96
      %p100 = scmp.eq.s32.totalorder %s18, 0
      %p101 = por %p99, %p100
      %p102 = scmp.ne.s32.totalorder %s94, %s96
      %p103 = scmp.eq.s32.totalorder %s23, 4
      %p104 = por %p102, %p103
      %p105 = scmp.ne.s32.totalorder %s96, %s97
      %p106 = scmp.eq.s32.totalorder %s23, 0
      %p107 = por %p105, %p106
      %p108 = scmp.ne.s32.totalorder %s96, %s97
      %p109 = scmp.eq.s32.totalorder %s24, 4
      %p110 = por %p108, %p109
      %p112 = scmp.ne.s32.totalorder %s97, %s111
      %p113 = scmp.eq.s32.totalorder %s24, 0
      %p114 = por %p112, %p113
      %s116 = sadd.s32 %s115, 1
      %p119 = scmp.eq.s32.totalorder %s18, 4
      %p120 = scmp.ne.s32.totalorder %s115, %s117
      %p121 = scmp.eq.s32.totalorder %s18, 0
      %p122 = por %p120, %p121
      %p123 = scmp.ne.s32.totalorder %s115, %s117
      %p124 = scmp.eq.s32.totalorder %s23, 4
      %p125 = por %p123, %p124
      %p126 = scmp.ne.s32.totalorder %s117, %s118
      %p127 = scmp.eq.s32.totalorder %s23, 0
      %p128 = por %p126, %p127
      %p129 = scmp.ne.s32.totalorder %s117, %s118
      %p130 = scmp.eq.s32.totalorder %s24, 4
      %p131 = por %p129, %p130
      %p133 = scmp.ne.s32.totalorder %s118, %s132
      %p134 = scmp.eq.s32.totalorder %s24, 0
      %p135 = por %p133, %p134
      %s136 = ssub.s32 %s18, %s25
      %p137 = scmp.eq.s32.totalorder %s136, 0
      %s139 = sadd.s32 %s138, 1
      %s140 = scalar_select %p137, %s138, %s139
      %p143 = pneg %p137
      %p144 = scmp.eq.s32.totalorder %s18, 4
      %p145 = por %p143, %p144
      %p146 = scmp.ne.s32.totalorder %s138, %s141
      %p147 = scmp.eq.s32.totalorder %s18, 0
      %p148 = por %p146, %p147
      %p149 = scmp.ne.s32.totalorder %s138, %s141
      %p150 = scmp.eq.s32.totalorder %s23, 4
      %p151 = por %p149, %p150
      %p152 = scmp.ne.s32.totalorder %s141, %s142
      %p153 = scmp.eq.s32.totalorder %s23, 0
      %p154 = por %p152, %p153
      %p155 = scmp.ne.s32.totalorder %s141, %s142
      %p156 = scmp.eq.s32.totalorder %s24, 4
      %p157 = por %p155, %p156
      %p159 = scmp.ne.s32.totalorder %s142, %s158
      %p160 = scmp.eq.s32.totalorder %s24, 0
      %p161 = por %p159, %p160
      %s162 = ssub.s32 %s18, %s25
      %p163 = scmp.eq.s32.totalorder %s162, 0
      %s165 = sadd.s32 %s164, 1
      %s166 = scalar_select %p163, %s164, %s165
      %p169 = pneg %p163
      %p170 = scmp.eq.s32.totalorder %s18, 4
      %p171 = por %p169, %p170
      %p172 = scmp.ne.s32.totalorder %s164, %s167
      %p173 = scmp.eq.s32.totalorder %s18, 0
      %p174 = por %p172, %p173
      %p175 = scmp.ne.s32.totalorder %s164, %s167
      %p176 = scmp.eq.s32.totalorder %s23, 4
      %p177 = por %p175, %p176
      %p178 = scmp.ne.s32.totalorder %s167, %s168
      %p179 = scmp.eq.s32.totalorder %s23, 0
      %p180 = por %p178, %p179
      %p181 = scmp.ne.s32.totalorder %s167, %s168
      %p182 = scmp.eq.s32.totalorder %s24, 4
      %p183 = por %p181, %p182
      %p185 = scmp.ne.s32.totalorder %s168, %s184
      %p186 = scmp.eq.s32.totalorder %s24, 0
      %p187 = por %p185, %p186
      %p188 = scmp.le.s32.totalorder 1, %s18
      %p189 = scmp.lt.s32.totalorder %s18, 6
      %p190 = pnand %p188, %p189
      %p191 = pneg %p190
      // Predicated region
      $region9: #{seq2sql_forward.11} parent=5 // pred_check
        _
      $region10: #{seq2sql_forward.11} parent=5 // pred_check_branch
        %193 = sbr.rel (%p190) target = $region12
      $region11: #{seq2sql_forward.11} parent=5 // pred_region
        %s194 = ssub.s32 %s18, 1
        // Predicated region
        $region13: #{seq2sql_forward.11} parent=11 // pred_check
          %p195 = pneg %p39
        $region14: #{seq2sql_forward.11} parent=11 // pred_check_branch
          %197 = sbr.rel (%p195) target = $region16
        $region15: #{seq2sql_forward.11} parent=11 // pred_region
          _
        $region16: #{seq2sql_forward.11} parent=11 // pred_fallthru
          _
        // Predicated region
        $region17: #{seq2sql_forward.11} parent=11 // pred_check
          %p198 = pneg %p60
        $region18: #{seq2sql_forward.11} parent=11 // pred_check_branch
          %200 = sbr.rel (%p198) target = $region20
        $region19: #{seq2sql_forward.11} parent=11 // pred_region
          _
        $region20: #{seq2sql_forward.11} parent=11 // pred_fallthru
          _
        // Predicated region
        $region21: #{seq2sql_forward.11} parent=11 // pred_check
          %p201 = pneg %p107
        $region22: #{seq2sql_forward.11} parent=11 // pred_check_branch
          %203 = sbr.rel (%p201) target = $region24
        $region23: #{seq2sql_forward.11} parent=11 // pred_region
          _
        $region24: #{seq2sql_forward.11} parent=11 // pred_fallthru
          _
        // Predicated region
        $region25: #{seq2sql_forward.11} parent=11 // pred_check
          %p204 = pneg %p128
        $region26: #{seq2sql_forward.11} parent=11 // pred_check_branch
          %206 = sbr.rel (%p204) target = $region28
        $region27: #{seq2sql_forward.11} parent=11 // pred_region
          _
        $region28: #{seq2sql_forward.11} parent=11 // pred_fallthru
          _
      $region12: #{seq2sql_forward.11} parent=5 // pred_fallthru
        _
      %p207 = scmp.lt.s32.totalorder %s18, 5
      // Predicated region
      $region29: #{seq2sql_forward.11} parent=5 // pred_check
        %p208 = pneg %p207
      $region30: #{seq2sql_forward.11} parent=5 // pred_check_branch
        %210 = sbr.rel (%p208) target = $region32
      $region31: #{seq2sql_forward.11} parent=5 // pred_region
        // Predicated region
        $region33: #{seq2sql_forward.11} parent=31 // pred_check
          %p211 = pneg %p80
        $region34: #{seq2sql_forward.11} parent=31 // pred_check_branch
          %213 = sbr.rel (%p211) target = $region36
        $region35: #{seq2sql_forward.11} parent=31 // pred_region
          %p214 = scmp.lt.s32.totalorder %s18, 4
          %s215 = scalar_select %p214, %s18, 4
          %s216 = smul.addr %s215, 2
          %s217 = scalar_lea.vmem %s2, %s216
        $region36: #{seq2sql_forward.11} parent=31 // pred_fallthru
          _
      $region32: #{seq2sql_forward.11} parent=5 // pred_fallthru
        _
      %p218 = scmp.le.s32.totalorder 1, %s18
      %p219 = scmp.lt.s32.totalorder %s18, 6
      %p220 = pnand %p218, %p219
      %p221 = pneg %p220
      // Predicated region
      $region37: #{seq2sql_forward.11} parent=5 // pred_check
        _
      $region38: #{seq2sql_forward.11} parent=5 // pred_check_branch
        %223 = sbr.rel (%p220) target = $region40
      $region39: #{seq2sql_forward.11} parent=5 // pred_region
        %s224 = ssub.s32 %s18, 1
        %p225 = pneg %p39
        %p226 = pneg %p36
        %p227 = pneg %p60
        %p228 = pneg %p57
        %p229 = scmp.lt.s32.totalorder %s23, 4
        %s230 = scalar_select %p229, %s23, 4
        %s231 = smul.addr %s230, 2
        %s232 = scalar_lea.vmem %s2, %s231
        %p233 = pneg %p86
        %p234 = pneg %p83
        %p235 = pneg %p107
        %p236 = pneg %p104
        %p237 = pneg %p128
        %p238 = pneg %p125
        %p239 = pneg %p154
        %p240 = pneg %p151
        %p241 = scmp.lt.s32.totalorder %s23, 4
        %s242 = scalar_select %p241, %s23, 4
        %s243 = smul.addr %s242, 2
        %s244 = scalar_lea.vmem %s5, %s243
        %p245 = pneg %p180
        %p246 = pneg %p177
        %s247 = sand.u32 %s167, 1
        %s248 = scalar_lea.sflag [#allocation4], %s247
        %s249 = sand.u32 %s167, 1
        %s250 = smul.addr %s249, 2
        %s251 = scalar_lea.vmem [#allocation3], %s250
        %p252 = scmp.lt.s32.totalorder %s23, 4
        %s253 = scalar_select %p252, %s23, 4
        %s254 = smul.addr %s253, 2
        %s255 = scalar_lea.vmem %s2, %s254
        %p256 = scmp.lt.s32.totalorder %s23, 4
        %s257 = scalar_select %p256, %s23, 4
        %s258 = smul.addr %s257, 2
        %s259 = scalar_lea.vmem %s5, %s258
        %v260 = vld [vmem:[%s1] sm:$0xff]
        %v261 = vld [vmem:[%s1 + $0x8] sm:$0xff]
        %v262 = vld [vmem:[%s255] sm:$0x3]
        %v265 = vunpack.c.l.s4 1966171168
        %v266 = vunpack.c.0.s8 %v265
        %v267 = vlaneseq
        %v268 = vshrl.u32 %v267, 7
        %v269 = vsub.s32 %v266, %v268
        %v270 = vrot.slane %v262, %v269
        %v271 = vcombine.high %v270, %v270
        %v273 = vunpack.c.l.s4 1966171168
        %v274 = vunpack.c.0.s8 %v273
        %v275 = vlaneseq
        %v276 = vshrl.u32 %v275, 7
        %v277 = vsub.s32 %v274, %v276
        %v278 = vrot.slane %v270, %v277
        %v280 = vunpack.c.l.s4 1966171168
        %v281 = vunpack.c.0.s8 %v280
        %v282 = vlaneseq
        %v283 = vshrl.u32 %v282, 7
        %v284 = vsub.s32 %v281, %v283
        %v285 = vrot.slane %v271, %v284
        %v286 = vlaneseq
        %v287 = vshrl.u32 %v286, 7
        %v288 = vsub.s32 0, %v287
        %v289 = vrot.slane %v278, %v288
        %v290 = vlaneseq
        %v291 = vshrl.u32 %v290, 7
        %v292 = vsub.s32 0, %v291
        %v293 = vrot.slane %v285, %v292
        %v296 = vadd.f32 %v260, %v289
        %v297 = vadd.f32 %v261, %v293
        %v298 = vtanh.pop %v296
        %v299 = vtanh.pop %v297
        %v300 = vld [vmem:[%s3] sm:$0x1]
        %v302 = vlaneseq
        %v303 = vshrl.u32 %v302, 7
        %v304 = vsub.s32 0, %v303
        %v305 = vrot.slane %v300, %v304
        %v307 = vmul.f32 %v298, %v305
        %v308 = vmul.f32 %v299, %v305
        %vm309 = vcmask 261120
        %v310 = vsel %vm309, %v307, 0.0
        %311 = vadd.xlane.f32.xlu0 %v310
        %v312 = vpop.xlane.xlu0 %311
        %v313 = vsel %vm309, %v308, 0.0
        %314 = vadd.xlane.f32.xlu0 %v313
        %v315 = vpop.xlane.xlu0 %314
        %v316 = vld [vmem:[#allocation2] sm:$0x1]
        %v318 = vlaneseq
        %v319 = vshrl.u32 %v318, 7
        %v320 = vsub.s32 0, %v319
        %v321 = vrot.slane %v316, %v320
        %322 = vset.pattern.permute.xlu0 0
        %323 = vperm.xlu0 %322, %v321
        %v324 = vpop.permute.xlu0 %323
        %v326 = vadd.f32 %v312, %v324
        %v327 = vadd.f32 %v315, %v324
        %v328 = vlaneseq
        %v329 = vand.u32 %v328, 127
        %v330 = vld [vmem:[%s0] sm:$0x3]
        %331 = vset.pattern.permute.xlu0 0
        %332 = vperm.xlu0 %331, %v330
        %v333 = vpop.permute.xlu0 %332
        %vm334 = vcmp.lt.s32.totalorder %v329, %v333
        %v337 = vlaneseq
        %v338 = vshrl.u32 %v337, 7
        %v339 = vsub.s32 %v329, %v338
        %v340 = vrot.slane %v326, %v339
        %v341 = vlaneseq
        %v342 = vshrl.u32 %v341, 7
        %v343 = vsub.s32 %v329, %v342
        %v344 = vrot.slane %v327, %v343
        %vm345 = vcmask 1041409
        %v346 = vsel %vm345, %v344, %v340
        %v348 = vsel %vm334, %v346, -100.0
        %vm349 = vcmask 58368
        %350 = vst.msk [vmem:[%s259] sm:$0x3] %vm349, %v348
        %v351 = vsel %vm349, %v348, -inf
        %v352 = vrot.slane %v351, 4
        %v353 = vmax.f32 %v351, %v352
        %v354 = vrot.slane %v353, 2
        %v355 = vmax.f32 %v353, %v354
        %v356 = vrot.slane %v355, 1
        %v357 = vmax.f32 %v355, %v356
        %v358 = vsub.f32 %v348, %v357
        %v359 = vmul.f32 %v358, 1.442695
        %v360 = vpow.pop %v359
        %v361 = vsel %vm349, %v360, 0.0
        %v362 = vrot.slane %v361, 4
        %v363 = vadd.f32 %v361, %v362
        %v364 = vrot.slane %v363, 2
        %v365 = vadd.f32 %v363, %v364
        %v366 = vrot.slane %v365, 1
        %v367 = vadd.f32 %v365, %v366
        %v368 = vrcp.pop %v367
        %v369 = vmul.f32 %v360, %v368
        %370 = vst.msk [vmem:[%s251] sm:$0x3] %vm349, %v369
        %p371 = scmp.lt.s32.totalorder %s23, 4
        %s372 = scalar_select %p371, %s23, 4
        %s373 = smul.addr %s372, 2
        %s374 = scalar_lea.vmem %s5, %s373
        %s375 = sand.u32 %s167, 1
        %s376 = scalar_lea.sflag [#allocation4], %s375
        %s377 = sand.u32 %s167, 1
        %s378 = smul.addr %s377, 2
        %s379 = scalar_lea.vmem [#allocation3], %s378
        // Predicated region
        $region41: #{seq2sql_forward.11} parent=39 // pred_check
          %p380 = pneg %p151
        $region42: #{seq2sql_forward.11} parent=39 // pred_check_branch
          %382 = sbr.rel (%p380) target = $region44
        $region43: #{seq2sql_forward.11} parent=39 // pred_region
          _
        $region44: #{seq2sql_forward.11} parent=39 // pred_fallthru
          _
        // Predicated region
        $region45: #{seq2sql_forward.11} parent=39 // pred_check
          %p383 = pneg %p177
        $region46: #{seq2sql_forward.11} parent=39 // pred_check_branch
          %385 = sbr.rel (%p383) target = $region48
        $region47: #{seq2sql_forward.11} parent=39 // pred_region
          %s387 = ssub.s32 32, 32
          %388 = vsyncadd %s376, %s387
          %s389 = smul.addr %s23, 32
          %s390 = scalar_lea.hbm %s6, %s389
          %s392 = sshll.u32 %s379, 4
          %s393 = int_to_ptr.vmem [resolvable:$true] %s392
          %395 = dma.vmem_to_hbm [thread:$0]  %s393, 32, %s390, %s376
        $region48: #{seq2sql_forward.11} parent=39 // pred_fallthru
          _
      $region40: #{seq2sql_forward.11} parent=5 // pred_fallthru
        _
      %p396 = scmp.le.s32.totalorder 2, %s18
      // Predicated region
      $region49: #{seq2sql_forward.11} parent=5 // pred_check
        %p397 = pneg %p396
      $region50: #{seq2sql_forward.11} parent=5 // pred_check_branch
        %399 = sbr.rel (%p397) target = $region52
      $region51: #{seq2sql_forward.11} parent=5 // pred_region
        %s400 = ssub.s32 %s18, 2
        // Predicated region
        $region53: #{seq2sql_forward.11} parent=51 // pred_check
          %p401 = pneg %p157
        $region54: #{seq2sql_forward.11} parent=51 // pred_check_branch
          %403 = sbr.rel (%p401) target = $region56
        $region55: #{seq2sql_forward.11} parent=51 // pred_region
          %p404 = scmp.lt.s32.totalorder %s24, 4
          %s405 = scalar_select %p404, %s24, 4
          %s406 = smul.addr %s405, 2
          %s407 = scalar_lea.vmem %s5, %s406
        $region56: #{seq2sql_forward.11} parent=51 // pred_fallthru
          _
        // Predicated region
        $region57: #{seq2sql_forward.11} parent=51 // pred_check
          %p408 = pneg %p183
        $region58: #{seq2sql_forward.11} parent=51 // pred_check_branch
          %410 = sbr.rel (%p408) target = $region60
        $region59: #{seq2sql_forward.11} parent=51 // pred_region
          %s411 = sand.u32 %s168, 1
          %s412 = scalar_lea.sflag [#allocation4], %s411
          %s413 = sand.u32 %s168, 1
          %s414 = smul.addr %s413, 2
          %s415 = scalar_lea.vmem [#allocation3], %s414
          %416 = dma.done %s412, 32
        $region60: #{seq2sql_forward.11} parent=51 // pred_fallthru
          _
      $region52: #{seq2sql_forward.11} parent=5 // pred_fallthru
        _
    $region6: #{seq2sql_forward.11} parent=1 // loop_footer
      %s22 = sadd.s32 1, %s18
    $region7: #{seq2sql_forward.11} parent=1 // loop_footer_branch
      %17 = sbr.rel target = $region3
    $region8: #{seq2sql_forward.11} parent=1 // loop_exit
      _
    %417 = vsyncpa [#allocation4], 1
    %s418 = scalar_lea.sflag [#allocation4], 1
    %419 = vsyncpa %s418, 1

</llo_original>
